<compile_context>
chip_gen: v7x
topology: tpu7x:2x2x1
jax: 0.10.0
libtpu: 0.0.40
codegen_flags: <defaults>
</compile_context>

<pallas_src>
import functools

import jax
import jax.numpy as jnp
import numpy as np
from jax.experimental import pallas as pl
from jax.experimental.pallas import tpu as pltpu

_LANES = 128


def _round_up(x, m):
    return ((x + m - 1) // m) * m


def _cdiv(a, b):
    return (a + b - 1) // b


def _wp_decoder_kernel(z_ref, init_ref, out_ref, *, seq_len, dt, mode):
    """Sequential bicycle-model rollout for one batch tile.

    z_ref    : (2, seq_len, TR, 128) f32   -- [0]=control_1, [1]=control_2
    init_ref : (S, TR, 128) f32            -- initial state components
    out_ref  : (seq_len, S, TR, 128) f32
    """
    inv_wheelbase = 1.0 / 2.5  # strength-reduced divide

    # Carry each state component as a full (TR, 128) value -> every op is a
    # dense vreg op; no sublane extract/insert on the sequential carry.
    x_t = init_ref[0, :, :]
    y_t = init_ref[1, :, :]
    psi_t = init_ref[2, :, :]
    v_t = init_ref[3, :, :]
    if mode == "jerk":
        pedal_t = init_ref[4, :, :]
        steer_t = init_ref[5, :, :]

    # seq_len is a small static constant (module default 30): a fully static
    # Python loop gives static load/store offsets and full scheduler
    # visibility.  (If seq_len or TILE_R grows a lot, switch to
    # lax.fori_loop(..., unroll=4-8) to bound vreg live ranges.)
    for i in range(seq_len):
        c1 = z_ref[0, i, :, :]
        c2 = z_ref[1, i, :, :]

        if mode == "jerk":
            jerk = jnp.clip(c1 * 4.0, -4.0, 4.0)
            srate = jnp.clip(c2 * 0.5, -0.5, 0.5)
            pedal_t = jnp.clip(pedal_t + jerk * dt, -5.0, 5.0)
            steer_t = jnp.clip(steer_t + srate * dt, -0.5, 0.5)
            v_new = jnp.clip(v_t + pedal_t * dt, 0.0, 10.0)
            # |steer_t| <= 0.5, so sin/cos is well conditioned; exact divide
            # keeps parity with torch.tan to well under 1e-5.
            tan_steer = jnp.sin(steer_t) / jnp.cos(steer_t)
            psi_dot = jnp.clip(v_t * tan_steer * inv_wheelbase,
                               -3.14 / 2, 3.14 / 2)
        else:  # 'acc'
            pedal_t = jnp.clip(c1 * 5.0, -5.0, 5.0)
            steer_t = jnp.clip(c2 * 0.5, -0.5, 0.5)
            v_new = jnp.clip(v_t + pedal_t * dt, 0.0, 10.0)
            tan_steer = jnp.sin(steer_t) / jnp.cos(steer_t)
            psi_dot = v_t * tan_steer * inv_wheelbase

        psi_t = psi_dot * dt + psi_t
        x_t = v_new * jnp.cos(psi_t) * dt + x_t
        y_t = v_new * jnp.sin(psi_t) * dt + y_t
        v_t = v_new

        # Full-vreg, unmasked stores (one per state component per step).
        out_ref[i, 0, :, :] = x_t
        out_ref[i, 1, :, :] = y_t
        out_ref[i, 2, :, :] = psi_t
        out_ref[i, 3, :, :] = v_t
        if mode == "jerk":
            out_ref[i, 4, :, :] = pedal_t
            out_ref[i, 5, :, :] = steer_t


def wp_decoder_forward(z, init_state, *, seq_len, dt=0.03,
                       traj_control_mode="jerk"):
    """Pallas implementation of WpDecoder.forward.

    z:          (B, 2*seq_len) float32
    init_state: (B, S) float32  (S=6 for 'jerk', S=4 for 'acc')
    returns:    (B, seq_len, S) float32
    """
    B = z.shape[0]
    S = init_state.shape[1]
    assert z.shape[1] == 2 * seq_len
    assert traj_control_mode in ("jerk", "acc")
    assert S == (6 if traj_control_mode == "jerk" else 4)

    # Batch -> (sublane rows, 128 lanes).  Tile rows in multiples of 8 (or the
    # full row count when small) so the last two block dims are (8k, 128).
    rows = max(1, _cdiv(B, _LANES))
    if rows <= 8:
        tile_rows = rows                      # single tile, full-dim exemption
    elif rows < 32:
        tile_rows = 8                         # >=2 tiles -> both v7x TCs busy
    else:
        tile_rows = 16                        # bigger tiles amortize overhead
    rows_p = _round_up(rows, tile_rows)
    num_tiles = rows_p // tile_rows
    bp = rows_p * _LANES

    # (B, 2*T) -> (2, T, rows_p, 128).  Zero padding of extra lanes is safe
    # (all ops finite at 0); padded lanes are sliced off at the end.
    # TODO(synk): with allow_input_fusion / a (T, S, B)-layout consumer these
    # wrapper pad/transpose HBM passes could be fused away entirely.
    z_k = jnp.transpose(z.reshape(B, seq_len, 2), (2, 1, 0)).astype(jnp.float32)
    z_k = jnp.pad(z_k, ((0, 0), (0, 0), (0, bp - B)))
    z_k = z_k.reshape(2, seq_len, rows_p, _LANES)
    init_k = jnp.pad(jnp.transpose(init_state, (1, 0)).astype(jnp.float32),
                     ((0, 0), (0, bp - B)))
    init_k = init_k.reshape(S, rows_p, _LANES)

    kernel = functools.partial(_wp_decoder_kernel, seq_len=seq_len, dt=dt,
                               mode=traj_control_mode)

    out = pl.pallas_call(
        kernel,
        out_shape=jax.ShapeDtypeStruct((seq_len, S, rows_p, _LANES),
                                       jnp.float32),
        grid=(num_tiles,),
        in_specs=[
            pl.BlockSpec((2, seq_len, tile_rows, _LANES),
                         lambda b: (0, 0, b, 0)),
            pl.BlockSpec((S, tile_rows, _LANES), lambda b: (0, b, 0)),
        ],
        out_specs=pl.BlockSpec((seq_len, S, tile_rows, _LANES),
                               lambda b: (0, 0, b, 0)),
        compiler_params=pltpu.CompilerParams(
            # Batch tiles are independent -> shard across TCs on v7x.
            dimension_semantics=("parallel",)),
    )(z_k, init_k)

    # (T, S, rows_p, 128) -> (B, T, S).
    out = out.reshape(seq_len, S, bp)[:, :, :B]
    return jnp.transpose(out, (2, 0, 1))


# ---------------------------------------------------------------------------
# Pure-numpy reference (mirrors the PyTorch module exactly) for verification.
# ---------------------------------------------------------------------------
def _ref_decode(z, init_state, seq_len, dt, mode):
    prev = np.array(init_state, dtype=np.float32)
    traj = []
    for i in range(seq_len):
        c1 = np.array(z[:, 2 * i], dtype=np.float32)
        c2 = np.array(z[:, 2 * i + 1], dtype=np.float32)
        x, y, psi, v = prev[:, 0], prev[:, 1], prev[:, 2], prev[:, 3]
        if mode == "jerk":
            pedal_t, steer_t = prev[:, 4], prev[:, 5]
            jerk = np.clip(c1 * 4.0, -4.0, 4.0)
            srate = np.clip(c2 * 0.5, -0.5, 0.5)
            pedal = np.clip(pedal_t + jerk * dt, -5.0, 5.0)
            steer = np.clip(steer_t + srate * dt, -0.5, 0.5)
            v1 = np.clip(v + pedal * dt, 0.0, 10.0)
            psi_dot = np.clip(v * np.tan(steer) / 2.5, -3.14 / 2, 3.14 / 2)
            psi1 = psi_dot * dt + psi
            x1 = v1 * np.cos(psi1) * dt + x
            y1 = v1 * np.sin(psi1) * dt + y
            prev = np.stack([x1, y1, psi1, v1, pedal, steer], axis=1)
        else:
            pedal = np.clip(c1 * 5.0, -5.0, 5.0)
            steer = np.clip(c2 * 0.5, -0.5, 0.5)
            v1 = np.clip(v + pedal * dt, 0.0, 10.0)
            psi_dot = v * np.tan(steer) / 2.5
            psi1 = psi_dot * dt + psi
            x1 = v1 * np.cos(psi1) * dt + x
            y1 = v1 * np.sin(psi1) * dt + y
            prev = np.stack([x1, y1, psi1, v1], axis=1)
        traj.append(prev)
    return np.stack(traj, axis=1)


if __name__ == "__main__":
    key = jax.random.PRNGKey(0)
    seq_len, dt = 8, 0.03

    # ---- jerk mode (module default): state dim 6, tiny batch ----
    k1, k2, k3, k4, k5, k6 = jax.random.split(key, 6)
    B = 2
    z_j = jax.random.normal(k1, (B, 2 * seq_len), dtype=jnp.float32)
    init_j = jax.random.normal(k2, (B, 6), dtype=jnp.float32) * 0.5
    traj_j = jax.block_until_ready(
        wp_decoder_forward(z_j, init_j, seq_len=seq_len, dt=dt,
                           traj_control_mode="jerk"))
    ref_j = _ref_decode(np.asarray(z_j), np.asarray(init_j), seq_len, dt, "jerk")
    np.testing.assert_allclose(np.asarray(traj_j), ref_j, rtol=1e-5, atol=1e-5)

    # ---- acc mode: state dim 4 ----
    z_a = jax.random.normal(k3, (B, 2 * seq_len), dtype=jnp.float32)
    init_a = jax.random.normal(k4, (B, 4), dtype=jnp.float32) * 0.5
    traj_a = jax.block_until_ready(
        wp_decoder_forward(z_a, init_a, seq_len=seq_len, dt=dt,
                           traj_control_mode="acc"))
    ref_a = _ref_decode(np.asarray(z_a), np.asarray(init_a), seq_len, dt, "acc")
    np.testing.assert_allclose(np.asarray(traj_a), ref_a, rtol=1e-5, atol=1e-5)

    # ---- jerk mode, batch spanning multiple sublane rows + lane padding ----
    B2 = 200
    z_m = jax.random.normal(k5, (B2, 2 * seq_len), dtype=jnp.float32)
    init_m = jax.random.normal(k6, (B2, 6), dtype=jnp.float32) * 0.5
    traj_m = jax.block_until_ready(
        wp_decoder_forward(z_m, init_m, seq_len=seq_len, dt=dt,
                           traj_control_mode="jerk"))
    ref_m = _ref_decode(np.asarray(z_m), np.asarray(init_m), seq_len, dt, "jerk")
    np.testing.assert_allclose(np.asarray(traj_m), ref_m, rtol=1e-5, atol=1e-5)

    print("KERNEL_OK")
</pallas_src>

<mosaic_0001>
module attributes {stable_mosaic.version = 11 : i64} {
  func.func @_wp_decoder_kernel(%arg0: i32, %arg1: memref<2x8x1x128xf32, #tpu.memory_space<vmem>>, %arg2: memref<6x1x128xf32, #tpu.memory_space<vmem>>, %arg3: memref<8x6x1x128xf32, #tpu.memory_space<vmem>>) attributes {dimension_semantics = [#tpu.dimension_semantics<parallel>], iteration_bounds = array<i64: 1>, scalar_prefetch = 0 : i64, scratch_operands = 0 : i64, tpu.core_type = #tpu.core_type<tc>, window_params = [{transform_indices = @transform_0, window_bounds = array<i64: 2, 8, 1, 128>}, {transform_indices = @transform_1, window_bounds = array<i64: 6, 1, 128>}, {transform_indices = @transform_2, window_bounds = array<i64: 8, 6, 1, 128>}]} {
    %c0 = arith.constant 0 : index
    %c0_0 = arith.constant 0 : index
    %c0_1 = arith.constant 0 : index
    %0 = vector.load %arg2[%c0, %c0_0, %c0_1] : memref<6x1x128xf32, #tpu.memory_space<vmem>>, vector<1x1x128xf32>
    %1 = vector.shape_cast %0 : vector<1x1x128xf32> to vector<1x128xf32>
    %c1 = arith.constant 1 : index
    %c0_2 = arith.constant 0 : index
    %c0_3 = arith.constant 0 : index
    %2 = vector.load %arg2[%c1, %c0_2, %c0_3] : memref<6x1x128xf32, #tpu.memory_space<vmem>>, vector<1x1x128xf32>
    %3 = vector.shape_cast %2 : vector<1x1x128xf32> to vector<1x128xf32>
    %c2 = arith.constant 2 : index
    %c0_4 = arith.constant 0 : index
    %c0_5 = arith.constant 0 : index
    %4 = vector.load %arg2[%c2, %c0_4, %c0_5] : memref<6x1x128xf32, #tpu.memory_space<vmem>>, vector<1x1x128xf32>
    %5 = vector.shape_cast %4 : vector<1x1x128xf32> to vector<1x128xf32>
    %c3 = arith.constant 3 : index
    %c0_6 = arith.constant 0 : index
    %c0_7 = arith.constant 0 : index
    %6 = vector.load %arg2[%c3, %c0_6, %c0_7] : memref<6x1x128xf32, #tpu.memory_space<vmem>>, vector<1x1x128xf32>
    %7 = vector.shape_cast %6 : vector<1x1x128xf32> to vector<1x128xf32>
    %c4 = arith.constant 4 : index
    %c0_8 = arith.constant 0 : index
    %c0_9 = arith.constant 0 : index
    %8 = vector.load %arg2[%c4, %c0_8, %c0_9] : memref<6x1x128xf32, #tpu.memory_space<vmem>>, vector<1x1x128xf32>
    %9 = vector.shape_cast %8 : vector<1x1x128xf32> to vector<1x128xf32>
    %c5 = arith.constant 5 : index
    %c0_10 = arith.constant 0 : index
    %c0_11 = arith.constant 0 : index
    %10 = vector.load %arg2[%c5, %c0_10, %c0_11] : memref<6x1x128xf32, #tpu.memory_space<vmem>>, vector<1x1x128xf32>
    %11 = vector.shape_cast %10 : vector<1x1x128xf32> to vector<1x128xf32>
    %c0_12 = arith.constant 0 : index
    %c0_13 = arith.constant 0 : index
    %c0_14 = arith.constant 0 : index
    %c0_15 = arith.constant 0 : index
    %12 = vector.load %arg1[%c0_12, %c0_13, %c0_14, %c0_15] : memref<2x8x1x128xf32, #tpu.memory_space<vmem>>, vector<1x1x1x128xf32>
    %13 = vector.shape_cast %12 : vector<1x1x1x128xf32> to vector<1x128xf32>
    %c1_16 = arith.constant 1 : index
    %c0_17 = arith.constant 0 : index
    %c0_18 = arith.constant 0 : index
    %c0_19 = arith.constant 0 : index
    %14 = vector.load %arg1[%c1_16, %c0_17, %c0_18, %c0_19] : memref<2x8x1x128xf32, #tpu.memory_space<vmem>>, vector<1x1x1x128xf32>
    %15 = vector.shape_cast %14 : vector<1x1x1x128xf32> to vector<1x128xf32>
    %cst = arith.constant 4.000000e+00 : f32
    %16 = vector.broadcast %cst : f32 to vector<1x128xf32>
    %17 = arith.mulf %13, %16 : vector<1x128xf32>
    %cst_20 = arith.constant -4.000000e+00 : f32
    %cst_21 = arith.constant 4.000000e+00 : f32
    %18 = vector.broadcast %cst_20 : f32 to vector<1x128xf32>
    %19 = arith.maximumf %18, %17 : vector<1x128xf32>
    %20 = vector.broadcast %cst_21 : f32 to vector<1x128xf32>
    %21 = arith.minimumf %20, %19 : vector<1x128xf32>
    %cst_22 = arith.constant 5.000000e-01 : f32
    %22 = vector.broadcast %cst_22 : f32 to vector<1x128xf32>
    %23 = arith.mulf %15, %22 : vector<1x128xf32>
    %cst_23 = arith.constant -5.000000e-01 : f32
    %cst_24 = arith.constant 5.000000e-01 : f32
    %24 = vector.broadcast %cst_23 : f32 to vector<1x128xf32>
    %25 = arith.maximumf %24, %23 : vector<1x128xf32>
    %26 = vector.broadcast %cst_24 : f32 to vector<1x128xf32>
    %27 = arith.minimumf %26, %25 : vector<1x128xf32>
    %cst_25 = arith.constant 3.000000e-02 : f32
    %28 = vector.broadcast %cst_25 : f32 to vector<1x128xf32>
    %29 = arith.mulf %21, %28 : vector<1x128xf32>
    %30 = arith.addf %9, %29 : vector<1x128xf32>
    %cst_26 = arith.constant -5.000000e+00 : f32
    %cst_27 = arith.constant 5.000000e+00 : f32
    %31 = vector.broadcast %cst_26 : f32 to vector<1x128xf32>
    %32 = arith.maximumf %31, %30 : vector<1x128xf32>
    %33 = vector.broadcast %cst_27 : f32 to vector<1x128xf32>
    %34 = arith.minimumf %33, %32 : vector<1x128xf32>
    %cst_28 = arith.constant 3.000000e-02 : f32
    %35 = vector.broadcast %cst_28 : f32 to vector<1x128xf32>
    %36 = arith.mulf %27, %35 : vector<1x128xf32>
    %37 = arith.addf %11, %36 : vector<1x128xf32>
    %cst_29 = arith.constant -5.000000e-01 : f32
    %cst_30 = arith.constant 5.000000e-01 : f32
    %38 = vector.broadcast %cst_29 : f32 to vector<1x128xf32>
    %39 = arith.maximumf %38, %37 : vector<1x128xf32>
    %40 = vector.broadcast %cst_30 : f32 to vector<1x128xf32>
    %41 = arith.minimumf %40, %39 : vector<1x128xf32>
    %cst_31 = arith.constant 3.000000e-02 : f32
    %42 = vector.broadcast %cst_31 : f32 to vector<1x128xf32>
    %43 = arith.mulf %34, %42 : vector<1x128xf32>
    %44 = arith.addf %7, %43 : vector<1x128xf32>
    %cst_32 = arith.constant 0.000000e+00 : f32
    %cst_33 = arith.constant 1.000000e+01 : f32
    %45 = vector.broadcast %cst_32 : f32 to vector<1x128xf32>
    %46 = arith.maximumf %45, %44 : vector<1x128xf32>
    %47 = vector.broadcast %cst_33 : f32 to vector<1x128xf32>
    %48 = arith.minimumf %47, %46 : vector<1x128xf32>
    %49 = math.sin %41 : vector<1x128xf32>
    %50 = math.cos %41 : vector<1x128xf32>
    %51 = arith.divf %49, %50 : vector<1x128xf32>
    %52 = arith.mulf %7, %51 : vector<1x128xf32>
    %cst_34 = arith.constant 4.000000e-01 : f32
    %53 = vector.broadcast %cst_34 : f32 to vector<1x128xf32>
    %54 = arith.mulf %52, %53 : vector<1x128xf32>
    %cst_35 = arith.constant -1.570000e+00 : f32
    %cst_36 = arith.constant 1.570000e+00 : f32
    %55 = vector.broadcast %cst_35 : f32 to vector<1x128xf32>
    %56 = arith.maximumf %55, %54 : vector<1x128xf32>
    %57 = vector.broadcast %cst_36 : f32 to vector<1x128xf32>
    %58 = arith.minimumf %57, %56 : vector<1x128xf32>
    %cst_37 = arith.constant 3.000000e-02 : f32
    %59 = vector.broadcast %cst_37 : f32 to vector<1x128xf32>
    %60 = arith.mulf %58, %59 : vector<1x128xf32>
    %61 = arith.addf %60, %5 : vector<1x128xf32>
    %62 = math.cos %61 : vector<1x128xf32>
    %63 = arith.mulf %48, %62 : vector<1x128xf32>
    %cst_38 = arith.constant 3.000000e-02 : f32
    %64 = vector.broadcast %cst_38 : f32 to vector<1x128xf32>
    %65 = arith.mulf %63, %64 : vector<1x128xf32>
    %66 = arith.addf %65, %1 : vector<1x128xf32>
    %67 = math.sin %61 : vector<1x128xf32>
    %68 = arith.mulf %48, %67 : vector<1x128xf32>
    %cst_39 = arith.constant 3.000000e-02 : f32
    %69 = vector.broadcast %cst_39 : f32 to vector<1x128xf32>
    %70 = arith.mulf %68, %69 : vector<1x128xf32>
    %71 = arith.addf %70, %3 : vector<1x128xf32>
    %c0_40 = arith.constant 0 : index
    %c0_41 = arith.constant 0 : index
    %c0_42 = arith.constant 0 : index
    %c0_43 = arith.constant 0 : index
    %72 = vector.load %arg3[%c0_40, %c0_41, %c0_42, %c0_43] : memref<8x6x1x128xf32, #tpu.memory_space<vmem>>, vector<1x1x1x128xf32>
    %73 = vector.shape_cast %72 : vector<1x1x1x128xf32> to vector<1x128xf32>
    %74 = vector.shape_cast %66 : vector<1x128xf32> to vector<1x1x1x128xf32>
    tpu.vector_store %arg3[%c0_40, %c0_41, %c0_42, %c0_43], %74 {strides = array<i32>} : memref<8x6x1x128xf32, #tpu.memory_space<vmem>>, vector<1x1x1x128xf32>,
    %c0_44 = arith.constant 0 : index
    %c1_45 = arith.constant 1 : index
    %c0_46 = arith.constant 0 : index
    %c0_47 = arith.constant 0 : index
    %75 = vector.load %arg3[%c0_44, %c1_45, %c0_46, %c0_47] : memref<8x6x1x128xf32, #tpu.memory_space<vmem>>, vector<1x1x1x128xf32>
    %76 = vector.shape_cast %75 : vector<1x1x1x128xf32> to vector<1x128xf32>
    %77 = vector.shape_cast %71 : vector<1x128xf32> to vector<1x1x1x128xf32>
    tpu.vector_store %arg3[%c0_44, %c1_45, %c0_46, %c0_47], %77 {strides = array<i32>} : memref<8x6x1x128xf32, #tpu.memory_space<vmem>>, vector<1x1x1x128xf32>,
    %c0_48 = arith.constant 0 : index
    %c2_49 = arith.constant 2 : index
    %c0_50 = arith.constant 0 : index
    %c0_51 = arith.constant 0 : index
    %78 = vector.load %arg3[%c0_48, %c2_49, %c0_50, %c0_51] : memref<8x6x1x128xf32, #tpu.memory_space<vmem>>, vector<1x1x1x128xf32>
    %79 = vector.shape_cast %78 : vector<1x1x1x128xf32> to vector<1x128xf32>
    %80 = vector.shape_cast %61 : vector<1x128xf32> to vector<1x1x1x128xf32>
    tpu.vector_store %arg3[%c0_48, %c2_49, %c0_50, %c0_51], %80 {strides = array<i32>} : memref<8x6x1x128xf32, #tpu.memory_space<vmem>>, vector<1x1x1x128xf32>,
    %c0_52 = arith.constant 0 : index
    %c3_53 = arith.constant 3 : index
    %c0_54 = arith.constant 0 : index
    %c0_55 = arith.constant 0 : index
    %81 = vector.load %arg3[%c0_52, %c3_53, %c0_54, %c0_55] : memref<8x6x1x128xf32, #tpu.memory_space<vmem>>, vector<1x1x1x128xf32>
    %82 = vector.shape_cast %81 : vector<1x1x1x128xf32> to vector<1x128xf32>
    %83 = vector.shape_cast %48 : vector<1x128xf32> to vector<1x1x1x128xf32>
    tpu.vector_store %arg3[%c0_52, %c3_53, %c0_54, %c0_55], %83 {strides = array<i32>} : memref<8x6x1x128xf32, #tpu.memory_space<vmem>>, vector<1x1x1x128xf32>,
    %c0_56 = arith.constant 0 : index
    %c4_57 = arith.constant 4 : index
    %c0_58 = arith.constant 0 : index
    %c0_59 = arith.constant 0 : index
    %84 = vector.load %arg3[%c0_56, %c4_57, %c0_58, %c0_59] : memref<8x6x1x128xf32, #tpu.memory_space<vmem>>, vector<1x1x1x128xf32>
    %85 = vector.shape_cast %84 : vector<1x1x1x128xf32> to vector<1x128xf32>
    %86 = vector.shape_cast %34 : vector<1x128xf32> to vector<1x1x1x128xf32>
    tpu.vector_store %arg3[%c0_56, %c4_57, %c0_58, %c0_59], %86 {strides = array<i32>} : memref<8x6x1x128xf32, #tpu.memory_space<vmem>>, vector<1x1x1x128xf32>,
    %c0_60 = arith.constant 0 : index
    %c5_61 = arith.constant 5 : index
    %c0_62 = arith.constant 0 : index
    %c0_63 = arith.constant 0 : index
    %87 = vector.load %arg3[%c0_60, %c5_61, %c0_62, %c0_63] : memref<8x6x1x128xf32, #tpu.memory_space<vmem>>, vector<1x1x1x128xf32>
    %88 = vector.shape_cast %87 : vector<1x1x1x128xf32> to vector<1x128xf32>
    %89 = vector.shape_cast %41 : vector<1x128xf32> to vector<1x1x1x128xf32>
    tpu.vector_store %arg3[%c0_60, %c5_61, %c0_62, %c0_63], %89 {strides = array<i32>} : memref<8x6x1x128xf32, #tpu.memory_space<vmem>>, vector<1x1x1x128xf32>,
    %c0_64 = arith.constant 0 : index
    %c1_65 = arith.constant 1 : index
    %c0_66 = arith.constant 0 : index
    %c0_67 = arith.constant 0 : index
    %90 = vector.load %arg1[%c0_64, %c1_65, %c0_66, %c0_67] : memref<2x8x1x128xf32, #tpu.memory_space<vmem>>, vector<1x1x1x128xf32>
    %91 = vector.shape_cast %90 : vector<1x1x1x128xf32> to vector<1x128xf32>
    %c1_68 = arith.constant 1 : index
    %c1_69 = arith.constant 1 : index
    %c0_70 = arith.constant 0 : index
    %c0_71 = arith.constant 0 : index
    %92 = vector.load %arg1[%c1_68, %c1_69, %c0_70, %c0_71] : memref<2x8x1x128xf32, #tpu.memory_space<vmem>>, vector<1x1x1x128xf32>
    %93 = vector.shape_cast %92 : vector<1x1x1x128xf32> to vector<1x128xf32>
    %cst_72 = arith.constant 4.000000e+00 : f32
    %94 = vector.broadcast %cst_72 : f32 to vector<1x128xf32>
    %95 = arith.mulf %91, %94 : vector<1x128xf32>
    %cst_73 = arith.constant -4.000000e+00 : f32
    %cst_74 = arith.constant 4.000000e+00 : f32
    %96 = vector.broadcast %cst_73 : f32 to vector<1x128xf32>
    %97 = arith.maximumf %96, %95 : vector<1x128xf32>
    %98 = vector.broadcast %cst_74 : f32 to vector<1x128xf32>
    %99 = arith.minimumf %98, %97 : vector<1x128xf32>
    %cst_75 = arith.constant 5.000000e-01 : f32
    %100 = vector.broadcast %cst_75 : f32 to vector<1x128xf32>
    %101 = arith.mulf %93, %100 : vector<1x128xf32>
    %cst_76 = arith.constant -5.000000e-01 : f32
    %cst_77 = arith.constant 5.000000e-01 : f32
    %102 = vector.broadcast %cst_76 : f32 to vector<1x128xf32>
    %103 = arith.maximumf %102, %101 : vector<1x128xf32>
    %104 = vector.broadcast %cst_77 : f32 to vector<1x128xf32>
    %105 = arith.minimumf %104, %103 : vector<1x128xf32>
    %cst_78 = arith.constant 3.000000e-02 : f32
    %106 = vector.broadcast %cst_78 : f32 to vector<1x128xf32>
    %107 = arith.mulf %99, %106 : vector<1x128xf32>
    %108 = arith.addf %34, %107 : vector<1x128xf32>
    %cst_79 = arith.constant -5.000000e+00 : f32
    %cst_80 = arith.constant 5.000000e+00 : f32
    %109 = vector.broadcast %cst_79 : f32 to vector<1x128xf32>
    %110 = arith.maximumf %109, %108 : vector<1x128xf32>
    %111 = vector.broadcast %cst_80 : f32 to vector<1x128xf32>
    %112 = arith.minimumf %111, %110 : vector<1x128xf32>
    %cst_81 = arith.constant 3.000000e-02 : f32
    %113 = vector.broadcast %cst_81 : f32 to vector<1x128xf32>
    %114 = arith.mulf %105, %113 : vector<1x128xf32>
    %115 = arith.addf %41, %114 : vector<1x128xf32>
    %cst_82 = arith.constant -5.000000e-01 : f32
    %cst_83 = arith.constant 5.000000e-01 : f32
    %116 = vector.broadcast %cst_82 : f32 to vector<1x128xf32>
    %117 = arith.maximumf %116, %115 : vector<1x128xf32>
    %118 = vector.broadcast %cst_83 : f32 to vector<1x128xf32>
    %119 = arith.minimumf %118, %117 : vector<1x128xf32>
    %cst_84 = arith.constant 3.000000e-02 : f32
    %120 = vector.broadcast %cst_84 : f32 to vector<1x128xf32>
    %121 = arith.mulf %112, %120 : vector<1x128xf32>
    %122 = arith.addf %48, %121 : vector<1x128xf32>
    %cst_85 = arith.constant 0.000000e+00 : f32
    %cst_86 = arith.constant 1.000000e+01 : f32
    %123 = vector.broadcast %cst_85 : f32 to vector<1x128xf32>
    %124 = arith.maximumf %123, %122 : vector<1x128xf32>
    %125 = vector.broadcast %cst_86 : f32 to vector<1x128xf32>
    %126 = arith.minimumf %125, %124 : vector<1x128xf32>
    %127 = math.sin %119 : vector<1x128xf32>
    %128 = math.cos %119 : vector<1x128xf32>
    %129 = arith.divf %127, %128 : vector<1x128xf32>
    %130 = arith.mulf %48, %129 : vector<1x128xf32>
    %cst_87 = arith.constant 4.000000e-01 : f32
    %131 = vector.broadcast %cst_87 : f32 to vector<1x128xf32>
    %132 = arith.mulf %130, %131 : vector<1x128xf32>
    %cst_88 = arith.constant -1.570000e+00 : f32
    %cst_89 = arith.constant 1.570000e+00 : f32
    %133 = vector.broadcast %cst_88 : f32 to vector<1x128xf32>
    %134 = arith.maximumf %133, %132 : vector<1x128xf32>
    %135 = vector.broadcast %cst_89 : f32 to vector<1x128xf32>
    %136 = arith.minimumf %135, %134 : vector<1x128xf32>
    %cst_90 = arith.constant 3.000000e-02 : f32
    %137 = vector.broadcast %cst_90 : f32 to vector<1x128xf32>
    %138 = arith.mulf %136, %137 : vector<1x128xf32>
    %139 = arith.addf %138, %61 : vector<1x128xf32>
    %140 = math.cos %139 : vector<1x128xf32>
    %141 = arith.mulf %126, %140 : vector<1x128xf32>
    %cst_91 = arith.constant 3.000000e-02 : f32
    %142 = vector.broadcast %cst_91 : f32 to vector<1x128xf32>
    %143 = arith.mulf %141, %142 : vector<1x128xf32>
    %144 = arith.addf %143, %66 : vector<1x128xf32>
    %145 = math.sin %139 : vector<1x128xf32>
    %146 = arith.mulf %126, %145 : vector<1x128xf32>
    %cst_92 = arith.constant 3.000000e-02 : f32
    %147 = vector.broadcast %cst_92 : f32 to vector<1x128xf32>
    %148 = arith.mulf %146, %147 : vector<1x128xf32>
    %149 = arith.addf %148, %71 : vector<1x128xf32>
    %c1_93 = arith.constant 1 : index
    %c0_94 = arith.constant 0 : index
    %c0_95 = arith.constant 0 : index
    %c0_96 = arith.constant 0 : index
    %150 = vector.load %arg3[%c1_93, %c0_94, %c0_95, %c0_96] : memref<8x6x1x128xf32, #tpu.memory_space<vmem>>, vector<1x1x1x128xf32>
    %151 = vector.shape_cast %150 : vector<1x1x1x128xf32> to vector<1x128xf32>
    %152 = vector.shape_cast %144 : vector<1x128xf32> to vector<1x1x1x128xf32>
    tpu.vector_store %arg3[%c1_93, %c0_94, %c0_95, %c0_96], %152 {strides = array<i32>} : memref<8x6x1x128xf32, #tpu.memory_space<vmem>>, vector<1x1x1x128xf32>,
    %c1_97 = arith.constant 1 : index
    %c1_98 = arith.constant 1 : index
    %c0_99 = arith.constant 0 : index
    %c0_100 = arith.constant 0 : index
    %153 = vector.load %arg3[%c1_97, %c1_98, %c0_99, %c0_100] : memref<8x6x1x128xf32, #tpu.memory_space<vmem>>, vector<1x1x1x128xf32>
    %154 = vector.shape_cast %153 : vector<1x1x1x128xf32> to vector<1x128xf32>
    %155 = vector.shape_cast %149 : vector<1x128xf32> to vector<1x1x1x128xf32>
    tpu.vector_store %arg3[%c1_97, %c1_98, %c0_99, %c0_100], %155 {strides = array<i32>} : memref<8x6x1x128xf32, #tpu.memory_space<vmem>>, vector<1x1x1x128xf32>,
    %c1_101 = arith.constant 1 : index
    %c2_102 = arith.constant 2 : index
    %c0_103 = arith.constant 0 : index
    %c0_104 = arith.constant 0 : index
    %156 = vector.load %arg3[%c1_101, %c2_102, %c0_103, %c0_104] : memref<8x6x1x128xf32, #tpu.memory_space<vmem>>, vector<1x1x1x128xf32>
    %157 = vector.shape_cast %156 : vector<1x1x1x128xf32> to vector<1x128xf32>
    %158 = vector.shape_cast %139 : vector<1x128xf32> to vector<1x1x1x128xf32>
    tpu.vector_store %arg3[%c1_101, %c2_102, %c0_103, %c0_104], %158 {strides = array<i32>} : memref<8x6x1x128xf32, #tpu.memory_space<vmem>>, vector<1x1x1x128xf32>,
    %c1_105 = arith.constant 1 : index
    %c3_106 = arith.constant 3 : index
    %c0_107 = arith.constant 0 : index
    %c0_108 = arith.constant 0 : index
    %159 = vector.load %arg3[%c1_105, %c3_106, %c0_107, %c0_108] : memref<8x6x1x128xf32, #tpu.memory_space<vmem>>, vector<1x1x1x128xf32>
    %160 = vector.shape_cast %159 : vector<1x1x1x128xf32> to vector<1x128xf32>
    %161 = vector.shape_cast %126 : vector<1x128xf32> to vector<1x1x1x128xf32>
    tpu.vector_store %arg3[%c1_105, %c3_106, %c0_107, %c0_108], %161 {strides = array<i32>} : memref<8x6x1x128xf32, #tpu.memory_space<vmem>>, vector<1x1x1x128xf32>,
    %c1_109 = arith.constant 1 : index
    %c4_110 = arith.constant 4 : index
    %c0_111 = arith.constant 0 : index
    %c0_112 = arith.constant 0 : index
    %162 = vector.load %arg3[%c1_109, %c4_110, %c0_111, %c0_112] : memref<8x6x1x128xf32, #tpu.memory_space<vmem>>, vector<1x1x1x128xf32>
    %163 = vector.shape_cast %162 : vector<1x1x1x128xf32> to vector<1x128xf32>
    %164 = vector.shape_cast %112 : vector<1x128xf32> to vector<1x1x1x128xf32>
    tpu.vector_store %arg3[%c1_109, %c4_110, %c0_111, %c0_112], %164 {strides = array<i32>} : memref<8x6x1x128xf32, #tpu.memory_space<vmem>>, vector<1x1x1x128xf32>,
    %c1_113 = arith.constant 1 : index
    %c5_114 = arith.constant 5 : index
    %c0_115 = arith.constant 0 : index
    %c0_116 = arith.constant 0 : index
    %165 = vector.load %arg3[%c1_113, %c5_114, %c0_115, %c0_116] : memref<8x6x1x128xf32, #tpu.memory_space<vmem>>, vector<1x1x1x128xf32>
    %166 = vector.shape_cast %165 : vector<1x1x1x128xf32> to vector<1x128xf32>
    %167 = vector.shape_cast %119 : vector<1x128xf32> to vector<1x1x1x128xf32>
    tpu.vector_store %arg3[%c1_113, %c5_114, %c0_115, %c0_116], %167 {strides = array<i32>} : memref<8x6x1x128xf32, #tpu.memory_space<vmem>>, vector<1x1x1x128xf32>,
    %c0_117 = arith.constant 0 : index
    %c2_118 = arith.constant 2 : index
    %c0_119 = arith.constant 0 : index
    %c0_120 = arith.constant 0 : index
    %168 = vector.load %arg1[%c0_117, %c2_118, %c0_119, %c0_120] : memref<2x8x1x128xf32, #tpu.memory_space<vmem>>, vector<1x1x1x128xf32>
    %169 = vector.shape_cast %168 : vector<1x1x1x128xf32> to vector<1x128xf32>
    %c1_121 = arith.constant 1 : index
    %c2_122 = arith.constant 2 : index
    %c0_123 = arith.constant 0 : index
    %c0_124 = arith.constant 0 : index
    %170 = vector.load %arg1[%c1_121, %c2_122, %c0_123, %c0_124] : memref<2x8x1x128xf32, #tpu.memory_space<vmem>>, vector<1x1x1x128xf32>
    %171 = vector.shape_cast %170 : vector<1x1x1x128xf32> to vector<1x128xf32>
    %cst_125 = arith.constant 4.000000e+00 : f32
    %172 = vector.broadcast %cst_125 : f32 to vector<1x128xf32>
    %173 = arith.mulf %169, %172 : vector<1x128xf32>
    %cst_126 = arith.constant -4.000000e+00 : f32
    %cst_127 = arith.constant 4.000000e+00 : f32
    %174 = vector.broadcast %cst_126 : f32 to vector<1x128xf32>
    %175 = arith.maximumf %174, %173 : vector<1x128xf32>
    %176 = vector.broadcast %cst_127 : f32 to vector<1x128xf32>
    %177 = arith.minimumf %176, %175 : vector<1x128xf32>
    %cst_128 = arith.constant 5.000000e-01 : f32
    %178 = vector.broadcast %cst_128 : f32 to vector<1x128xf32>
    %179 = arith.mulf %171, %178 : vector<1x128xf32>
    %cst_129 = arith.constant -5.000000e-01 : f32
    %cst_130 = arith.constant 5.000000e-01 : f32
    %180 = vector.broadcast %cst_129 : f32 to vector<1x128xf32>
    %181 = arith.maximumf %180, %179 : vector<1x128xf32>
    %182 = vector.broadcast %cst_130 : f32 to vector<1x128xf32>
    %183 = arith.minimumf %182, %181 : vector<1x128xf32>
    %cst_131 = arith.constant 3.000000e-02 : f32
    %184 = vector.broadcast %cst_131 : f32 to vector<1x128xf32>
    %185 = arith.mulf %177, %184 : vector<1x128xf32>
    %186 = arith.addf %112, %185 : vector<1x128xf32>
    %cst_132 = arith.constant -5.000000e+00 : f32
    %cst_133 = arith.constant 5.000000e+00 : f32
    %187 = vector.broadcast %cst_132 : f32 to vector<1x128xf32>
    %188 = arith.maximumf %187, %186 : vector<1x128xf32>
    %189 = vector.broadcast %cst_133 : f32 to vector<1x128xf32>
    %190 = arith.minimumf %189, %188 : vector<1x128xf32>
    %cst_134 = arith.constant 3.000000e-02 : f32
    %191 = vector.broadcast %cst_134 : f32 to vector<1x128xf32>
    %192 = arith.mulf %183, %191 : vector<1x128xf32>
    %193 = arith.addf %119, %192 : vector<1x128xf32>
    %cst_135 = arith.constant -5.000000e-01 : f32
    %cst_136 = arith.constant 5.000000e-01 : f32
    %194 = vector.broadcast %cst_135 : f32 to vector<1x128xf32>
    %195 = arith.maximumf %194, %193 : vector<1x128xf32>
    %196 = vector.broadcast %cst_136 : f32 to vector<1x128xf32>
    %197 = arith.minimumf %196, %195 : vector<1x128xf32>
    %cst_137 = arith.constant 3.000000e-02 : f32
    %198 = vector.broadcast %cst_137 : f32 to vector<1x128xf32>
    %199 = arith.mulf %190, %198 : vector<1x128xf32>
    %200 = arith.addf %126, %199 : vector<1x128xf32>
    %cst_138 = arith.constant 0.000000e+00 : f32
    %cst_139 = arith.constant 1.000000e+01 : f32
    %201 = vector.broadcast %cst_138 : f32 to vector<1x128xf32>
    %202 = arith.maximumf %201, %200 : vector<1x128xf32>
    %203 = vector.broadcast %cst_139 : f32 to vector<1x128xf32>
    %204 = arith.minimumf %203, %202 : vector<1x128xf32>
    %205 = math.sin %197 : vector<1x128xf32>
    %206 = math.cos %197 : vector<1x128xf32>
    %207 = arith.divf %205, %206 : vector<1x128xf32>
    %208 = arith.mulf %126, %207 : vector<1x128xf32>
    %cst_140 = arith.constant 4.000000e-01 : f32
    %209 = vector.broadcast %cst_140 : f32 to vector<1x128xf32>
    %210 = arith.mulf %208, %209 : vector<1x128xf32>
    %cst_141 = arith.constant -1.570000e+00 : f32
    %cst_142 = arith.constant 1.570000e+00 : f32
    %211 = vector.broadcast %cst_141 : f32 to vector<1x128xf32>
    %212 = arith.maximumf %211, %210 : vector<1x128xf32>
    %213 = vector.broadcast %cst_142 : f32 to vector<1x128xf32>
    %214 = arith.minimumf %213, %212 : vector<1x128xf32>
    %cst_143 = arith.constant 3.000000e-02 : f32
    %215 = vector.broadcast %cst_143 : f32 to vector<1x128xf32>
    %216 = arith.mulf %214, %215 : vector<1x128xf32>
    %217 = arith.addf %216, %139 : vector<1x128xf32>
    %218 = math.cos %217 : vector<1x128xf32>
    %219 = arith.mulf %204, %218 : vector<1x128xf32>
    %cst_144 = arith.constant 3.000000e-02 : f32
    %220 = vector.broadcast %cst_144 : f32 to vector<1x128xf32>
    %221 = arith.mulf %219, %220 : vector<1x128xf32>
    %222 = arith.addf %221, %144 : vector<1x128xf32>
    %223 = math.sin %217 : vector<1x128xf32>
    %224 = arith.mulf %204, %223 : vector<1x128xf32>
    %cst_145 = arith.constant 3.000000e-02 : f32
    %225 = vector.broadcast %cst_145 : f32 to vector<1x128xf32>
    %226 = arith.mulf %224, %225 : vector<1x128xf32>
    %227 = arith.addf %226, %149 : vector<1x128xf32>
    %c2_146 = arith.constant 2 : index
    %c0_147 = arith.constant 0 : index
    %c0_148 = arith.constant 0 : index
    %c0_149 = arith.constant 0 : index
    %228 = vector.load %arg3[%c2_146, %c0_147, %c0_148, %c0_149] : memref<8x6x1x128xf32, #tpu.memory_space<vmem>>, vector<1x1x1x128xf32>
    %229 = vector.shape_cast %228 : vector<1x1x1x128xf32> to vector<1x128xf32>
    %230 = vector.shape_cast %222 : vector<1x128xf32> to vector<1x1x1x128xf32>
    tpu.vector_store %arg3[%c2_146, %c0_147, %c0_148, %c0_149], %230 {strides = array<i32>} : memref<8x6x1x128xf32, #tpu.memory_space<vmem>>, vector<1x1x1x128xf32>,
    %c2_150 = arith.constant 2 : index
    %c1_151 = arith.constant 1 : index
    %c0_152 = arith.constant 0 : index
    %c0_153 = arith.constant 0 : index
    %231 = vector.load %arg3[%c2_150, %c1_151, %c0_152, %c0_153] : memref<8x6x1x128xf32, #tpu.memory_space<vmem>>, vector<1x1x1x128xf32>
    %232 = vector.shape_cast %231 : vector<1x1x1x128xf32> to vector<1x128xf32>
    %233 = vector.shape_cast %227 : vector<1x128xf32> to vector<1x1x1x128xf32>
    tpu.vector_store %arg3[%c2_150, %c1_151, %c0_152, %c0_153], %233 {strides = array<i32>} : memref<8x6x1x128xf32, #tpu.memory_space<vmem>>, vector<1x1x1x128xf32>,
    %c2_154 = arith.constant 2 : index
    %c2_155 = arith.constant 2 : index
    %c0_156 = arith.constant 0 : index
    %c0_157 = arith.constant 0 : index
    %234 = vector.load %arg3[%c2_154, %c2_155, %c0_156, %c0_157] : memref<8x6x1x128xf32, #tpu.memory_space<vmem>>, vector<1x1x1x128xf32>
    %235 = vector.shape_cast %234 : vector<1x1x1x128xf32> to vector<1x128xf32>
    %236 = vector.shape_cast %217 : vector<1x128xf32> to vector<1x1x1x128xf32>
    tpu.vector_store %arg3[%c2_154, %c2_155, %c0_156, %c0_157], %236 {strides = array<i32>} : memref<8x6x1x128xf32, #tpu.memory_space<vmem>>, vector<1x1x1x128xf32>,
    %c2_158 = arith.constant 2 : index
    %c3_159 = arith.constant 3 : index
    %c0_160 = arith.constant 0 : index
    %c0_161 = arith.constant 0 : index
    %237 = vector.load %arg3[%c2_158, %c3_159, %c0_160, %c0_161] : memref<8x6x1x128xf32, #tpu.memory_space<vmem>>, vector<1x1x1x128xf32>
    %238 = vector.shape_cast %237 : vector<1x1x1x128xf32> to vector<1x128xf32>
    %239 = vector.shape_cast %204 : vector<1x128xf32> to vector<1x1x1x128xf32>
    tpu.vector_store %arg3[%c2_158, %c3_159, %c0_160, %c0_161], %239 {strides = array<i32>} : memref<8x6x1x128xf32, #tpu.memory_space<vmem>>, vector<1x1x1x128xf32>,
    %c2_162 = arith.constant 2 : index
    %c4_163 = arith.constant 4 : index
    %c0_164 = arith.constant 0 : index
    %c0_165 = arith.constant 0 : index
    %240 = vector.load %arg3[%c2_162, %c4_163, %c0_164, %c0_165] : memref<8x6x1x128xf32, #tpu.memory_space<vmem>>, vector<1x1x1x128xf32>
    %241 = vector.shape_cast %240 : vector<1x1x1x128xf32> to vector<1x128xf32>
    %242 = vector.shape_cast %190 : vector<1x128xf32> to vector<1x1x1x128xf32>
    tpu.vector_store %arg3[%c2_162, %c4_163, %c0_164, %c0_165], %242 {strides = array<i32>} : memref<8x6x1x128xf32, #tpu.memory_space<vmem>>, vector<1x1x1x128xf32>,
    %c2_166 = arith.constant 2 : index
    %c5_167 = arith.constant 5 : index
    %c0_168 = arith.constant 0 : index
    %c0_169 = arith.constant 0 : index
    %243 = vector.load %arg3[%c2_166, %c5_167, %c0_168, %c0_169] : memref<8x6x1x128xf32, #tpu.memory_space<vmem>>, vector<1x1x1x128xf32>
    %244 = vector.shape_cast %243 : vector<1x1x1x128xf32> to vector<1x128xf32>
    %245 = vector.shape_cast %197 : vector<1x128xf32> to vector<1x1x1x128xf32>
    tpu.vector_store %arg3[%c2_166, %c5_167, %c0_168, %c0_169], %245 {strides = array<i32>} : memref<8x6x1x128xf32, #tpu.memory_space<vmem>>, vector<1x1x1x128xf32>,
    %c0_170 = arith.constant 0 : index
    %c3_171 = arith.constant 3 : index
    %c0_172 = arith.constant 0 : index
    %c0_173 = arith.constant 0 : index
    %246 = vector.load %arg1[%c0_170, %c3_171, %c0_172, %c0_173] : memref<2x8x1x128xf32, #tpu.memory_space<vmem>>, vector<1x1x1x128xf32>
    %247 = vector.shape_cast %246 : vector<1x1x1x128xf32> to vector<1x128xf32>
    %c1_174 = arith.constant 1 : index
    %c3_175 = arith.constant 3 : index
    %c0_176 = arith.constant 0 : index
    %c0_177 = arith.constant 0 : index
    %248 = vector.load %arg1[%c1_174, %c3_175, %c0_176, %c0_177] : memref<2x8x1x128xf32, #tpu.memory_space<vmem>>, vector<1x1x1x128xf32>
    %249 = vector.shape_cast %248 : vector<1x1x1x128xf32> to vector<1x128xf32>
    %cst_178 = arith.constant 4.000000e+00 : f32
    %250 = vector.broadcast %cst_178 : f32 to vector<1x128xf32>
    %251 = arith.mulf %247, %250 : vector<1x128xf32>
    %cst_179 = arith.constant -4.000000e+00 : f32
    %cst_180 = arith.constant 4.000000e+00 : f32
    %252 = vector.broadcast %cst_179 : f32 to vector<1x128xf32>
    %253 = arith.maximumf %252, %251 : vector<1x128xf32>
    %254 = vector.broadcast %cst_180 : f32 to vector<1x128xf32>
    %255 = arith.minimumf %254, %253 : vector<1x128xf32>
    %cst_181 = arith.constant 5.000000e-01 : f32
    %256 = vector.broadcast %cst_181 : f32 to vector<1x128xf32>
    %257 = arith.mulf %249, %256 : vector<1x128xf32>
    %cst_182 = arith.constant -5.000000e-01 : f32
    %cst_183 = arith.constant 5.000000e-01 : f32
    %258 = vector.broadcast %cst_182 : f32 to vector<1x128xf32>
    %259 = arith.maximumf %258, %257 : vector<1x128xf32>
    %260 = vector.broadcast %cst_183 : f32 to vector<1x128xf32>
    %261 = arith.minimumf %260, %259 : vector<1x128xf32>
    %cst_184 = arith.constant 3.000000e-02 : f32
    %262 = vector.broadcast %cst_184 : f32 to vector<1x128xf32>
    %263 = arith.mulf %255, %262 : vector<1x128xf32>
    %264 = arith.addf %190, %263 : vector<1x128xf32>
    %cst_185 = arith.constant -5.000000e+00 : f32
    %cst_186 = arith.constant 5.000000e+00 : f32
    %265 = vector.broadcast %cst_185 : f32 to vector<1x128xf32>
    %266 = arith.maximumf %265, %264 : vector<1x128xf32>
    %267 = vector.broadcast %cst_186 : f32 to vector<1x128xf32>
    %268 = arith.minimumf %267, %266 : vector<1x128xf32>
    %cst_187 = arith.constant 3.000000e-02 : f32
    %269 = vector.broadcast %cst_187 : f32 to vector<1x128xf32>
    %270 = arith.mulf %261, %269 : vector<1x128xf32>
    %271 = arith.addf %197, %270 : vector<1x128xf32>
    %cst_188 = arith.constant -5.000000e-01 : f32
    %cst_189 = arith.constant 5.000000e-01 : f32
    %272 = vector.broadcast %cst_188 : f32 to vector<1x128xf32>
    %273 = arith.maximumf %272, %271 : vector<1x128xf32>
    %274 = vector.broadcast %cst_189 : f32 to vector<1x128xf32>
    %275 = arith.minimumf %274, %273 : vector<1x128xf32>
    %cst_190 = arith.constant 3.000000e-02 : f32
    %276 = vector.broadcast %cst_190 : f32 to vector<1x128xf32>
    %277 = arith.mulf %268, %276 : vector<1x128xf32>
    %278 = arith.addf %204, %277 : vector<1x128xf32>
    %cst_191 = arith.constant 0.000000e+00 : f32
    %cst_192 = arith.constant 1.000000e+01 : f32
    %279 = vector.broadcast %cst_191 : f32 to vector<1x128xf32>
    %280 = arith.maximumf %279, %278 : vector<1x128xf32>
    %281 = vector.broadcast %cst_192 : f32 to vector<1x128xf32>
    %282 = arith.minimumf %281, %280 : vector<1x128xf32>
    %283 = math.sin %275 : vector<1x128xf32>
    %284 = math.cos %275 : vector<1x128xf32>
    %285 = arith.divf %283, %284 : vector<1x128xf32>
    %286 = arith.mulf %204, %285 : vector<1x128xf32>
    %cst_193 = arith.constant 4.000000e-01 : f32
    %287 = vector.broadcast %cst_193 : f32 to vector<1x128xf32>
    %288 = arith.mulf %286, %287 : vector<1x128xf32>
    %cst_194 = arith.constant -1.570000e+00 : f32
    %cst_195 = arith.constant 1.570000e+00 : f32
    %289 = vector.broadcast %cst_194 : f32 to vector<1x128xf32>
    %290 = arith.maximumf %289, %288 : vector<1x128xf32>
    %291 = vector.broadcast %cst_195 : f32 to vector<1x128xf32>
    %292 = arith.minimumf %291, %290 : vector<1x128xf32>
    %cst_196 = arith.constant 3.000000e-02 : f32
    %293 = vector.broadcast %cst_196 : f32 to vector<1x128xf32>
    %294 = arith.mulf %292, %293 : vector<1x128xf32>
    %295 = arith.addf %294, %217 : vector<1x128xf32>
    %296 = math.cos %295 : vector<1x128xf32>
    %297 = arith.mulf %282, %296 : vector<1x128xf32>
    %cst_197 = arith.constant 3.000000e-02 : f32
    %298 = vector.broadcast %cst_197 : f32 to vector<1x128xf32>
    %299 = arith.mulf %297, %298 : vector<1x128xf32>
    %300 = arith.addf %299, %222 : vector<1x128xf32>
    %301 = math.sin %295 : vector<1x128xf32>
    %302 = arith.mulf %282, %301 : vector<1x128xf32>
    %cst_198 = arith.constant 3.000000e-02 : f32
    %303 = vector.broadcast %cst_198 : f32 to vector<1x128xf32>
    %304 = arith.mulf %302, %303 : vector<1x128xf32>
    %305 = arith.addf %304, %227 : vector<1x128xf32>
    %c3_199 = arith.constant 3 : index
    %c0_200 = arith.constant 0 : index
    %c0_201 = arith.constant 0 : index
    %c0_202 = arith.constant 0 : index
    %306 = vector.load %arg3[%c3_199, %c0_200, %c0_201, %c0_202] : memref<8x6x1x128xf32, #tpu.memory_space<vmem>>, vector<1x1x1x128xf32>
    %307 = vector.shape_cast %306 : vector<1x1x1x128xf32> to vector<1x128xf32>
    %308 = vector.shape_cast %300 : vector<1x128xf32> to vector<1x1x1x128xf32>
    tpu.vector_store %arg3[%c3_199, %c0_200, %c0_201, %c0_202], %308 {strides = array<i32>} : memref<8x6x1x128xf32, #tpu.memory_space<vmem>>, vector<1x1x1x128xf32>,
    %c3_203 = arith.constant 3 : index
    %c1_204 = arith.constant 1 : index
    %c0_205 = arith.constant 0 : index
    %c0_206 = arith.constant 0 : index
    %309 = vector.load %arg3[%c3_203, %c1_204, %c0_205, %c0_206] : memref<8x6x1x128xf32, #tpu.memory_space<vmem>>, vector<1x1x1x128xf32>
    %310 = vector.shape_cast %309 : vector<1x1x1x128xf32> to vector<1x128xf32>
    %311 = vector.shape_cast %305 : vector<1x128xf32> to vector<1x1x1x128xf32>
    tpu.vector_store %arg3[%c3_203, %c1_204, %c0_205, %c0_206], %311 {strides = array<i32>} : memref<8x6x1x128xf32, #tpu.memory_space<vmem>>, vector<1x1x1x128xf32>,
    %c3_207 = arith.constant 3 : index
    %c2_208 = arith.constant 2 : index
    %c0_209 = arith.constant 0 : index
    %c0_210 = arith.constant 0 : index
    %312 = vector.load %arg3[%c3_207, %c2_208, %c0_209, %c0_210] : memref<8x6x1x128xf32, #tpu.memory_space<vmem>>, vector<1x1x1x128xf32>
    %313 = vector.shape_cast %312 : vector<1x1x1x128xf32> to vector<1x128xf32>
    %314 = vector.shape_cast %295 : vector<1x128xf32> to vector<1x1x1x128xf32>
    tpu.vector_store %arg3[%c3_207, %c2_208, %c0_209, %c0_210], %314 {strides = array<i32>} : memref<8x6x1x128xf32, #tpu.memory_space<vmem>>, vector<1x1x1x128xf32>,
    %c3_211 = arith.constant 3 : index
    %c3_212 = arith.constant 3 : index
    %c0_213 = arith.constant 0 : index
    %c0_214 = arith.constant 0 : index
    %315 = vector.load %arg3[%c3_211, %c3_212, %c0_213, %c0_214] : memref<8x6x1x128xf32, #tpu.memory_space<vmem>>, vector<1x1x1x128xf32>
    %316 = vector.shape_cast %315 : vector<1x1x1x128xf32> to vector<1x128xf32>
    %317 = vector.shape_cast %282 : vector<1x128xf32> to vector<1x1x1x128xf32>
    tpu.vector_store %arg3[%c3_211, %c3_212, %c0_213, %c0_214], %317 {strides = array<i32>} : memref<8x6x1x128xf32, #tpu.memory_space<vmem>>, vector<1x1x1x128xf32>,
    %c3_215 = arith.constant 3 : index
    %c4_216 = arith.constant 4 : index
    %c0_217 = arith.constant 0 : index
    %c0_218 = arith.constant 0 : index
    %318 = vector.load %arg3[%c3_215, %c4_216, %c0_217, %c0_218] : memref<8x6x1x128xf32, #tpu.memory_space<vmem>>, vector<1x1x1x128xf32>
    %319 = vector.shape_cast %318 : vector<1x1x1x128xf32> to vector<1x128xf32>
    %320 = vector.shape_cast %268 : vector<1x128xf32> to vector<1x1x1x128xf32>
    tpu.vector_store %arg3[%c3_215, %c4_216, %c0_217, %c0_218], %320 {strides = array<i32>} : memref<8x6x1x128xf32, #tpu.memory_space<vmem>>, vector<1x1x1x128xf32>,
    %c3_219 = arith.constant 3 : index
    %c5_220 = arith.constant 5 : index
    %c0_221 = arith.constant 0 : index
    %c0_222 = arith.constant 0 : index
    %321 = vector.load %arg3[%c3_219, %c5_220, %c0_221, %c0_222] : memref<8x6x1x128xf32, #tpu.memory_space<vmem>>, vector<1x1x1x128xf32>
    %322 = vector.shape_cast %321 : vector<1x1x1x128xf32> to vector<1x128xf32>
    %323 = vector.shape_cast %275 : vector<1x128xf32> to vector<1x1x1x128xf32>
    tpu.vector_store %arg3[%c3_219, %c5_220, %c0_221, %c0_222], %323 {strides = array<i32>} : memref<8x6x1x128xf32, #tpu.memory_space<vmem>>, vector<1x1x1x128xf32>,
    %c0_223 = arith.constant 0 : index
    %c4_224 = arith.constant 4 : index
    %c0_225 = arith.constant 0 : index
    %c0_226 = arith.constant 0 : index
    %324 = vector.load %arg1[%c0_223, %c4_224, %c0_225, %c0_226] : memref<2x8x1x128xf32, #tpu.memory_space<vmem>>, vector<1x1x1x128xf32>
    %325 = vector.shape_cast %324 : vector<1x1x1x128xf32> to vector<1x128xf32>
    %c1_227 = arith.constant 1 : index
    %c4_228 = arith.constant 4 : index
    %c0_229 = arith.constant 0 : index
    %c0_230 = arith.constant 0 : index
    %326 = vector.load %arg1[%c1_227, %c4_228, %c0_229, %c0_230] : memref<2x8x1x128xf32, #tpu.memory_space<vmem>>, vector<1x1x1x128xf32>
    %327 = vector.shape_cast %326 : vector<1x1x1x128xf32> to vector<1x128xf32>
    %cst_231 = arith.constant 4.000000e+00 : f32
    %328 = vector.broadcast %cst_231 : f32 to vector<1x128xf32>
    %329 = arith.mulf %325, %328 : vector<1x128xf32>
    %cst_232 = arith.constant -4.000000e+00 : f32
    %cst_233 = arith.constant 4.000000e+00 : f32
    %330 = vector.broadcast %cst_232 : f32 to vector<1x128xf32>
    %331 = arith.maximumf %330, %329 : vector<1x128xf32>
    %332 = vector.broadcast %cst_233 : f32 to vector<1x128xf32>
    %333 = arith.minimumf %332, %331 : vector<1x128xf32>
    %cst_234 = arith.constant 5.000000e-01 : f32
    %334 = vector.broadcast %cst_234 : f32 to vector<1x128xf32>
    %335 = arith.mulf %327, %334 : vector<1x128xf32>
    %cst_235 = arith.constant -5.000000e-01 : f32
    %cst_236 = arith.constant 5.000000e-01 : f32
    %336 = vector.broadcast %cst_235 : f32 to vector<1x128xf32>
    %337 = arith.maximumf %336, %335 : vector<1x128xf32>
    %338 = vector.broadcast %cst_236 : f32 to vector<1x128xf32>
    %339 = arith.minimumf %338, %337 : vector<1x128xf32>
    %cst_237 = arith.constant 3.000000e-02 : f32
    %340 = vector.broadcast %cst_237 : f32 to vector<1x128xf32>
    %341 = arith.mulf %333, %340 : vector<1x128xf32>
    %342 = arith.addf %268, %341 : vector<1x128xf32>
    %cst_238 = arith.constant -5.000000e+00 : f32
    %cst_239 = arith.constant 5.000000e+00 : f32
    %343 = vector.broadcast %cst_238 : f32 to vector<1x128xf32>
    %344 = arith.maximumf %343, %342 : vector<1x128xf32>
    %345 = vector.broadcast %cst_239 : f32 to vector<1x128xf32>
    %346 = arith.minimumf %345, %344 : vector<1x128xf32>
    %cst_240 = arith.constant 3.000000e-02 : f32
    %347 = vector.broadcast %cst_240 : f32 to vector<1x128xf32>
    %348 = arith.mulf %339, %347 : vector<1x128xf32>
    %349 = arith.addf %275, %348 : vector<1x128xf32>
    %cst_241 = arith.constant -5.000000e-01 : f32
    %cst_242 = arith.constant 5.000000e-01 : f32
    %350 = vector.broadcast %cst_241 : f32 to vector<1x128xf32>
    %351 = arith.maximumf %350, %349 : vector<1x128xf32>
    %352 = vector.broadcast %cst_242 : f32 to vector<1x128xf32>
    %353 = arith.minimumf %352, %351 : vector<1x128xf32>
    %cst_243 = arith.constant 3.000000e-02 : f32
    %354 = vector.broadcast %cst_243 : f32 to vector<1x128xf32>
    %355 = arith.mulf %346, %354 : vector<1x128xf32>
    %356 = arith.addf %282, %355 : vector<1x128xf32>
    %cst_244 = arith.constant 0.000000e+00 : f32
    %cst_245 = arith.constant 1.000000e+01 : f32
    %357 = vector.broadcast %cst_244 : f32 to vector<1x128xf32>
    %358 = arith.maximumf %357, %356 : vector<1x128xf32>
    %359 = vector.broadcast %cst_245 : f32 to vector<1x128xf32>
    %360 = arith.minimumf %359, %358 : vector<1x128xf32>
    %361 = math.sin %353 : vector<1x128xf32>
    %362 = math.cos %353 : vector<1x128xf32>
    %363 = arith.divf %361, %362 : vector<1x128xf32>
    %364 = arith.mulf %282, %363 : vector<1x128xf32>
    %cst_246 = arith.constant 4.000000e-01 : f32
    %365 = vector.broadcast %cst_246 : f32 to vector<1x128xf32>
    %366 = arith.mulf %364, %365 : vector<1x128xf32>
    %cst_247 = arith.constant -1.570000e+00 : f32
    %cst_248 = arith.constant 1.570000e+00 : f32
    %367 = vector.broadcast %cst_247 : f32 to vector<1x128xf32>
    %368 = arith.maximumf %367, %366 : vector<1x128xf32>
    %369 = vector.broadcast %cst_248 : f32 to vector<1x128xf32>
    %370 = arith.minimumf %369, %368 : vector<1x128xf32>
    %cst_249 = arith.constant 3.000000e-02 : f32
    %371 = vector.broadcast %cst_249 : f32 to vector<1x128xf32>
    %372 = arith.mulf %370, %371 : vector<1x128xf32>
    %373 = arith.addf %372, %295 : vector<1x128xf32>
    %374 = math.cos %373 : vector<1x128xf32>
    %375 = arith.mulf %360, %374 : vector<1x128xf32>
    %cst_250 = arith.constant 3.000000e-02 : f32
    %376 = vector.broadcast %cst_250 : f32 to vector<1x128xf32>
    %377 = arith.mulf %375, %376 : vector<1x128xf32>
    %378 = arith.addf %377, %300 : vector<1x128xf32>
    %379 = math.sin %373 : vector<1x128xf32>
    %380 = arith.mulf %360, %379 : vector<1x128xf32>
    %cst_251 = arith.constant 3.000000e-02 : f32
    %381 = vector.broadcast %cst_251 : f32 to vector<1x128xf32>
    %382 = arith.mulf %380, %381 : vector<1x128xf32>
    %383 = arith.addf %382, %305 : vector<1x128xf32>
    %c4_252 = arith.constant 4 : index
    %c0_253 = arith.constant 0 : index
    %c0_254 = arith.constant 0 : index
    %c0_255 = arith.constant 0 : index
    %384 = vector.load %arg3[%c4_252, %c0_253, %c0_254, %c0_255] : memref<8x6x1x128xf32, #tpu.memory_space<vmem>>, vector<1x1x1x128xf32>
    %385 = vector.shape_cast %384 : vector<1x1x1x128xf32> to vector<1x128xf32>
    %386 = vector.shape_cast %378 : vector<1x128xf32> to vector<1x1x1x128xf32>
    tpu.vector_store %arg3[%c4_252, %c0_253, %c0_254, %c0_255], %386 {strides = array<i32>} : memref<8x6x1x128xf32, #tpu.memory_space<vmem>>, vector<1x1x1x128xf32>,
    %c4_256 = arith.constant 4 : index
    %c1_257 = arith.constant 1 : index
    %c0_258 = arith.constant 0 : index
    %c0_259 = arith.constant 0 : index
    %387 = vector.load %arg3[%c4_256, %c1_257, %c0_258, %c0_259] : memref<8x6x1x128xf32, #tpu.memory_space<vmem>>, vector<1x1x1x128xf32>
    %388 = vector.shape_cast %387 : vector<1x1x1x128xf32> to vector<1x128xf32>
    %389 = vector.shape_cast %383 : vector<1x128xf32> to vector<1x1x1x128xf32>
    tpu.vector_store %arg3[%c4_256, %c1_257, %c0_258, %c0_259], %389 {strides = array<i32>} : memref<8x6x1x128xf32, #tpu.memory_space<vmem>>, vector<1x1x1x128xf32>,
    %c4_260 = arith.constant 4 : index
    %c2_261 = arith.constant 2 : index
    %c0_262 = arith.constant 0 : index
    %c0_263 = arith.constant 0 : index
    %390 = vector.load %arg3[%c4_260, %c2_261, %c0_262, %c0_263] : memref<8x6x1x128xf32, #tpu.memory_space<vmem>>, vector<1x1x1x128xf32>
    %391 = vector.shape_cast %390 : vector<1x1x1x128xf32> to vector<1x128xf32>
    %392 = vector.shape_cast %373 : vector<1x128xf32> to vector<1x1x1x128xf32>
    tpu.vector_store %arg3[%c4_260, %c2_261, %c0_262, %c0_263], %392 {strides = array<i32>} : memref<8x6x1x128xf32, #tpu.memory_space<vmem>>, vector<1x1x1x128xf32>,
    %c4_264 = arith.constant 4 : index
    %c3_265 = arith.constant 3 : index
    %c0_266 = arith.constant 0 : index
    %c0_267 = arith.constant 0 : index
    %393 = vector.load %arg3[%c4_264, %c3_265, %c0_266, %c0_267] : memref<8x6x1x128xf32, #tpu.memory_space<vmem>>, vector<1x1x1x128xf32>
    %394 = vector.shape_cast %393 : vector<1x1x1x128xf32> to vector<1x128xf32>
    %395 = vector.shape_cast %360 : vector<1x128xf32> to vector<1x1x1x128xf32>
    tpu.vector_store %arg3[%c4_264, %c3_265, %c0_266, %c0_267], %395 {strides = array<i32>} : memref<8x6x1x128xf32, #tpu.memory_space<vmem>>, vector<1x1x1x128xf32>,
    %c4_268 = arith.constant 4 : index
    %c4_269 = arith.constant 4 : index
    %c0_270 = arith.constant 0 : index
    %c0_271 = arith.constant 0 : index
    %396 = vector.load %arg3[%c4_268, %c4_269, %c0_270, %c0_271] : memref<8x6x1x128xf32, #tpu.memory_space<vmem>>, vector<1x1x1x128xf32>
    %397 = vector.shape_cast %396 : vector<1x1x1x128xf32> to vector<1x128xf32>
    %398 = vector.shape_cast %346 : vector<1x128xf32> to vector<1x1x1x128xf32>
    tpu.vector_store %arg3[%c4_268, %c4_269, %c0_270, %c0_271], %398 {strides = array<i32>} : memref<8x6x1x128xf32, #tpu.memory_space<vmem>>, vector<1x1x1x128xf32>,
    %c4_272 = arith.constant 4 : index
    %c5_273 = arith.constant 5 : index
    %c0_274 = arith.constant 0 : index
    %c0_275 = arith.constant 0 : index
    %399 = vector.load %arg3[%c4_272, %c5_273, %c0_274, %c0_275] : memref<8x6x1x128xf32, #tpu.memory_space<vmem>>, vector<1x1x1x128xf32>
    %400 = vector.shape_cast %399 : vector<1x1x1x128xf32> to vector<1x128xf32>
    %401 = vector.shape_cast %353 : vector<1x128xf32> to vector<1x1x1x128xf32>
    tpu.vector_store %arg3[%c4_272, %c5_273, %c0_274, %c0_275], %401 {strides = array<i32>} : memref<8x6x1x128xf32, #tpu.memory_space<vmem>>, vector<1x1x1x128xf32>,
    %c0_276 = arith.constant 0 : index
    %c5_277 = arith.constant 5 : index
    %c0_278 = arith.constant 0 : index
    %c0_279 = arith.constant 0 : index
    %402 = vector.load %arg1[%c0_276, %c5_277, %c0_278, %c0_279] : memref<2x8x1x128xf32, #tpu.memory_space<vmem>>, vector<1x1x1x128xf32>
    %403 = vector.shape_cast %402 : vector<1x1x1x128xf32> to vector<1x128xf32>
    %c1_280 = arith.constant 1 : index
    %c5_281 = arith.constant 5 : index
    %c0_282 = arith.constant 0 : index
    %c0_283 = arith.constant 0 : index
    %404 = vector.load %arg1[%c1_280, %c5_281, %c0_282, %c0_283] : memref<2x8x1x128xf32, #tpu.memory_space<vmem>>, vector<1x1x1x128xf32>
    %405 = vector.shape_cast %404 : vector<1x1x1x128xf32> to vector<1x128xf32>
    %cst_284 = arith.constant 4.000000e+00 : f32
    %406 = vector.broadcast %cst_284 : f32 to vector<1x128xf32>
    %407 = arith.mulf %403, %406 : vector<1x128xf32>
    %cst_285 = arith.constant -4.000000e+00 : f32
    %cst_286 = arith.constant 4.000000e+00 : f32
    %408 = vector.broadcast %cst_285 : f32 to vector<1x128xf32>
    %409 = arith.maximumf %408, %407 : vector<1x128xf32>
    %410 = vector.broadcast %cst_286 : f32 to vector<1x128xf32>
    %411 = arith.minimumf %410, %409 : vector<1x128xf32>
    %cst_287 = arith.constant 5.000000e-01 : f32
    %412 = vector.broadcast %cst_287 : f32 to vector<1x128xf32>
    %413 = arith.mulf %405, %412 : vector<1x128xf32>
    %cst_288 = arith.constant -5.000000e-01 : f32
    %cst_289 = arith.constant 5.000000e-01 : f32
    %414 = vector.broadcast %cst_288 : f32 to vector<1x128xf32>
    %415 = arith.maximumf %414, %413 : vector<1x128xf32>
    %416 = vector.broadcast %cst_289 : f32 to vector<1x128xf32>
    %417 = arith.minimumf %416, %415 : vector<1x128xf32>
    %cst_290 = arith.constant 3.000000e-02 : f32
    %418 = vector.broadcast %cst_290 : f32 to vector<1x128xf32>
    %419 = arith.mulf %411, %418 : vector<1x128xf32>
    %420 = arith.addf %346, %419 : vector<1x128xf32>
    %cst_291 = arith.constant -5.000000e+00 : f32
    %cst_292 = arith.constant 5.000000e+00 : f32
    %421 = vector.broadcast %cst_291 : f32 to vector<1x128xf32>
    %422 = arith.maximumf %421, %420 : vector<1x128xf32>
    %423 = vector.broadcast %cst_292 : f32 to vector<1x128xf32>
    %424 = arith.minimumf %423, %422 : vector<1x128xf32>
    %cst_293 = arith.constant 3.000000e-02 : f32
    %425 = vector.broadcast %cst_293 : f32 to vector<1x128xf32>
    %426 = arith.mulf %417, %425 : vector<1x128xf32>
    %427 = arith.addf %353, %426 : vector<1x128xf32>
    %cst_294 = arith.constant -5.000000e-01 : f32
    %cst_295 = arith.constant 5.000000e-01 : f32
    %428 = vector.broadcast %cst_294 : f32 to vector<1x128xf32>
    %429 = arith.maximumf %428, %427 : vector<1x128xf32>
    %430 = vector.broadcast %cst_295 : f32 to vector<1x128xf32>
    %431 = arith.minimumf %430, %429 : vector<1x128xf32>
    %cst_296 = arith.constant 3.000000e-02 : f32
    %432 = vector.broadcast %cst_296 : f32 to vector<1x128xf32>
    %433 = arith.mulf %424, %432 : vector<1x128xf32>
    %434 = arith.addf %360, %433 : vector<1x128xf32>
    %cst_297 = arith.constant 0.000000e+00 : f32
    %cst_298 = arith.constant 1.000000e+01 : f32
    %435 = vector.broadcast %cst_297 : f32 to vector<1x128xf32>
    %436 = arith.maximumf %435, %434 : vector<1x128xf32>
    %437 = vector.broadcast %cst_298 : f32 to vector<1x128xf32>
    %438 = arith.minimumf %437, %436 : vector<1x128xf32>
    %439 = math.sin %431 : vector<1x128xf32>
    %440 = math.cos %431 : vector<1x128xf32>
    %441 = arith.divf %439, %440 : vector<1x128xf32>
    %442 = arith.mulf %360, %441 : vector<1x128xf32>
    %cst_299 = arith.constant 4.000000e-01 : f32
    %443 = vector.broadcast %cst_299 : f32 to vector<1x128xf32>
    %444 = arith.mulf %442, %443 : vector<1x128xf32>
    %cst_300 = arith.constant -1.570000e+00 : f32
    %cst_301 = arith.constant 1.570000e+00 : f32
    %445 = vector.broadcast %cst_300 : f32 to vector<1x128xf32>
    %446 = arith.maximumf %445, %444 : vector<1x128xf32>
    %447 = vector.broadcast %cst_301 : f32 to vector<1x128xf32>
    %448 = arith.minimumf %447, %446 : vector<1x128xf32>
    %cst_302 = arith.constant 3.000000e-02 : f32
    %449 = vector.broadcast %cst_302 : f32 to vector<1x128xf32>
    %450 = arith.mulf %448, %449 : vector<1x128xf32>
    %451 = arith.addf %450, %373 : vector<1x128xf32>
    %452 = math.cos %451 : vector<1x128xf32>
    %453 = arith.mulf %438, %452 : vector<1x128xf32>
    %cst_303 = arith.constant 3.000000e-02 : f32
    %454 = vector.broadcast %cst_303 : f32 to vector<1x128xf32>
    %455 = arith.mulf %453, %454 : vector<1x128xf32>
    %456 = arith.addf %455, %378 : vector<1x128xf32>
    %457 = math.sin %451 : vector<1x128xf32>
    %458 = arith.mulf %438, %457 : vector<1x128xf32>
    %cst_304 = arith.constant 3.000000e-02 : f32
    %459 = vector.broadcast %cst_304 : f32 to vector<1x128xf32>
    %460 = arith.mulf %458, %459 : vector<1x128xf32>
    %461 = arith.addf %460, %383 : vector<1x128xf32>
    %c5_305 = arith.constant 5 : index
    %c0_306 = arith.constant 0 : index
    %c0_307 = arith.constant 0 : index
    %c0_308 = arith.constant 0 : index
    %462 = vector.load %arg3[%c5_305, %c0_306, %c0_307, %c0_308] : memref<8x6x1x128xf32, #tpu.memory_space<vmem>>, vector<1x1x1x128xf32>
    %463 = vector.shape_cast %462 : vector<1x1x1x128xf32> to vector<1x128xf32>
    %464 = vector.shape_cast %456 : vector<1x128xf32> to vector<1x1x1x128xf32>
    tpu.vector_store %arg3[%c5_305, %c0_306, %c0_307, %c0_308], %464 {strides = array<i32>} : memref<8x6x1x128xf32, #tpu.memory_space<vmem>>, vector<1x1x1x128xf32>,
    %c5_309 = arith.constant 5 : index
    %c1_310 = arith.constant 1 : index
    %c0_311 = arith.constant 0 : index
    %c0_312 = arith.constant 0 : index
    %465 = vector.load %arg3[%c5_309, %c1_310, %c0_311, %c0_312] : memref<8x6x1x128xf32, #tpu.memory_space<vmem>>, vector<1x1x1x128xf32>
    %466 = vector.shape_cast %465 : vector<1x1x1x128xf32> to vector<1x128xf32>
    %467 = vector.shape_cast %461 : vector<1x128xf32> to vector<1x1x1x128xf32>
    tpu.vector_store %arg3[%c5_309, %c1_310, %c0_311, %c0_312], %467 {strides = array<i32>} : memref<8x6x1x128xf32, #tpu.memory_space<vmem>>, vector<1x1x1x128xf32>,
    %c5_313 = arith.constant 5 : index
    %c2_314 = arith.constant 2 : index
    %c0_315 = arith.constant 0 : index
    %c0_316 = arith.constant 0 : index
    %468 = vector.load %arg3[%c5_313, %c2_314, %c0_315, %c0_316] : memref<8x6x1x128xf32, #tpu.memory_space<vmem>>, vector<1x1x1x128xf32>
    %469 = vector.shape_cast %468 : vector<1x1x1x128xf32> to vector<1x128xf32>
    %470 = vector.shape_cast %451 : vector<1x128xf32> to vector<1x1x1x128xf32>
    tpu.vector_store %arg3[%c5_313, %c2_314, %c0_315, %c0_316], %470 {strides = array<i32>} : memref<8x6x1x128xf32, #tpu.memory_space<vmem>>, vector<1x1x1x128xf32>,
    %c5_317 = arith.constant 5 : index
    %c3_318 = arith.constant 3 : index
    %c0_319 = arith.constant 0 : index
    %c0_320 = arith.constant 0 : index
    %471 = vector.load %arg3[%c5_317, %c3_318, %c0_319, %c0_320] : memref<8x6x1x128xf32, #tpu.memory_space<vmem>>, vector<1x1x1x128xf32>
    %472 = vector.shape_cast %471 : vector<1x1x1x128xf32> to vector<1x128xf32>
    %473 = vector.shape_cast %438 : vector<1x128xf32> to vector<1x1x1x128xf32>
    tpu.vector_store %arg3[%c5_317, %c3_318, %c0_319, %c0_320], %473 {strides = array<i32>} : memref<8x6x1x128xf32, #tpu.memory_space<vmem>>, vector<1x1x1x128xf32>,
    %c5_321 = arith.constant 5 : index
    %c4_322 = arith.constant 4 : index
    %c0_323 = arith.constant 0 : index
    %c0_324 = arith.constant 0 : index
    %474 = vector.load %arg3[%c5_321, %c4_322, %c0_323, %c0_324] : memref<8x6x1x128xf32, #tpu.memory_space<vmem>>, vector<1x1x1x128xf32>
    %475 = vector.shape_cast %474 : vector<1x1x1x128xf32> to vector<1x128xf32>
    %476 = vector.shape_cast %424 : vector<1x128xf32> to vector<1x1x1x128xf32>
    tpu.vector_store %arg3[%c5_321, %c4_322, %c0_323, %c0_324], %476 {strides = array<i32>} : memref<8x6x1x128xf32, #tpu.memory_space<vmem>>, vector<1x1x1x128xf32>,
    %c5_325 = arith.constant 5 : index
    %c5_326 = arith.constant 5 : index
    %c0_327 = arith.constant 0 : index
    %c0_328 = arith.constant 0 : index
    %477 = vector.load %arg3[%c5_325, %c5_326, %c0_327, %c0_328] : memref<8x6x1x128xf32, #tpu.memory_space<vmem>>, vector<1x1x1x128xf32>
    %478 = vector.shape_cast %477 : vector<1x1x1x128xf32> to vector<1x128xf32>
    %479 = vector.shape_cast %431 : vector<1x128xf32> to vector<1x1x1x128xf32>
    tpu.vector_store %arg3[%c5_325, %c5_326, %c0_327, %c0_328], %479 {strides = array<i32>} : memref<8x6x1x128xf32, #tpu.memory_space<vmem>>, vector<1x1x1x128xf32>,
    %c0_329 = arith.constant 0 : index
    %c6 = arith.constant 6 : index
    %c0_330 = arith.constant 0 : index
    %c0_331 = arith.constant 0 : index
    %480 = vector.load %arg1[%c0_329, %c6, %c0_330, %c0_331] : memref<2x8x1x128xf32, #tpu.memory_space<vmem>>, vector<1x1x1x128xf32>
    %481 = vector.shape_cast %480 : vector<1x1x1x128xf32> to vector<1x128xf32>
    %c1_332 = arith.constant 1 : index
    %c6_333 = arith.constant 6 : index
    %c0_334 = arith.constant 0 : index
    %c0_335 = arith.constant 0 : index
    %482 = vector.load %arg1[%c1_332, %c6_333, %c0_334, %c0_335] : memref<2x8x1x128xf32, #tpu.memory_space<vmem>>, vector<1x1x1x128xf32>
    %483 = vector.shape_cast %482 : vector<1x1x1x128xf32> to vector<1x128xf32>
    %cst_336 = arith.constant 4.000000e+00 : f32
    %484 = vector.broadcast %cst_336 : f32 to vector<1x128xf32>
    %485 = arith.mulf %481, %484 : vector<1x128xf32>
    %cst_337 = arith.constant -4.000000e+00 : f32
    %cst_338 = arith.constant 4.000000e+00 : f32
    %486 = vector.broadcast %cst_337 : f32 to vector<1x128xf32>
    %487 = arith.maximumf %486, %485 : vector<1x128xf32>
    %488 = vector.broadcast %cst_338 : f32 to vector<1x128xf32>
    %489 = arith.minimumf %488, %487 : vector<1x128xf32>
    %cst_339 = arith.constant 5.000000e-01 : f32
    %490 = vector.broadcast %cst_339 : f32 to vector<1x128xf32>
    %491 = arith.mulf %483, %490 : vector<1x128xf32>
    %cst_340 = arith.constant -5.000000e-01 : f32
    %cst_341 = arith.constant 5.000000e-01 : f32
    %492 = vector.broadcast %cst_340 : f32 to vector<1x128xf32>
    %493 = arith.maximumf %492, %491 : vector<1x128xf32>
    %494 = vector.broadcast %cst_341 : f32 to vector<1x128xf32>
    %495 = arith.minimumf %494, %493 : vector<1x128xf32>
    %cst_342 = arith.constant 3.000000e-02 : f32
    %496 = vector.broadcast %cst_342 : f32 to vector<1x128xf32>
    %497 = arith.mulf %489, %496 : vector<1x128xf32>
    %498 = arith.addf %424, %497 : vector<1x128xf32>
    %cst_343 = arith.constant -5.000000e+00 : f32
    %cst_344 = arith.constant 5.000000e+00 : f32
    %499 = vector.broadcast %cst_343 : f32 to vector<1x128xf32>
    %500 = arith.maximumf %499, %498 : vector<1x128xf32>
    %501 = vector.broadcast %cst_344 : f32 to vector<1x128xf32>
    %502 = arith.minimumf %501, %500 : vector<1x128xf32>
    %cst_345 = arith.constant 3.000000e-02 : f32
    %503 = vector.broadcast %cst_345 : f32 to vector<1x128xf32>
    %504 = arith.mulf %495, %503 : vector<1x128xf32>
    %505 = arith.addf %431, %504 : vector<1x128xf32>
    %cst_346 = arith.constant -5.000000e-01 : f32
    %cst_347 = arith.constant 5.000000e-01 : f32
    %506 = vector.broadcast %cst_346 : f32 to vector<1x128xf32>
    %507 = arith.maximumf %506, %505 : vector<1x128xf32>
    %508 = vector.broadcast %cst_347 : f32 to vector<1x128xf32>
    %509 = arith.minimumf %508, %507 : vector<1x128xf32>
    %cst_348 = arith.constant 3.000000e-02 : f32
    %510 = vector.broadcast %cst_348 : f32 to vector<1x128xf32>
    %511 = arith.mulf %502, %510 : vector<1x128xf32>
    %512 = arith.addf %438, %511 : vector<1x128xf32>
    %cst_349 = arith.constant 0.000000e+00 : f32
    %cst_350 = arith.constant 1.000000e+01 : f32
    %513 = vector.broadcast %cst_349 : f32 to vector<1x128xf32>
    %514 = arith.maximumf %513, %512 : vector<1x128xf32>
    %515 = vector.broadcast %cst_350 : f32 to vector<1x128xf32>
    %516 = arith.minimumf %515, %514 : vector<1x128xf32>
    %517 = math.sin %509 : vector<1x128xf32>
    %518 = math.cos %509 : vector<1x128xf32>
    %519 = arith.divf %517, %518 : vector<1x128xf32>
    %520 = arith.mulf %438, %519 : vector<1x128xf32>
    %cst_351 = arith.constant 4.000000e-01 : f32
    %521 = vector.broadcast %cst_351 : f32 to vector<1x128xf32>
    %522 = arith.mulf %520, %521 : vector<1x128xf32>
    %cst_352 = arith.constant -1.570000e+00 : f32
    %cst_353 = arith.constant 1.570000e+00 : f32
    %523 = vector.broadcast %cst_352 : f32 to vector<1x128xf32>
    %524 = arith.maximumf %523, %522 : vector<1x128xf32>
    %525 = vector.broadcast %cst_353 : f32 to vector<1x128xf32>
    %526 = arith.minimumf %525, %524 : vector<1x128xf32>
    %cst_354 = arith.constant 3.000000e-02 : f32
    %527 = vector.broadcast %cst_354 : f32 to vector<1x128xf32>
    %528 = arith.mulf %526, %527 : vector<1x128xf32>
    %529 = arith.addf %528, %451 : vector<1x128xf32>
    %530 = math.cos %529 : vector<1x128xf32>
    %531 = arith.mulf %516, %530 : vector<1x128xf32>
    %cst_355 = arith.constant 3.000000e-02 : f32
    %532 = vector.broadcast %cst_355 : f32 to vector<1x128xf32>
    %533 = arith.mulf %531, %532 : vector<1x128xf32>
    %534 = arith.addf %533, %456 : vector<1x128xf32>
    %535 = math.sin %529 : vector<1x128xf32>
    %536 = arith.mulf %516, %535 : vector<1x128xf32>
    %cst_356 = arith.constant 3.000000e-02 : f32
    %537 = vector.broadcast %cst_356 : f32 to vector<1x128xf32>
    %538 = arith.mulf %536, %537 : vector<1x128xf32>
    %539 = arith.addf %538, %461 : vector<1x128xf32>
    %c6_357 = arith.constant 6 : index
    %c0_358 = arith.constant 0 : index
    %c0_359 = arith.constant 0 : index
    %c0_360 = arith.constant 0 : index
    %540 = vector.load %arg3[%c6_357, %c0_358, %c0_359, %c0_360] : memref<8x6x1x128xf32, #tpu.memory_space<vmem>>, vector<1x1x1x128xf32>
    %541 = vector.shape_cast %540 : vector<1x1x1x128xf32> to vector<1x128xf32>
    %542 = vector.shape_cast %534 : vector<1x128xf32> to vector<1x1x1x128xf32>
    tpu.vector_store %arg3[%c6_357, %c0_358, %c0_359, %c0_360], %542 {strides = array<i32>} : memref<8x6x1x128xf32, #tpu.memory_space<vmem>>, vector<1x1x1x128xf32>,
    %c6_361 = arith.constant 6 : index
    %c1_362 = arith.constant 1 : index
    %c0_363 = arith.constant 0 : index
    %c0_364 = arith.constant 0 : index
    %543 = vector.load %arg3[%c6_361, %c1_362, %c0_363, %c0_364] : memref<8x6x1x128xf32, #tpu.memory_space<vmem>>, vector<1x1x1x128xf32>
    %544 = vector.shape_cast %543 : vector<1x1x1x128xf32> to vector<1x128xf32>
    %545 = vector.shape_cast %539 : vector<1x128xf32> to vector<1x1x1x128xf32>
    tpu.vector_store %arg3[%c6_361, %c1_362, %c0_363, %c0_364], %545 {strides = array<i32>} : memref<8x6x1x128xf32, #tpu.memory_space<vmem>>, vector<1x1x1x128xf32>,
    %c6_365 = arith.constant 6 : index
    %c2_366 = arith.constant 2 : index
    %c0_367 = arith.constant 0 : index
    %c0_368 = arith.constant 0 : index
    %546 = vector.load %arg3[%c6_365, %c2_366, %c0_367, %c0_368] : memref<8x6x1x128xf32, #tpu.memory_space<vmem>>, vector<1x1x1x128xf32>
    %547 = vector.shape_cast %546 : vector<1x1x1x128xf32> to vector<1x128xf32>
    %548 = vector.shape_cast %529 : vector<1x128xf32> to vector<1x1x1x128xf32>
    tpu.vector_store %arg3[%c6_365, %c2_366, %c0_367, %c0_368], %548 {strides = array<i32>} : memref<8x6x1x128xf32, #tpu.memory_space<vmem>>, vector<1x1x1x128xf32>,
    %c6_369 = arith.constant 6 : index
    %c3_370 = arith.constant 3 : index
    %c0_371 = arith.constant 0 : index
    %c0_372 = arith.constant 0 : index
    %549 = vector.load %arg3[%c6_369, %c3_370, %c0_371, %c0_372] : memref<8x6x1x128xf32, #tpu.memory_space<vmem>>, vector<1x1x1x128xf32>
    %550 = vector.shape_cast %549 : vector<1x1x1x128xf32> to vector<1x128xf32>
    %551 = vector.shape_cast %516 : vector<1x128xf32> to vector<1x1x1x128xf32>
    tpu.vector_store %arg3[%c6_369, %c3_370, %c0_371, %c0_372], %551 {strides = array<i32>} : memref<8x6x1x128xf32, #tpu.memory_space<vmem>>, vector<1x1x1x128xf32>,
    %c6_373 = arith.constant 6 : index
    %c4_374 = arith.constant 4 : index
    %c0_375 = arith.constant 0 : index
    %c0_376 = arith.constant 0 : index
    %552 = vector.load %arg3[%c6_373, %c4_374, %c0_375, %c0_376] : memref<8x6x1x128xf32, #tpu.memory_space<vmem>>, vector<1x1x1x128xf32>
    %553 = vector.shape_cast %552 : vector<1x1x1x128xf32> to vector<1x128xf32>
    %554 = vector.shape_cast %502 : vector<1x128xf32> to vector<1x1x1x128xf32>
    tpu.vector_store %arg3[%c6_373, %c4_374, %c0_375, %c0_376], %554 {strides = array<i32>} : memref<8x6x1x128xf32, #tpu.memory_space<vmem>>, vector<1x1x1x128xf32>,
    %c6_377 = arith.constant 6 : index
    %c5_378 = arith.constant 5 : index
    %c0_379 = arith.constant 0 : index
    %c0_380 = arith.constant 0 : index
    %555 = vector.load %arg3[%c6_377, %c5_378, %c0_379, %c0_380] : memref<8x6x1x128xf32, #tpu.memory_space<vmem>>, vector<1x1x1x128xf32>
    %556 = vector.shape_cast %555 : vector<1x1x1x128xf32> to vector<1x128xf32>
    %557 = vector.shape_cast %509 : vector<1x128xf32> to vector<1x1x1x128xf32>
    tpu.vector_store %arg3[%c6_377, %c5_378, %c0_379, %c0_380], %557 {strides = array<i32>} : memref<8x6x1x128xf32, #tpu.memory_space<vmem>>, vector<1x1x1x128xf32>,
    %c0_381 = arith.constant 0 : index
    %c7 = arith.constant 7 : index
    %c0_382 = arith.constant 0 : index
    %c0_383 = arith.constant 0 : index
    %558 = vector.load %arg1[%c0_381, %c7, %c0_382, %c0_383] : memref<2x8x1x128xf32, #tpu.memory_space<vmem>>, vector<1x1x1x128xf32>
    %559 = vector.shape_cast %558 : vector<1x1x1x128xf32> to vector<1x128xf32>
    %c1_384 = arith.constant 1 : index
    %c7_385 = arith.constant 7 : index
    %c0_386 = arith.constant 0 : index
    %c0_387 = arith.constant 0 : index
    %560 = vector.load %arg1[%c1_384, %c7_385, %c0_386, %c0_387] : memref<2x8x1x128xf32, #tpu.memory_space<vmem>>, vector<1x1x1x128xf32>
    %561 = vector.shape_cast %560 : vector<1x1x1x128xf32> to vector<1x128xf32>
    %cst_388 = arith.constant 4.000000e+00 : f32
    %562 = vector.broadcast %cst_388 : f32 to vector<1x128xf32>
    %563 = arith.mulf %559, %562 : vector<1x128xf32>
    %cst_389 = arith.constant -4.000000e+00 : f32
    %cst_390 = arith.constant 4.000000e+00 : f32
    %564 = vector.broadcast %cst_389 : f32 to vector<1x128xf32>
    %565 = arith.maximumf %564, %563 : vector<1x128xf32>
    %566 = vector.broadcast %cst_390 : f32 to vector<1x128xf32>
    %567 = arith.minimumf %566, %565 : vector<1x128xf32>
    %cst_391 = arith.constant 5.000000e-01 : f32
    %568 = vector.broadcast %cst_391 : f32 to vector<1x128xf32>
    %569 = arith.mulf %561, %568 : vector<1x128xf32>
    %cst_392 = arith.constant -5.000000e-01 : f32
    %cst_393 = arith.constant 5.000000e-01 : f32
    %570 = vector.broadcast %cst_392 : f32 to vector<1x128xf32>
    %571 = arith.maximumf %570, %569 : vector<1x128xf32>
    %572 = vector.broadcast %cst_393 : f32 to vector<1x128xf32>
    %573 = arith.minimumf %572, %571 : vector<1x128xf32>
    %cst_394 = arith.constant 3.000000e-02 : f32
    %574 = vector.broadcast %cst_394 : f32 to vector<1x128xf32>
    %575 = arith.mulf %567, %574 : vector<1x128xf32>
    %576 = arith.addf %502, %575 : vector<1x128xf32>
    %cst_395 = arith.constant -5.000000e+00 : f32
    %cst_396 = arith.constant 5.000000e+00 : f32
    %577 = vector.broadcast %cst_395 : f32 to vector<1x128xf32>
    %578 = arith.maximumf %577, %576 : vector<1x128xf32>
    %579 = vector.broadcast %cst_396 : f32 to vector<1x128xf32>
    %580 = arith.minimumf %579, %578 : vector<1x128xf32>
    %cst_397 = arith.constant 3.000000e-02 : f32
    %581 = vector.broadcast %cst_397 : f32 to vector<1x128xf32>
    %582 = arith.mulf %573, %581 : vector<1x128xf32>
    %583 = arith.addf %509, %582 : vector<1x128xf32>
    %cst_398 = arith.constant -5.000000e-01 : f32
    %cst_399 = arith.constant 5.000000e-01 : f32
    %584 = vector.broadcast %cst_398 : f32 to vector<1x128xf32>
    %585 = arith.maximumf %584, %583 : vector<1x128xf32>
    %586 = vector.broadcast %cst_399 : f32 to vector<1x128xf32>
    %587 = arith.minimumf %586, %585 : vector<1x128xf32>
    %cst_400 = arith.constant 3.000000e-02 : f32
    %588 = vector.broadcast %cst_400 : f32 to vector<1x128xf32>
    %589 = arith.mulf %580, %588 : vector<1x128xf32>
    %590 = arith.addf %516, %589 : vector<1x128xf32>
    %cst_401 = arith.constant 0.000000e+00 : f32
    %cst_402 = arith.constant 1.000000e+01 : f32
    %591 = vector.broadcast %cst_401 : f32 to vector<1x128xf32>
    %592 = arith.maximumf %591, %590 : vector<1x128xf32>
    %593 = vector.broadcast %cst_402 : f32 to vector<1x128xf32>
    %594 = arith.minimumf %593, %592 : vector<1x128xf32>
    %595 = math.sin %587 : vector<1x128xf32>
    %596 = math.cos %587 : vector<1x128xf32>
    %597 = arith.divf %595, %596 : vector<1x128xf32>
    %598 = arith.mulf %516, %597 : vector<1x128xf32>
    %cst_403 = arith.constant 4.000000e-01 : f32
    %599 = vector.broadcast %cst_403 : f32 to vector<1x128xf32>
    %600 = arith.mulf %598, %599 : vector<1x128xf32>
    %cst_404 = arith.constant -1.570000e+00 : f32
    %cst_405 = arith.constant 1.570000e+00 : f32
    %601 = vector.broadcast %cst_404 : f32 to vector<1x128xf32>
    %602 = arith.maximumf %601, %600 : vector<1x128xf32>
    %603 = vector.broadcast %cst_405 : f32 to vector<1x128xf32>
    %604 = arith.minimumf %603, %602 : vector<1x128xf32>
    %cst_406 = arith.constant 3.000000e-02 : f32
    %605 = vector.broadcast %cst_406 : f32 to vector<1x128xf32>
    %606 = arith.mulf %604, %605 : vector<1x128xf32>
    %607 = arith.addf %606, %529 : vector<1x128xf32>
    %608 = math.cos %607 : vector<1x128xf32>
    %609 = arith.mulf %594, %608 : vector<1x128xf32>
    %cst_407 = arith.constant 3.000000e-02 : f32
    %610 = vector.broadcast %cst_407 : f32 to vector<1x128xf32>
    %611 = arith.mulf %609, %610 : vector<1x128xf32>
    %612 = arith.addf %611, %534 : vector<1x128xf32>
    %613 = math.sin %607 : vector<1x128xf32>
    %614 = arith.mulf %594, %613 : vector<1x128xf32>
    %cst_408 = arith.constant 3.000000e-02 : f32
    %615 = vector.broadcast %cst_408 : f32 to vector<1x128xf32>
    %616 = arith.mulf %614, %615 : vector<1x128xf32>
    %617 = arith.addf %616, %539 : vector<1x128xf32>
    %c7_409 = arith.constant 7 : index
    %c0_410 = arith.constant 0 : index
    %c0_411 = arith.constant 0 : index
    %c0_412 = arith.constant 0 : index
    %618 = vector.load %arg3[%c7_409, %c0_410, %c0_411, %c0_412] : memref<8x6x1x128xf32, #tpu.memory_space<vmem>>, vector<1x1x1x128xf32>
    %619 = vector.shape_cast %618 : vector<1x1x1x128xf32> to vector<1x128xf32>
    %620 = vector.shape_cast %612 : vector<1x128xf32> to vector<1x1x1x128xf32>
    tpu.vector_store %arg3[%c7_409, %c0_410, %c0_411, %c0_412], %620 {strides = array<i32>} : memref<8x6x1x128xf32, #tpu.memory_space<vmem>>, vector<1x1x1x128xf32>,
    %c7_413 = arith.constant 7 : index
    %c1_414 = arith.constant 1 : index
    %c0_415 = arith.constant 0 : index
    %c0_416 = arith.constant 0 : index
    %621 = vector.load %arg3[%c7_413, %c1_414, %c0_415, %c0_416] : memref<8x6x1x128xf32, #tpu.memory_space<vmem>>, vector<1x1x1x128xf32>
    %622 = vector.shape_cast %621 : vector<1x1x1x128xf32> to vector<1x128xf32>
    %623 = vector.shape_cast %617 : vector<1x128xf32> to vector<1x1x1x128xf32>
    tpu.vector_store %arg3[%c7_413, %c1_414, %c0_415, %c0_416], %623 {strides = array<i32>} : memref<8x6x1x128xf32, #tpu.memory_space<vmem>>, vector<1x1x1x128xf32>,
    %c7_417 = arith.constant 7 : index
    %c2_418 = arith.constant 2 : index
    %c0_419 = arith.constant 0 : index
    %c0_420 = arith.constant 0 : index
    %624 = vector.load %arg3[%c7_417, %c2_418, %c0_419, %c0_420] : memref<8x6x1x128xf32, #tpu.memory_space<vmem>>, vector<1x1x1x128xf32>
    %625 = vector.shape_cast %624 : vector<1x1x1x128xf32> to vector<1x128xf32>
    %626 = vector.shape_cast %607 : vector<1x128xf32> to vector<1x1x1x128xf32>
    tpu.vector_store %arg3[%c7_417, %c2_418, %c0_419, %c0_420], %626 {strides = array<i32>} : memref<8x6x1x128xf32, #tpu.memory_space<vmem>>, vector<1x1x1x128xf32>,
    %c7_421 = arith.constant 7 : index
    %c3_422 = arith.constant 3 : index
    %c0_423 = arith.constant 0 : index
    %c0_424 = arith.constant 0 : index
    %627 = vector.load %arg3[%c7_421, %c3_422, %c0_423, %c0_424] : memref<8x6x1x128xf32, #tpu.memory_space<vmem>>, vector<1x1x1x128xf32>
    %628 = vector.shape_cast %627 : vector<1x1x1x128xf32> to vector<1x128xf32>
    %629 = vector.shape_cast %594 : vector<1x128xf32> to vector<1x1x1x128xf32>
    tpu.vector_store %arg3[%c7_421, %c3_422, %c0_423, %c0_424], %629 {strides = array<i32>} : memref<8x6x1x128xf32, #tpu.memory_space<vmem>>, vector<1x1x1x128xf32>,
    %c7_425 = arith.constant 7 : index
    %c4_426 = arith.constant 4 : index
    %c0_427 = arith.constant 0 : index
    %c0_428 = arith.constant 0 : index
    %630 = vector.load %arg3[%c7_425, %c4_426, %c0_427, %c0_428] : memref<8x6x1x128xf32, #tpu.memory_space<vmem>>, vector<1x1x1x128xf32>
    %631 = vector.shape_cast %630 : vector<1x1x1x128xf32> to vector<1x128xf32>
    %632 = vector.shape_cast %580 : vector<1x128xf32> to vector<1x1x1x128xf32>
    tpu.vector_store %arg3[%c7_425, %c4_426, %c0_427, %c0_428], %632 {strides = array<i32>} : memref<8x6x1x128xf32, #tpu.memory_space<vmem>>, vector<1x1x1x128xf32>,
    %c7_429 = arith.constant 7 : index
    %c5_430 = arith.constant 5 : index
    %c0_431 = arith.constant 0 : index
    %c0_432 = arith.constant 0 : index
    %633 = vector.load %arg3[%c7_429, %c5_430, %c0_431, %c0_432] : memref<8x6x1x128xf32, #tpu.memory_space<vmem>>, vector<1x1x1x128xf32>
    %634 = vector.shape_cast %633 : vector<1x1x1x128xf32> to vector<1x128xf32>
    %635 = vector.shape_cast %587 : vector<1x128xf32> to vector<1x1x1x128xf32>
    tpu.vector_store %arg3[%c7_429, %c5_430, %c0_431, %c0_432], %635 {strides = array<i32>} : memref<8x6x1x128xf32, #tpu.memory_space<vmem>>, vector<1x1x1x128xf32>,
    return
  }
  func.func @transform_0(%arg0: i32) -> (i32, i32, i32, i32) {
    %c0_i32 = arith.constant 0 : i32
    %c0_i32_0 = arith.constant 0 : i32
    %c0_i32_1 = arith.constant 0 : i32
    %c0_i32_2 = arith.constant 0 : i32
    return %c0_i32, %c0_i32_0, %arg0, %c0_i32_1 : i32, i32, i32, i32
  }
  func.func @transform_1(%arg0: i32) -> (i32, i32, i32) {
    %c0_i32 = arith.constant 0 : i32
    %c0_i32_0 = arith.constant 0 : i32
    %c0_i32_1 = arith.constant 0 : i32
    return %c0_i32, %arg0, %c0_i32_0 : i32, i32, i32
  }
  func.func @transform_2(%arg0: i32) -> (i32, i32, i32, i32) {
    %c0_i32 = arith.constant 0 : i32
    %c0_i32_0 = arith.constant 0 : i32
    %c0_i32_1 = arith.constant 0 : i32
    %c0_i32_2 = arith.constant 0 : i32
    return %c0_i32, %c0_i32_0, %arg0, %c0_i32_1 : i32, i32, i32, i32
  }
}

</mosaic_0001>

<llo_original>
// kernel: tpu_custom_call.1
$region0: #{tpu_custom_call.1}
  #allocation0 [shape = 'u32[]', space=smem, size = 0x4, offset = 0x4, fixed_abs, tag = 'smem constant byte address 0x4 - core index']
  #allocation1 [shape = 'u32[144,128]{1,0:T(1,128)}', space=vmem, size = 0x12000, scoped, tag = 'internal scratch']
  %s0 = inlined_call_operand.hbm [shape: f32[2,8,1,128], index: 0, kind: input, shape index: {}]
  %s1 = inlined_call_operand.hbm [shape: f32[6,1,128], index: 1, kind: input, shape index: {}]
  %s2 = inlined_call_operand.hbm [shape: f32[8,6,1,128], index: 2, kind: output, shape index: {}]
  %s3 = sld [smem:[#allocation0]]
  $region26: #{tpu_custom_call.1} parent=0
    _
  %s5 = ssub.s32 1, %s3
  %s6 = scalar_select 0, %s5, %s3
  $region1: #{tpu_custom_call.1} parent=0
    #allocation2 [shape = 'u8[8192]{0}', space=vmem, size = 0x2000, scoped, tag = 'input window, operand 0, single buffered']
    #allocation3 [shape = 's32[1]{0}', space=sflag, size = 0x4, scoped, tag = 'scoped memory for tpu_custom_call.1']
    #allocation4 [shape = 's32[1]{0}', space=sflag, size = 0x4, scoped, tag = 'scoped memory for tpu_custom_call.1']
    #allocation5 [shape = 'u8[3072]{0}', space=vmem, size = 0xc00, scoped, tag = 'input window, operand 1, single buffered']
    #allocation6 [shape = 's32[1]{0}', space=sflag, size = 0x4, scoped, tag = 'scoped memory for tpu_custom_call.1']
    #allocation7 [shape = 'u8[24576]{0}', space=vmem, size = 0x6000, scoped, tag = 'output window, operand 0, single buffered']
    %7 = vsyncpa [#allocation3], 0
    %8 = vsyncpa [#allocation6], 0
    %9 = vsyncpa [#allocation4], 0
    // Predicated region
    $region2: #{tpu_custom_call.1} parent=1 // pred_check
      _
    $region3: #{tpu_custom_call.1} parent=1 // pred_check_branch
      %11 = sbr.rel (0) target = $region5
    $region4: #{tpu_custom_call.1} parent=1 // pred_region
      %s13 = ssub.s32 256, 256
      %14 = vsyncadd [#allocation3], %s13
      %s15 = sshll.u32 [#allocation2], 4
      %s16 = int_to_ptr.vmem [resolvable:$true] %s15
      %21 = dma.hbm_to_vmem [thread:$0]  %s0, 256, %s16, [#allocation3], 16, 16, 1
    $region5: #{tpu_custom_call.1} parent=1 // pred_fallthru
      _
    // Predicated region
    $region6: #{tpu_custom_call.1} parent=1 // pred_check
      _
    $region7: #{tpu_custom_call.1} parent=1 // pred_check_branch
      %23 = sbr.rel (0) target = $region9
    $region8: #{tpu_custom_call.1} parent=1 // pred_region
      %s25 = ssub.s32 96, 96
      %26 = vsyncadd [#allocation6], %s25
      %s27 = sshll.u32 [#allocation5], 4
      %s28 = int_to_ptr.vmem [resolvable:$true] %s27
      %33 = dma.hbm_to_vmem [thread:$0]  %s1, 96, %s28, [#allocation6], 16, 16, 1
    $region9: #{tpu_custom_call.1} parent=1 // pred_fallthru
      _
    // Predicated region
    $region10: #{tpu_custom_call.1} parent=1 // pred_check
      _
    $region11: #{tpu_custom_call.1} parent=1 // pred_check_branch
      %35 = sbr.rel (0) target = $region13
    $region12: #{tpu_custom_call.1} parent=1 // pred_region
      %36 = dma.done [#allocation3], 256
    $region13: #{tpu_custom_call.1} parent=1 // pred_fallthru
      _
    // Predicated region
    $region14: #{tpu_custom_call.1} parent=1 // pred_check
      _
    $region15: #{tpu_custom_call.1} parent=1 // pred_check_branch
      %38 = sbr.rel (0) target = $region17
    $region16: #{tpu_custom_call.1} parent=1 // pred_region
      %39 = dma.done [#allocation6], 96
    $region17: #{tpu_custom_call.1} parent=1 // pred_fallthru
      _
    %v40 = vld [vmem:[#allocation5] sm:$0x1]
    %s41 = scalar_lea.vmem [#allocation5], 1
    %v42 = vld [vmem:[%s41] sm:$0x1]
    %s43 = scalar_lea.vmem [#allocation5], 2
    %v44 = vld [vmem:[%s43] sm:$0x1]
    %s45 = scalar_lea.vmem [#allocation5], 3
    %v46 = vld [vmem:[%s45] sm:$0x1]
    %s47 = scalar_lea.vmem [#allocation5], 4
    %v48 = vld [vmem:[%s47] sm:$0x1]
    %s49 = scalar_lea.vmem [#allocation5], 5
    %v50 = vld [vmem:[%s49] sm:$0x1]
    %v51 = vld [vmem:[#allocation2] sm:$0x1]
    %s52 = scalar_lea.vmem [#allocation2], 8
    %v53 = vld [vmem:[%s52] sm:$0x1]
    %v54 = vmul.f32 %v51, 4.0
    %v55 = vmax.f32 %v54, -4.0
    %v56 = vmin.f32 %v55, 4.0
    %v57 = vmul.f32 %v53, 0.5
    %v58 = vmax.f32 %v57, -0.5
    %v59 = vmin.f32 %v58, 0.5
    %v60 = vmul.f32 %v56, 0.03
    %v61 = vadd.f32 %v48, %v60
    %v62 = vmax.f32 %v61, -5.0
    %v63 = vmin.f32 %v62, 5.0
    %v64 = vmul.f32 %v59, 0.03
    %v65 = vadd.f32 %v50, %v64
    %v66 = vmax.f32 %v65, -0.5
    %v67 = vmin.f32 %v66, 0.5
    %v68 = vmul.f32 %v63, 0.03
    %v69 = vadd.f32 %v46, %v68
    %v70 = vmax.f32 %v69, 0.0
    %v71 = vmin.f32 %v70, 10.0
    %v72 = vand.u32 2147483647, %v67
    %vm73 = vcmp.le.f32.partialorder %v72, 0.7853982
    %vm74 = vcmp.lt.s32.totalorder %v67, 0
    %v75 = vand.u32 %v67, 2139095040
    %v76 = vshrl.u32 %v75, 23
    %v77 = vsub.s32 %v76, 127
    %v78 = vand.u32 2147483647, %v67
    %v79 = vand.u32 %v78, 8388607
    %v80 = vor.u32 %v79, 8388608
    %v81 = vsub.s32 0, %v80
    %v82 = vadd.s32 %v77, 1
    %vm83 = vcmp.gt.s32.totalorder %v82, 0
    %v84 = vsel %vm83, %v82, 0
    %v85 = vshrl.u32 %v84, 5
    %v86 = vand.u32 %v84, 31
    %v87 = vsub.s32 32, %v86
    %v88 = vshrl.u32 683565275, %v87
    %v89 = vshll.u32 683565275, %v86
    %v90 = vshrl.u32 2475754826, %v87
    %v91 = vor.u32 %v89, %v90
    %v92 = vshll.u32 2475754826, %v86
    %v93 = vshrl.u32 2131351028, %v87
    %v94 = vor.u32 %v92, %v93
    %v95 = vshll.u32 2131351028, %v86
    %v96 = vshrl.u32 2102212464, %v87
    %v97 = vor.u32 %v95, %v96
    %v98 = vshll.u32 2102212464, %v86
    %v99 = vshrl.u32 920167782, %v87
    %v100 = vor.u32 %v98, %v99
    %v101 = vshll.u32 920167782, %v86
    %v102 = vshrl.u32 1326507024, %v87
    %v103 = vor.u32 %v101, %v102
    %vm104 = vcmp.lt.s32.totalorder %v85, 1
    %vm105 = vcmp.lt.s32.totalorder %v85, 2
    %vm106 = vcmp.lt.s32.totalorder %v85, 3
    %vm107 = vcmp.lt.s32.totalorder %v85, 4
    %v108 = vsel %vm104, %v88, %v91
    %v109 = vsel %vm107, %v97, 2102212464
    %v110 = vsel %vm106, %v94, %v109
    %v111 = vsel %vm105, %v108, %v110
    %v112 = vsel %vm104, %v91, %v94
    %v113 = vsel %vm107, %v100, 920167782
    %v114 = vsel %vm106, %v97, %v113
    %v115 = vsel %vm105, %v112, %v114
    %v116 = vsel %vm104, %v94, %v97
    %v117 = vsel %vm107, %v103, 1326507024
    %v118 = vsel %vm106, %v100, %v117
    %v119 = vsel %vm105, %v116, %v118
    %v120 = vshll.u32 %v80, 8
    %v121 = vmul.u32.u64.compose %v120, %v119
    %v122 = vextract.low.u32 %v121
    %v123 = vextract.high.u32 %v121
    %v124 = vmul.u32.u64.compose %v120, %v115
    %v125 = vextract.low.u32 %v124
    %v126 = vextract.high.u32 %v124
    %v127 = vmul.u32 %v120, %v111
    %v128 = vadd.s32 %v123, %v125
    %vm129 = vc.u32 %v123, %v125
    %v130 = vadd.s32 %v126, 1
    %v131 = vsel %vm129, %v130, %v126
    %v132 = vadd.s32 %v127, %v131
    %v133 = vadd.s32 %v132, 536870912
    %v134 = vshrl.u32 %v133, 30
    %v135 = vshll.u32 %v134, 30
    %v136 = vsub.s32 %v132, %v135
    %vm137 = vcmp.lt.s32.totalorder %v136, 0
    %v138 = vsub.s32 0, %v136
    %v139 = vsel %vm137, %v138, %v136
    %v140 = vclz %v139
    %v141 = vsub.s32 %v140, 2
    %vm142 = vcmp.gt.s32.totalorder 0, %v141
    %v143 = vsel %vm142, 0, %v141
    %v144 = vsub.s32 32, %v143
    %v145 = vshll.u32 %v136, %v143
    %v146 = vshrl.u32 %v128, %v144
    %v147 = vor.u32 %v145, %v146
    %v148 = vsub.s32 4294967266, %v143
    %v149 = vadd.s32 %v148, 127
    %v150 = vshll.u32 %v149, 23
    %v151 = vor.u32 4788187, %v150
    %v152 = vand.u32 2147483647, %v151
    %v154 = vcvt.s32.f32 %v147
    %v155 = vmul.f32 %v154, %v152
    %v156 = vxor.u32 %v155, 2147483648
    %v157 = vsel %vm74, %v156, %v155
    %v158 = vsub.s32 4, %v134
    %v159 = vsel %vm74, %v158, %v134
    %v160 = vsel %vm73, %v67, %v157
    %v161 = vsel %vm73, 0, %v159
    %v162 = vcosq.f32.pop %v160
    %v163 = vsinq.f32.pop %v160
    %vm164 = vweird.f32 %v67
    %v165 = vadd.s32 %v161, 3
    %v166 = vand.u32 %v165, 3
    %vm167 = vcmp.lt.s32.totalorder %v166, 2
    %vm168 = vcmp.eq.s32.totalorder %v166, 0
    %v169 = vxor.u32 %v163, 2147483648
    %v170 = vsel %vm168, %v162, %v169
    %vm171 = vcmp.eq.s32.totalorder %v166, 2
    %v172 = vxor.u32 %v162, 2147483648
    %v173 = vsel %vm171, %v172, %v163
    %v174 = vsel %vm167, %v170, %v173
    %v175 = vsel %vm164, nan, %v174
    %v176 = vand.u32 2147483647, %v67
    %vm177 = vcmp.le.f32.partialorder %v176, 0.7853982
    %vm178 = vcmp.lt.s32.totalorder %v67, 0
    %v179 = vand.u32 %v67, 2139095040
    %v180 = vshrl.u32 %v179, 23
    %v181 = vsub.s32 %v180, 127
    %v182 = vand.u32 2147483647, %v67
    %v183 = vand.u32 %v182, 8388607
    %v184 = vor.u32 %v183, 8388608
    %v185 = vsub.s32 0, %v184
    %v186 = vadd.s32 %v181, 1
    %vm187 = vcmp.gt.s32.totalorder %v186, 0
    %v188 = vsel %vm187, %v186, 0
    %v189 = vshrl.u32 %v188, 5
    %v190 = vand.u32 %v188, 31
    %v191 = vsub.s32 32, %v190
    %v192 = vshrl.u32 683565275, %v191
    %v193 = vshll.u32 683565275, %v190
    %v194 = vshrl.u32 2475754826, %v191
    %v195 = vor.u32 %v193, %v194
    %v196 = vshll.u32 2475754826, %v190
    %v197 = vshrl.u32 2131351028, %v191
    %v198 = vor.u32 %v196, %v197
    %v199 = vshll.u32 2131351028, %v190
    %v200 = vshrl.u32 2102212464, %v191
    %v201 = vor.u32 %v199, %v200
    %v202 = vshll.u32 2102212464, %v190
    %v203 = vshrl.u32 920167782, %v191
    %v204 = vor.u32 %v202, %v203
    %v205 = vshll.u32 920167782, %v190
    %v206 = vshrl.u32 1326507024, %v191
    %v207 = vor.u32 %v205, %v206
    %vm208 = vcmp.lt.s32.totalorder %v189, 1
    %vm209 = vcmp.lt.s32.totalorder %v189, 2
    %vm210 = vcmp.lt.s32.totalorder %v189, 3
    %vm211 = vcmp.lt.s32.totalorder %v189, 4
    %v212 = vsel %vm208, %v192, %v195
    %v213 = vsel %vm211, %v201, 2102212464
    %v214 = vsel %vm210, %v198, %v213
    %v215 = vsel %vm209, %v212, %v214
    %v216 = vsel %vm208, %v195, %v198
    %v217 = vsel %vm211, %v204, 920167782
    %v218 = vsel %vm210, %v201, %v217
    %v219 = vsel %vm209, %v216, %v218
    %v220 = vsel %vm208, %v198, %v201
    %v221 = vsel %vm211, %v207, 1326507024
    %v222 = vsel %vm210, %v204, %v221
    %v223 = vsel %vm209, %v220, %v222
    %v224 = vshll.u32 %v184, 8
    %v225 = vmul.u32.u64.compose %v224, %v223
    %v226 = vextract.low.u32 %v225
    %v227 = vextract.high.u32 %v225
    %v228 = vmul.u32.u64.compose %v224, %v219
    %v229 = vextract.low.u32 %v228
    %v230 = vextract.high.u32 %v228
    %v231 = vmul.u32 %v224, %v215
    %v232 = vadd.s32 %v227, %v229
    %vm233 = vc.u32 %v227, %v229
    %v234 = vadd.s32 %v230, 1
    %v235 = vsel %vm233, %v234, %v230
    %v236 = vadd.s32 %v231, %v235
    %v237 = vadd.s32 %v236, 536870912
    %v238 = vshrl.u32 %v237, 30
    %v239 = vshll.u32 %v238, 30
    %v240 = vsub.s32 %v236, %v239
    %vm241 = vcmp.lt.s32.totalorder %v240, 0
    %v242 = vsub.s32 0, %v240
    %v243 = vsel %vm241, %v242, %v240
    %v244 = vclz %v243
    %v245 = vsub.s32 %v244, 2
    %vm246 = vcmp.gt.s32.totalorder 0, %v245
    %v247 = vsel %vm246, 0, %v245
    %v248 = vsub.s32 32, %v247
    %v249 = vshll.u32 %v240, %v247
    %v250 = vshrl.u32 %v232, %v248
    %v251 = vor.u32 %v249, %v250
    %v252 = vsub.s32 4294967266, %v247
    %v253 = vadd.s32 %v252, 127
    %v254 = vshll.u32 %v253, 23
    %v255 = vor.u32 4788187, %v254
    %v256 = vand.u32 2147483647, %v255
    %v258 = vcvt.s32.f32 %v251
    %v259 = vmul.f32 %v258, %v256
    %v260 = vxor.u32 %v259, 2147483648
    %v261 = vsel %vm178, %v260, %v259
    %v262 = vsub.s32 4, %v238
    %v263 = vsel %vm178, %v262, %v238
    %v264 = vsel %vm177, %v67, %v261
    %v265 = vsel %vm177, 0, %v263
    %v266 = vcosq.f32.pop %v264
    %v267 = vsinq.f32.pop %v264
    %vm268 = vweird.f32 %v67
    %v269 = vand.u32 %v265, 3
    %vm270 = vcmp.lt.s32.totalorder %v269, 2
    %vm271 = vcmp.eq.s32.totalorder %v269, 0
    %v272 = vxor.u32 %v267, 2147483648
    %v273 = vsel %vm271, %v266, %v272
    %vm274 = vcmp.eq.s32.totalorder %v269, 2
    %v275 = vxor.u32 %v266, 2147483648
    %v276 = vsel %vm274, %v275, %v267
    %v277 = vsel %vm270, %v273, %v276
    %v278 = vsel %vm268, nan, %v277
    %v279 = vrcp.pop %v278
    %v280 = vmul.f32 %v175, %v279
    %v281 = vmul.f32 %v46, %v280
    %v282 = vmul.f32 %v281, 0.4
    %v283 = vmax.f32 %v282, -1.57
    %v284 = vmin.f32 %v283, 1.57
    %v285 = vmul.f32 %v284, 0.03
    %v286 = vadd.f32 %v285, %v44
    %v287 = vand.u32 2147483647, %v286
    %vm288 = vcmp.le.f32.partialorder %v287, 0.7853982
    %vm289 = vcmp.lt.s32.totalorder %v286, 0
    %v290 = vand.u32 %v286, 2139095040
    %v291 = vshrl.u32 %v290, 23
    %v292 = vsub.s32 %v291, 127
    %v293 = vand.u32 2147483647, %v286
    %v294 = vand.u32 %v293, 8388607
    %v295 = vor.u32 %v294, 8388608
    %v296 = vsub.s32 0, %v295
    %v297 = vadd.s32 %v292, 1
    %vm298 = vcmp.gt.s32.totalorder %v297, 0
    %v299 = vsel %vm298, %v297, 0
    %v300 = vshrl.u32 %v299, 5
    %v301 = vand.u32 %v299, 31
    %v302 = vsub.s32 32, %v301
    %v303 = vshrl.u32 683565275, %v302
    %v304 = vshll.u32 683565275, %v301
    %v305 = vshrl.u32 2475754826, %v302
    %v306 = vor.u32 %v304, %v305
    %v307 = vshll.u32 2475754826, %v301
    %v308 = vshrl.u32 2131351028, %v302
    %v309 = vor.u32 %v307, %v308
    %v310 = vshll.u32 2131351028, %v301
    %v311 = vshrl.u32 2102212464, %v302
    %v312 = vor.u32 %v310, %v311
    %v313 = vshll.u32 2102212464, %v301
    %v314 = vshrl.u32 920167782, %v302
    %v315 = vor.u32 %v313, %v314
    %v316 = vshll.u32 920167782, %v301
    %v317 = vshrl.u32 1326507024, %v302
    %v318 = vor.u32 %v316, %v317
    %vm319 = vcmp.lt.s32.totalorder %v300, 1
    %vm320 = vcmp.lt.s32.totalorder %v300, 2
    %vm321 = vcmp.lt.s32.totalorder %v300, 3
    %vm322 = vcmp.lt.s32.totalorder %v300, 4
    %v323 = vsel %vm319, %v303, %v306
    %v324 = vsel %vm322, %v312, 2102212464
    %v325 = vsel %vm321, %v309, %v324
    %v326 = vsel %vm320, %v323, %v325
    %v327 = vsel %vm319, %v306, %v309
    %v328 = vsel %vm322, %v315, 920167782
    %v329 = vsel %vm321, %v312, %v328
    %v330 = vsel %vm320, %v327, %v329
    %v331 = vsel %vm319, %v309, %v312
    %v332 = vsel %vm322, %v318, 1326507024
    %v333 = vsel %vm321, %v315, %v332
    %v334 = vsel %vm320, %v331, %v333
    %v335 = vshll.u32 %v295, 8
    %v336 = vmul.u32.u64.compose %v335, %v334
    %v337 = vextract.low.u32 %v336
    %v338 = vextract.high.u32 %v336
    %v339 = vmul.u32.u64.compose %v335, %v330
    %v340 = vextract.low.u32 %v339
    %v341 = vextract.high.u32 %v339
    %v342 = vmul.u32 %v335, %v326
    %v343 = vadd.s32 %v338, %v340
    %vm344 = vc.u32 %v338, %v340
    %v345 = vadd.s32 %v341, 1
    %v346 = vsel %vm344, %v345, %v341
    %v347 = vadd.s32 %v342, %v346
    %v348 = vadd.s32 %v347, 536870912
    %v349 = vshrl.u32 %v348, 30
    %v350 = vshll.u32 %v349, 30
    %v351 = vsub.s32 %v347, %v350
    %vm352 = vcmp.lt.s32.totalorder %v351, 0
    %v353 = vsub.s32 0, %v351
    %v354 = vsel %vm352, %v353, %v351
    %v355 = vclz %v354
    %v356 = vsub.s32 %v355, 2
    %vm357 = vcmp.gt.s32.totalorder 0, %v356
    %v358 = vsel %vm357, 0, %v356
    %v359 = vsub.s32 32, %v358
    %v360 = vshll.u32 %v351, %v358
    %v361 = vshrl.u32 %v343, %v359
    %v362 = vor.u32 %v360, %v361
    %v363 = vsub.s32 4294967266, %v358
    %v364 = vadd.s32 %v363, 127
    %v365 = vshll.u32 %v364, 23
    %v366 = vor.u32 4788187, %v365
    %v367 = vand.u32 2147483647, %v366
    %v369 = vcvt.s32.f32 %v362
    %v370 = vmul.f32 %v369, %v367
    %v371 = vxor.u32 %v370, 2147483648
    %v372 = vsel %vm289, %v371, %v370
    %v373 = vsub.s32 4, %v349
    %v374 = vsel %vm289, %v373, %v349
    %v375 = vsel %vm288, %v286, %v372
    %v376 = vsel %vm288, 0, %v374
    %v377 = vcosq.f32.pop %v375
    %v378 = vsinq.f32.pop %v375
    %vm379 = vweird.f32 %v286
    %v380 = vand.u32 %v376, 3
    %vm381 = vcmp.lt.s32.totalorder %v380, 2
    %vm382 = vcmp.eq.s32.totalorder %v380, 0
    %v383 = vxor.u32 %v378, 2147483648
    %v384 = vsel %vm382, %v377, %v383
    %vm385 = vcmp.eq.s32.totalorder %v380, 2
    %v386 = vxor.u32 %v377, 2147483648
    %v387 = vsel %vm385, %v386, %v378
    %v388 = vsel %vm381, %v384, %v387
    %v389 = vsel %vm379, nan, %v388
    %v390 = vmul.f32 %v71, %v389
    %v391 = vmul.f32 %v390, 0.03
    %v392 = vadd.f32 %v391, %v40
    %v393 = vand.u32 2147483647, %v286
    %vm394 = vcmp.le.f32.partialorder %v393, 0.7853982
    %vm395 = vcmp.lt.s32.totalorder %v286, 0
    %v396 = vand.u32 %v286, 2139095040
    %v397 = vshrl.u32 %v396, 23
    %v398 = vsub.s32 %v397, 127
    %v399 = vand.u32 2147483647, %v286
    %v400 = vand.u32 %v399, 8388607
    %v401 = vor.u32 %v400, 8388608
    %v402 = vsub.s32 0, %v401
    %v403 = vadd.s32 %v398, 1
    %vm404 = vcmp.gt.s32.totalorder %v403, 0
    %v405 = vsel %vm404, %v403, 0
    %v406 = vshrl.u32 %v405, 5
    %v407 = vand.u32 %v405, 31
    %v408 = vsub.s32 32, %v407
    %v409 = vshrl.u32 683565275, %v408
    %v410 = vshll.u32 683565275, %v407
    %v411 = vshrl.u32 2475754826, %v408
    %v412 = vor.u32 %v410, %v411
    %v413 = vshll.u32 2475754826, %v407
    %v414 = vshrl.u32 2131351028, %v408
    %v415 = vor.u32 %v413, %v414
    %v416 = vshll.u32 2131351028, %v407
    %v417 = vshrl.u32 2102212464, %v408
    %v418 = vor.u32 %v416, %v417
    %v419 = vshll.u32 2102212464, %v407
    %v420 = vshrl.u32 920167782, %v408
    %v421 = vor.u32 %v419, %v420
    %v422 = vshll.u32 920167782, %v407
    %v423 = vshrl.u32 1326507024, %v408
    %v424 = vor.u32 %v422, %v423
    %vm425 = vcmp.lt.s32.totalorder %v406, 1
    %vm426 = vcmp.lt.s32.totalorder %v406, 2
    %vm427 = vcmp.lt.s32.totalorder %v406, 3
    %vm428 = vcmp.lt.s32.totalorder %v406, 4
    %v429 = vsel %vm425, %v409, %v412
    %v430 = vsel %vm428, %v418, 2102212464
    %v431 = vsel %vm427, %v415, %v430
    %v432 = vsel %vm426, %v429, %v431
    %v433 = vsel %vm425, %v412, %v415
    %v434 = vsel %vm428, %v421, 920167782
    %v435 = vsel %vm427, %v418, %v434
    %v436 = vsel %vm426, %v433, %v435
    %v437 = vsel %vm425, %v415, %v418
    %v438 = vsel %vm428, %v424, 1326507024
    %v439 = vsel %vm427, %v421, %v438
    %v440 = vsel %vm426, %v437, %v439
    %v441 = vshll.u32 %v401, 8
    %v442 = vmul.u32.u64.compose %v441, %v440
    %v443 = vextract.low.u32 %v442
    %v444 = vextract.high.u32 %v442
    %v445 = vmul.u32.u64.compose %v441, %v436
    %v446 = vextract.low.u32 %v445
    %v447 = vextract.high.u32 %v445
    %v448 = vmul.u32 %v441, %v432
    %v449 = vadd.s32 %v444, %v446
    %vm450 = vc.u32 %v444, %v446
    %v451 = vadd.s32 %v447, 1
    %v452 = vsel %vm450, %v451, %v447
    %v453 = vadd.s32 %v448, %v452
    %v454 = vadd.s32 %v453, 536870912
    %v455 = vshrl.u32 %v454, 30
    %v456 = vshll.u32 %v455, 30
    %v457 = vsub.s32 %v453, %v456
    %vm458 = vcmp.lt.s32.totalorder %v457, 0
    %v459 = vsub.s32 0, %v457
    %v460 = vsel %vm458, %v459, %v457
    %v461 = vclz %v460
    %v462 = vsub.s32 %v461, 2
    %vm463 = vcmp.gt.s32.totalorder 0, %v462
    %v464 = vsel %vm463, 0, %v462
    %v465 = vsub.s32 32, %v464
    %v466 = vshll.u32 %v457, %v464
    %v467 = vshrl.u32 %v449, %v465
    %v468 = vor.u32 %v466, %v467
    %v469 = vsub.s32 4294967266, %v464
    %v470 = vadd.s32 %v469, 127
    %v471 = vshll.u32 %v470, 23
    %v472 = vor.u32 4788187, %v471
    %v473 = vand.u32 2147483647, %v472
    %v475 = vcvt.s32.f32 %v468
    %v476 = vmul.f32 %v475, %v473
    %v477 = vxor.u32 %v476, 2147483648
    %v478 = vsel %vm395, %v477, %v476
    %v479 = vsub.s32 4, %v455
    %v480 = vsel %vm395, %v479, %v455
    %v481 = vsel %vm394, %v286, %v478
    %v482 = vsel %vm394, 0, %v480
    %v483 = vcosq.f32.pop %v481
    %v484 = vsinq.f32.pop %v481
    %vm485 = vweird.f32 %v286
    %v486 = vadd.s32 %v482, 3
    %v487 = vand.u32 %v486, 3
    %vm488 = vcmp.lt.s32.totalorder %v487, 2
    %vm489 = vcmp.eq.s32.totalorder %v487, 0
    %v490 = vxor.u32 %v484, 2147483648
    %v491 = vsel %vm489, %v483, %v490
    %vm492 = vcmp.eq.s32.totalorder %v487, 2
    %v493 = vxor.u32 %v483, 2147483648
    %v494 = vsel %vm492, %v493, %v484
    %v495 = vsel %vm488, %v491, %v494
    %v496 = vsel %vm485, nan, %v495
    %v497 = vmul.f32 %v71, %v496
    %v498 = vmul.f32 %v497, 0.03
    %v499 = vadd.f32 %v498, %v42
    %500 = vst [vmem:[#allocation7] sm:$0x1] %v392
    %s501 = scalar_lea.vmem [#allocation7], 1
    %502 = vst [vmem:[%s501] sm:$0x1] %v499
    %s503 = scalar_lea.vmem [#allocation7], 2
    %504 = vst [vmem:[%s503] sm:$0x1] %v286
    %s505 = scalar_lea.vmem [#allocation7], 3
    %506 = vst [vmem:[%s505] sm:$0x1] %v71
    %s507 = scalar_lea.vmem [#allocation7], 4
    %508 = vst [vmem:[%s507] sm:$0x1] %v63
    %s509 = scalar_lea.vmem [#allocation7], 5
    %510 = vst [vmem:[%s509] sm:$0x1] %v67
    %s511 = scalar_lea.vmem [#allocation2], 1
    %v512 = vld [vmem:[%s511] sm:$0x1]
    %s513 = scalar_lea.vmem [#allocation2], 9
    %v514 = vld [vmem:[%s513] sm:$0x1]
    %v515 = vmul.f32 %v512, 4.0
    %v516 = vmax.f32 %v515, -4.0
    %v517 = vmin.f32 %v516, 4.0
    %v518 = vmul.f32 %v514, 0.5
    %v519 = vmax.f32 %v518, -0.5
    %v520 = vmin.f32 %v519, 0.5
    %v521 = vmul.f32 %v517, 0.03
    %v522 = vadd.f32 %v63, %v521
    %v523 = vmax.f32 %v522, -5.0
    %v524 = vmin.f32 %v523, 5.0
    %v525 = vmul.f32 %v520, 0.03
    %v526 = vadd.f32 %v67, %v525
    %v527 = vmax.f32 %v526, -0.5
    %v528 = vmin.f32 %v527, 0.5
    %v529 = vmul.f32 %v524, 0.03
    %v530 = vadd.f32 %v71, %v529
    %v531 = vmax.f32 %v530, 0.0
    %v532 = vmin.f32 %v531, 10.0
    %v533 = vand.u32 2147483647, %v528
    %vm534 = vcmp.le.f32.partialorder %v533, 0.7853982
    %vm535 = vcmp.lt.s32.totalorder %v528, 0
    %v536 = vand.u32 %v528, 2139095040
    %v537 = vshrl.u32 %v536, 23
    %v538 = vsub.s32 %v537, 127
    %v539 = vand.u32 2147483647, %v528
    %v540 = vand.u32 %v539, 8388607
    %v541 = vor.u32 %v540, 8388608
    %v542 = vsub.s32 0, %v541
    %v543 = vadd.s32 %v538, 1
    %vm544 = vcmp.gt.s32.totalorder %v543, 0
    %v545 = vsel %vm544, %v543, 0
    %v546 = vshrl.u32 %v545, 5
    %v547 = vand.u32 %v545, 31
    %v548 = vsub.s32 32, %v547
    %v549 = vshrl.u32 683565275, %v548
    %v550 = vshll.u32 683565275, %v547
    %v551 = vshrl.u32 2475754826, %v548
    %v552 = vor.u32 %v550, %v551
    %v553 = vshll.u32 2475754826, %v547
    %v554 = vshrl.u32 2131351028, %v548
    %v555 = vor.u32 %v553, %v554
    %v556 = vshll.u32 2131351028, %v547
    %v557 = vshrl.u32 2102212464, %v548
    %v558 = vor.u32 %v556, %v557
    %v559 = vshll.u32 2102212464, %v547
    %v560 = vshrl.u32 920167782, %v548
    %v561 = vor.u32 %v559, %v560
    %v562 = vshll.u32 920167782, %v547
    %v563 = vshrl.u32 1326507024, %v548
    %v564 = vor.u32 %v562, %v563
    %vm565 = vcmp.lt.s32.totalorder %v546, 1
    %vm566 = vcmp.lt.s32.totalorder %v546, 2
    %vm567 = vcmp.lt.s32.totalorder %v546, 3
    %vm568 = vcmp.lt.s32.totalorder %v546, 4
    %v569 = vsel %vm565, %v549, %v552
    %v570 = vsel %vm568, %v558, 2102212464
    %v571 = vsel %vm567, %v555, %v570
    %v572 = vsel %vm566, %v569, %v571
    %v573 = vsel %vm565, %v552, %v555
    %v574 = vsel %vm568, %v561, 920167782
    %v575 = vsel %vm567, %v558, %v574
    %v576 = vsel %vm566, %v573, %v575
    %v577 = vsel %vm565, %v555, %v558
    %v578 = vsel %vm568, %v564, 1326507024
    %v579 = vsel %vm567, %v561, %v578
    %v580 = vsel %vm566, %v577, %v579
    %v581 = vshll.u32 %v541, 8
    %v582 = vmul.u32.u64.compose %v581, %v580
    %v583 = vextract.low.u32 %v582
    %v584 = vextract.high.u32 %v582
    %v585 = vmul.u32.u64.compose %v581, %v576
    %v586 = vextract.low.u32 %v585
    %v587 = vextract.high.u32 %v585
    %v588 = vmul.u32 %v581, %v572
    %v589 = vadd.s32 %v584, %v586
    %vm590 = vc.u32 %v584, %v586
    %v591 = vadd.s32 %v587, 1
    %v592 = vsel %vm590, %v591, %v587
    %v593 = vadd.s32 %v588, %v592
    %v594 = vadd.s32 %v593, 536870912
    %v595 = vshrl.u32 %v594, 30
    %v596 = vshll.u32 %v595, 30
    %v597 = vsub.s32 %v593, %v596
    %vm598 = vcmp.lt.s32.totalorder %v597, 0
    %v599 = vsub.s32 0, %v597
    %v600 = vsel %vm598, %v599, %v597
    %v601 = vclz %v600
    %v602 = vsub.s32 %v601, 2
    %vm603 = vcmp.gt.s32.totalorder 0, %v602
    %v604 = vsel %vm603, 0, %v602
    %v605 = vsub.s32 32, %v604
    %v606 = vshll.u32 %v597, %v604
    %v607 = vshrl.u32 %v589, %v605
    %v608 = vor.u32 %v606, %v607
    %v609 = vsub.s32 4294967266, %v604
    %v610 = vadd.s32 %v609, 127
    %v611 = vshll.u32 %v610, 23
    %v612 = vor.u32 4788187, %v611
    %v613 = vand.u32 2147483647, %v612
    %v615 = vcvt.s32.f32 %v608
    %v616 = vmul.f32 %v615, %v613
    %v617 = vxor.u32 %v616, 2147483648
    %v618 = vsel %vm535, %v617, %v616
    %v619 = vsub.s32 4, %v595
    %v620 = vsel %vm535, %v619, %v595
    %v621 = vsel %vm534, %v528, %v618
    %v622 = vsel %vm534, 0, %v620
    %v623 = vcosq.f32.pop %v621
    %v624 = vsinq.f32.pop %v621
    %vm625 = vweird.f32 %v528
    %v626 = vadd.s32 %v622, 3
    %v627 = vand.u32 %v626, 3
    %vm628 = vcmp.lt.s32.totalorder %v627, 2
    %vm629 = vcmp.eq.s32.totalorder %v627, 0
    %v630 = vxor.u32 %v624, 2147483648
    %v631 = vsel %vm629, %v623, %v630
    %vm632 = vcmp.eq.s32.totalorder %v627, 2
    %v633 = vxor.u32 %v623, 2147483648
    %v634 = vsel %vm632, %v633, %v624
    %v635 = vsel %vm628, %v631, %v634
    %v636 = vsel %vm625, nan, %v635
    %v637 = vand.u32 2147483647, %v528
    %vm638 = vcmp.le.f32.partialorder %v637, 0.7853982
    %vm639 = vcmp.lt.s32.totalorder %v528, 0
    %v640 = vand.u32 %v528, 2139095040
    %v641 = vshrl.u32 %v640, 23
    %v642 = vsub.s32 %v641, 127
    %v643 = vand.u32 2147483647, %v528
    %v644 = vand.u32 %v643, 8388607
    %v645 = vor.u32 %v644, 8388608
    %v646 = vsub.s32 0, %v645
    %v647 = vadd.s32 %v642, 1
    %vm648 = vcmp.gt.s32.totalorder %v647, 0
    %v649 = vsel %vm648, %v647, 0
    %v650 = vshrl.u32 %v649, 5
    %v651 = vand.u32 %v649, 31
    %v652 = vsub.s32 32, %v651
    %v653 = vshrl.u32 683565275, %v652
    %v654 = vshll.u32 683565275, %v651
    %v655 = vshrl.u32 2475754826, %v652
    %v656 = vor.u32 %v654, %v655
    %v657 = vshll.u32 2475754826, %v651
    %v658 = vshrl.u32 2131351028, %v652
    %v659 = vor.u32 %v657, %v658
    %v660 = vshll.u32 2131351028, %v651
    %v661 = vshrl.u32 2102212464, %v652
    %v662 = vor.u32 %v660, %v661
    %v663 = vshll.u32 2102212464, %v651
    %v664 = vshrl.u32 920167782, %v652
    %v665 = vor.u32 %v663, %v664
    %v666 = vshll.u32 920167782, %v651
    %v667 = vshrl.u32 1326507024, %v652
    %v668 = vor.u32 %v666, %v667
    %vm669 = vcmp.lt.s32.totalorder %v650, 1
    %vm670 = vcmp.lt.s32.totalorder %v650, 2
    %vm671 = vcmp.lt.s32.totalorder %v650, 3
    %vm672 = vcmp.lt.s32.totalorder %v650, 4
    %v673 = vsel %vm669, %v653, %v656
    %v674 = vsel %vm672, %v662, 2102212464
    %v675 = vsel %vm671, %v659, %v674
    %v676 = vsel %vm670, %v673, %v675
    %v677 = vsel %vm669, %v656, %v659
    %v678 = vsel %vm672, %v665, 920167782
    %v679 = vsel %vm671, %v662, %v678
    %v680 = vsel %vm670, %v677, %v679
    %v681 = vsel %vm669, %v659, %v662
    %v682 = vsel %vm672, %v668, 1326507024
    %v683 = vsel %vm671, %v665, %v682
    %v684 = vsel %vm670, %v681, %v683
    %v685 = vshll.u32 %v645, 8
    %v686 = vmul.u32.u64.compose %v685, %v684
    %v687 = vextract.low.u32 %v686
    %v688 = vextract.high.u32 %v686
    %v689 = vmul.u32.u64.compose %v685, %v680
    %v690 = vextract.low.u32 %v689
    %v691 = vextract.high.u32 %v689
    %v692 = vmul.u32 %v685, %v676
    %v693 = vadd.s32 %v688, %v690
    %vm694 = vc.u32 %v688, %v690
    %v695 = vadd.s32 %v691, 1
    %v696 = vsel %vm694, %v695, %v691
    %v697 = vadd.s32 %v692, %v696
    %v698 = vadd.s32 %v697, 536870912
    %v699 = vshrl.u32 %v698, 30
    %v700 = vshll.u32 %v699, 30
    %v701 = vsub.s32 %v697, %v700
    %vm702 = vcmp.lt.s32.totalorder %v701, 0
    %v703 = vsub.s32 0, %v701
    %v704 = vsel %vm702, %v703, %v701
    %v705 = vclz %v704
    %v706 = vsub.s32 %v705, 2
    %vm707 = vcmp.gt.s32.totalorder 0, %v706
    %v708 = vsel %vm707, 0, %v706
    %v709 = vsub.s32 32, %v708
    %v710 = vshll.u32 %v701, %v708
    %v711 = vshrl.u32 %v693, %v709
    %v712 = vor.u32 %v710, %v711
    %v713 = vsub.s32 4294967266, %v708
    %v714 = vadd.s32 %v713, 127
    %v715 = vshll.u32 %v714, 23
    %v716 = vor.u32 4788187, %v715
    %v717 = vand.u32 2147483647, %v716
    %v719 = vcvt.s32.f32 %v712
    %v720 = vmul.f32 %v719, %v717
    %v721 = vxor.u32 %v720, 2147483648
    %v722 = vsel %vm639, %v721, %v720
    %v723 = vsub.s32 4, %v699
    %v724 = vsel %vm639, %v723, %v699
    %v725 = vsel %vm638, %v528, %v722
    %v726 = vsel %vm638, 0, %v724
    %v727 = vcosq.f32.pop %v725
    %v728 = vsinq.f32.pop %v725
    %vm729 = vweird.f32 %v528
    %v730 = vand.u32 %v726, 3
    %vm731 = vcmp.lt.s32.totalorder %v730, 2
    %vm732 = vcmp.eq.s32.totalorder %v730, 0
    %v733 = vxor.u32 %v728, 2147483648
    %v734 = vsel %vm732, %v727, %v733
    %vm735 = vcmp.eq.s32.totalorder %v730, 2
    %v736 = vxor.u32 %v727, 2147483648
    %v737 = vsel %vm735, %v736, %v728
    %v738 = vsel %vm731, %v734, %v737
    %v739 = vsel %vm729, nan, %v738
    %v740 = vrcp.pop %v739
    %v741 = vmul.f32 %v636, %v740
    %v742 = vmul.f32 %v71, %v741
    %v743 = vmul.f32 %v742, 0.4
    %v744 = vmax.f32 %v743, -1.57
    %v745 = vmin.f32 %v744, 1.57
    %v746 = vmul.f32 %v745, 0.03
    %v747 = vadd.f32 %v746, %v286
    %v748 = vand.u32 2147483647, %v747
    %vm749 = vcmp.le.f32.partialorder %v748, 0.7853982
    %vm750 = vcmp.lt.s32.totalorder %v747, 0
    %v751 = vand.u32 %v747, 2139095040
    %v752 = vshrl.u32 %v751, 23
    %v753 = vsub.s32 %v752, 127
    %v754 = vand.u32 2147483647, %v747
    %v755 = vand.u32 %v754, 8388607
    %v756 = vor.u32 %v755, 8388608
    %v757 = vsub.s32 0, %v756
    %v758 = vadd.s32 %v753, 1
    %vm759 = vcmp.gt.s32.totalorder %v758, 0
    %v760 = vsel %vm759, %v758, 0
    %v761 = vshrl.u32 %v760, 5
    %v762 = vand.u32 %v760, 31
    %v763 = vsub.s32 32, %v762
    %v764 = vshrl.u32 683565275, %v763
    %v765 = vshll.u32 683565275, %v762
    %v766 = vshrl.u32 2475754826, %v763
    %v767 = vor.u32 %v765, %v766
    %v768 = vshll.u32 2475754826, %v762
    %v769 = vshrl.u32 2131351028, %v763
    %v770 = vor.u32 %v768, %v769
    %v771 = vshll.u32 2131351028, %v762
    %v772 = vshrl.u32 2102212464, %v763
    %v773 = vor.u32 %v771, %v772
    %v774 = vshll.u32 2102212464, %v762
    %v775 = vshrl.u32 920167782, %v763
    %v776 = vor.u32 %v774, %v775
    %v777 = vshll.u32 920167782, %v762
    %v778 = vshrl.u32 1326507024, %v763
    %v779 = vor.u32 %v777, %v778
    %vm780 = vcmp.lt.s32.totalorder %v761, 1
    %vm781 = vcmp.lt.s32.totalorder %v761, 2
    %vm782 = vcmp.lt.s32.totalorder %v761, 3
    %vm783 = vcmp.lt.s32.totalorder %v761, 4
    %v784 = vsel %vm780, %v764, %v767
    %v785 = vsel %vm783, %v773, 2102212464
    %v786 = vsel %vm782, %v770, %v785
    %v787 = vsel %vm781, %v784, %v786
    %v788 = vsel %vm780, %v767, %v770
    %v789 = vsel %vm783, %v776, 920167782
    %v790 = vsel %vm782, %v773, %v789
    %v791 = vsel %vm781, %v788, %v790
    %v792 = vsel %vm780, %v770, %v773
    %v793 = vsel %vm783, %v779, 1326507024
    %v794 = vsel %vm782, %v776, %v793
    %v795 = vsel %vm781, %v792, %v794
    %v796 = vshll.u32 %v756, 8
    %v797 = vmul.u32.u64.compose %v796, %v795
    %v798 = vextract.low.u32 %v797
    %v799 = vextract.high.u32 %v797
    %v800 = vmul.u32.u64.compose %v796, %v791
    %v801 = vextract.low.u32 %v800
    %v802 = vextract.high.u32 %v800
    %v803 = vmul.u32 %v796, %v787
    %v804 = vadd.s32 %v799, %v801
    %vm805 = vc.u32 %v799, %v801
    %v806 = vadd.s32 %v802, 1
    %v807 = vsel %vm805, %v806, %v802
    %v808 = vadd.s32 %v803, %v807
    %v809 = vadd.s32 %v808, 536870912
    %v810 = vshrl.u32 %v809, 30
    %v811 = vshll.u32 %v810, 30
    %v812 = vsub.s32 %v808, %v811
    %vm813 = vcmp.lt.s32.totalorder %v812, 0
    %v814 = vsub.s32 0, %v812
    %v815 = vsel %vm813, %v814, %v812
    %v816 = vclz %v815
    %v817 = vsub.s32 %v816, 2
    %vm818 = vcmp.gt.s32.totalorder 0, %v817
    %v819 = vsel %vm818, 0, %v817
    %v820 = vsub.s32 32, %v819
    %v821 = vshll.u32 %v812, %v819
    %v822 = vshrl.u32 %v804, %v820
    %v823 = vor.u32 %v821, %v822
    %v824 = vsub.s32 4294967266, %v819
    %v825 = vadd.s32 %v824, 127
    %v826 = vshll.u32 %v825, 23
    %v827 = vor.u32 4788187, %v826
    %v828 = vand.u32 2147483647, %v827
    %v830 = vcvt.s32.f32 %v823
    %v831 = vmul.f32 %v830, %v828
    %v832 = vxor.u32 %v831, 2147483648
    %v833 = vsel %vm750, %v832, %v831
    %v834 = vsub.s32 4, %v810
    %v835 = vsel %vm750, %v834, %v810
    %v836 = vsel %vm749, %v747, %v833
    %v837 = vsel %vm749, 0, %v835
    %v838 = vcosq.f32.pop %v836
    %v839 = vsinq.f32.pop %v836
    %vm840 = vweird.f32 %v747
    %v841 = vand.u32 %v837, 3
    %vm842 = vcmp.lt.s32.totalorder %v841, 2
    %vm843 = vcmp.eq.s32.totalorder %v841, 0
    %v844 = vxor.u32 %v839, 2147483648
    %v845 = vsel %vm843, %v838, %v844
    %vm846 = vcmp.eq.s32.totalorder %v841, 2
    %v847 = vxor.u32 %v838, 2147483648
    %v848 = vsel %vm846, %v847, %v839
    %v849 = vsel %vm842, %v845, %v848
    %v850 = vsel %vm840, nan, %v849
    %v851 = vmul.f32 %v532, %v850
    %v852 = vmul.f32 %v851, 0.03
    %v853 = vadd.f32 %v852, %v392
    %v854 = vand.u32 2147483647, %v747
    %vm855 = vcmp.le.f32.partialorder %v854, 0.7853982
    %vm856 = vcmp.lt.s32.totalorder %v747, 0
    %v857 = vand.u32 %v747, 2139095040
    %v858 = vshrl.u32 %v857, 23
    %v859 = vsub.s32 %v858, 127
    %v860 = vand.u32 2147483647, %v747
    %v861 = vand.u32 %v860, 8388607
    %v862 = vor.u32 %v861, 8388608
    %v863 = vsub.s32 0, %v862
    %v864 = vadd.s32 %v859, 1
    %vm865 = vcmp.gt.s32.totalorder %v864, 0
    %v866 = vsel %vm865, %v864, 0
    %v867 = vshrl.u32 %v866, 5
    %v868 = vand.u32 %v866, 31
    %v869 = vsub.s32 32, %v868
    %v870 = vshrl.u32 683565275, %v869
    %v871 = vshll.u32 683565275, %v868
    %v872 = vshrl.u32 2475754826, %v869
    %v873 = vor.u32 %v871, %v872
    %v874 = vshll.u32 2475754826, %v868
    %v875 = vshrl.u32 2131351028, %v869
    %v876 = vor.u32 %v874, %v875
    %v877 = vshll.u32 2131351028, %v868
    %v878 = vshrl.u32 2102212464, %v869
    %v879 = vor.u32 %v877, %v878
    %v880 = vshll.u32 2102212464, %v868
    %v881 = vshrl.u32 920167782, %v869
    %v882 = vor.u32 %v880, %v881
    %v883 = vshll.u32 920167782, %v868
    %v884 = vshrl.u32 1326507024, %v869
    %v885 = vor.u32 %v883, %v884
    %vm886 = vcmp.lt.s32.totalorder %v867, 1
    %vm887 = vcmp.lt.s32.totalorder %v867, 2
    %vm888 = vcmp.lt.s32.totalorder %v867, 3
    %vm889 = vcmp.lt.s32.totalorder %v867, 4
    %v890 = vsel %vm886, %v870, %v873
    %v891 = vsel %vm889, %v879, 2102212464
    %v892 = vsel %vm888, %v876, %v891
    %v893 = vsel %vm887, %v890, %v892
    %v894 = vsel %vm886, %v873, %v876
    %v895 = vsel %vm889, %v882, 920167782
    %v896 = vsel %vm888, %v879, %v895
    %v897 = vsel %vm887, %v894, %v896
    %v898 = vsel %vm886, %v876, %v879
    %v899 = vsel %vm889, %v885, 1326507024
    %v900 = vsel %vm888, %v882, %v899
    %v901 = vsel %vm887, %v898, %v900
    %v902 = vshll.u32 %v862, 8
    %v903 = vmul.u32.u64.compose %v902, %v901
    %v904 = vextract.low.u32 %v903
    %v905 = vextract.high.u32 %v903
    %v906 = vmul.u32.u64.compose %v902, %v897
    %v907 = vextract.low.u32 %v906
    %v908 = vextract.high.u32 %v906
    %v909 = vmul.u32 %v902, %v893
    %v910 = vadd.s32 %v905, %v907
    %vm911 = vc.u32 %v905, %v907
    %v912 = vadd.s32 %v908, 1
    %v913 = vsel %vm911, %v912, %v908
    %v914 = vadd.s32 %v909, %v913
    %v915 = vadd.s32 %v914, 536870912
    %v916 = vshrl.u32 %v915, 30
    %v917 = vshll.u32 %v916, 30
    %v918 = vsub.s32 %v914, %v917
    %vm919 = vcmp.lt.s32.totalorder %v918, 0
    %v920 = vsub.s32 0, %v918
    %v921 = vsel %vm919, %v920, %v918
    %v922 = vclz %v921
    %v923 = vsub.s32 %v922, 2
    %vm924 = vcmp.gt.s32.totalorder 0, %v923
    %v925 = vsel %vm924, 0, %v923
    %v926 = vsub.s32 32, %v925
    %v927 = vshll.u32 %v918, %v925
    %v928 = vshrl.u32 %v910, %v926
    %v929 = vor.u32 %v927, %v928
    %v930 = vsub.s32 4294967266, %v925
    %v931 = vadd.s32 %v930, 127
    %v932 = vshll.u32 %v931, 23
    %v933 = vor.u32 4788187, %v932
    %v934 = vand.u32 2147483647, %v933
    %v936 = vcvt.s32.f32 %v929
    %v937 = vmul.f32 %v936, %v934
    %v938 = vxor.u32 %v937, 2147483648
    %v939 = vsel %vm856, %v938, %v937
    %v940 = vsub.s32 4, %v916
    %v941 = vsel %vm856, %v940, %v916
    %v942 = vsel %vm855, %v747, %v939
    %v943 = vsel %vm855, 0, %v941
    %v944 = vcosq.f32.pop %v942
    %v945 = vsinq.f32.pop %v942
    %vm946 = vweird.f32 %v747
    %v947 = vadd.s32 %v943, 3
    %v948 = vand.u32 %v947, 3
    %vm949 = vcmp.lt.s32.totalorder %v948, 2
    %vm950 = vcmp.eq.s32.totalorder %v948, 0
    %v951 = vxor.u32 %v945, 2147483648
    %v952 = vsel %vm950, %v944, %v951
    %vm953 = vcmp.eq.s32.totalorder %v948, 2
    %v954 = vxor.u32 %v944, 2147483648
    %v955 = vsel %vm953, %v954, %v945
    %v956 = vsel %vm949, %v952, %v955
    %v957 = vsel %vm946, nan, %v956
    %v958 = vmul.f32 %v532, %v957
    %v959 = vmul.f32 %v958, 0.03
    %v960 = vadd.f32 %v959, %v499
    %s961 = scalar_lea.vmem [#allocation7], 6
    %962 = vst [vmem:[%s961] sm:$0x1] %v853
    %s963 = scalar_lea.vmem [#allocation7], 7
    %964 = vst [vmem:[%s963] sm:$0x1] %v960
    %s965 = scalar_lea.vmem [#allocation7], 8
    %966 = vst [vmem:[%s965] sm:$0x1] %v747
    %s967 = scalar_lea.vmem [#allocation7], 9
    %968 = vst [vmem:[%s967] sm:$0x1] %v532
    %s969 = scalar_lea.vmem [#allocation7], 10
    %970 = vst [vmem:[%s969] sm:$0x1] %v524
    %s971 = scalar_lea.vmem [#allocation7], 11
    %972 = vst [vmem:[%s971] sm:$0x1] %v528
    %s973 = scalar_lea.vmem [#allocation2], 2
    %v974 = vld [vmem:[%s973] sm:$0x1]
    %s975 = scalar_lea.vmem [#allocation2], 10
    %v976 = vld [vmem:[%s975] sm:$0x1]
    %v977 = vmul.f32 %v974, 4.0
    %v978 = vmax.f32 %v977, -4.0
    %v979 = vmin.f32 %v978, 4.0
    %v980 = vmul.f32 %v976, 0.5
    %v981 = vmax.f32 %v980, -0.5
    %v982 = vmin.f32 %v981, 0.5
    %v983 = vmul.f32 %v979, 0.03
    %v984 = vadd.f32 %v524, %v983
    %v985 = vmax.f32 %v984, -5.0
    %v986 = vmin.f32 %v985, 5.0
    %v987 = vmul.f32 %v982, 0.03
    %v988 = vadd.f32 %v528, %v987
    %v989 = vmax.f32 %v988, -0.5
    %v990 = vmin.f32 %v989, 0.5
    %v991 = vmul.f32 %v986, 0.03
    %v992 = vadd.f32 %v532, %v991
    %v993 = vmax.f32 %v992, 0.0
    %v994 = vmin.f32 %v993, 10.0
    %v995 = vand.u32 2147483647, %v990
    %vm996 = vcmp.le.f32.partialorder %v995, 0.7853982
    %vm997 = vcmp.lt.s32.totalorder %v990, 0
    %v998 = vand.u32 %v990, 2139095040
    %v999 = vshrl.u32 %v998, 23
    %v1000 = vsub.s32 %v999, 127
    %v1001 = vand.u32 2147483647, %v990
    %v1002 = vand.u32 %v1001, 8388607
    %v1003 = vor.u32 %v1002, 8388608
    %v1004 = vsub.s32 0, %v1003
    %v1005 = vadd.s32 %v1000, 1
    %vm1006 = vcmp.gt.s32.totalorder %v1005, 0
    %v1007 = vsel %vm1006, %v1005, 0
    %v1008 = vshrl.u32 %v1007, 5
    %v1009 = vand.u32 %v1007, 31
    %v1010 = vsub.s32 32, %v1009
    %v1011 = vshrl.u32 683565275, %v1010
    %v1012 = vshll.u32 683565275, %v1009
    %v1013 = vshrl.u32 2475754826, %v1010
    %v1014 = vor.u32 %v1012, %v1013
    %v1015 = vshll.u32 2475754826, %v1009
    %v1016 = vshrl.u32 2131351028, %v1010
    %v1017 = vor.u32 %v1015, %v1016
    %v1018 = vshll.u32 2131351028, %v1009
    %v1019 = vshrl.u32 2102212464, %v1010
    %v1020 = vor.u32 %v1018, %v1019
    %v1021 = vshll.u32 2102212464, %v1009
    %v1022 = vshrl.u32 920167782, %v1010
    %v1023 = vor.u32 %v1021, %v1022
    %v1024 = vshll.u32 920167782, %v1009
    %v1025 = vshrl.u32 1326507024, %v1010
    %v1026 = vor.u32 %v1024, %v1025
    %vm1027 = vcmp.lt.s32.totalorder %v1008, 1
    %vm1028 = vcmp.lt.s32.totalorder %v1008, 2
    %vm1029 = vcmp.lt.s32.totalorder %v1008, 3
    %vm1030 = vcmp.lt.s32.totalorder %v1008, 4
    %v1031 = vsel %vm1027, %v1011, %v1014
    %v1032 = vsel %vm1030, %v1020, 2102212464
    %v1033 = vsel %vm1029, %v1017, %v1032
    %v1034 = vsel %vm1028, %v1031, %v1033
    %v1035 = vsel %vm1027, %v1014, %v1017
    %v1036 = vsel %vm1030, %v1023, 920167782
    %v1037 = vsel %vm1029, %v1020, %v1036
    %v1038 = vsel %vm1028, %v1035, %v1037
    %v1039 = vsel %vm1027, %v1017, %v1020
    %v1040 = vsel %vm1030, %v1026, 1326507024
    %v1041 = vsel %vm1029, %v1023, %v1040
    %v1042 = vsel %vm1028, %v1039, %v1041
    %v1043 = vshll.u32 %v1003, 8
    %v1044 = vmul.u32.u64.compose %v1043, %v1042
    %v1045 = vextract.low.u32 %v1044
    %v1046 = vextract.high.u32 %v1044
    %v1047 = vmul.u32.u64.compose %v1043, %v1038
    %v1048 = vextract.low.u32 %v1047
    %v1049 = vextract.high.u32 %v1047
    %v1050 = vmul.u32 %v1043, %v1034
    %v1051 = vadd.s32 %v1046, %v1048
    %vm1052 = vc.u32 %v1046, %v1048
    %v1053 = vadd.s32 %v1049, 1
    %v1054 = vsel %vm1052, %v1053, %v1049
    %v1055 = vadd.s32 %v1050, %v1054
    %v1056 = vadd.s32 %v1055, 536870912
    %v1057 = vshrl.u32 %v1056, 30
    %v1058 = vshll.u32 %v1057, 30
    %v1059 = vsub.s32 %v1055, %v1058
    %vm1060 = vcmp.lt.s32.totalorder %v1059, 0
    %v1061 = vsub.s32 0, %v1059
    %v1062 = vsel %vm1060, %v1061, %v1059
    %v1063 = vclz %v1062
    %v1064 = vsub.s32 %v1063, 2
    %vm1065 = vcmp.gt.s32.totalorder 0, %v1064
    %v1066 = vsel %vm1065, 0, %v1064
    %v1067 = vsub.s32 32, %v1066
    %v1068 = vshll.u32 %v1059, %v1066
    %v1069 = vshrl.u32 %v1051, %v1067
    %v1070 = vor.u32 %v1068, %v1069
    %v1071 = vsub.s32 4294967266, %v1066
    %v1072 = vadd.s32 %v1071, 127
    %v1073 = vshll.u32 %v1072, 23
    %v1074 = vor.u32 4788187, %v1073
    %v1075 = vand.u32 2147483647, %v1074
    %v1077 = vcvt.s32.f32 %v1070
    %v1078 = vmul.f32 %v1077, %v1075
    %v1079 = vxor.u32 %v1078, 2147483648
    %v1080 = vsel %vm997, %v1079, %v1078
    %v1081 = vsub.s32 4, %v1057
    %v1082 = vsel %vm997, %v1081, %v1057
    %v1083 = vsel %vm996, %v990, %v1080
    %v1084 = vsel %vm996, 0, %v1082
    %v1085 = vcosq.f32.pop %v1083
    %v1086 = vsinq.f32.pop %v1083
    %vm1087 = vweird.f32 %v990
    %v1088 = vadd.s32 %v1084, 3
    %v1089 = vand.u32 %v1088, 3
    %vm1090 = vcmp.lt.s32.totalorder %v1089, 2
    %vm1091 = vcmp.eq.s32.totalorder %v1089, 0
    %v1092 = vxor.u32 %v1086, 2147483648
    %v1093 = vsel %vm1091, %v1085, %v1092
    %vm1094 = vcmp.eq.s32.totalorder %v1089, 2
    %v1095 = vxor.u32 %v1085, 2147483648
    %v1096 = vsel %vm1094, %v1095, %v1086
    %v1097 = vsel %vm1090, %v1093, %v1096
    %v1098 = vsel %vm1087, nan, %v1097
    %v1099 = vand.u32 2147483647, %v990
    %vm1100 = vcmp.le.f32.partialorder %v1099, 0.7853982
    %vm1101 = vcmp.lt.s32.totalorder %v990, 0
    %v1102 = vand.u32 %v990, 2139095040
    %v1103 = vshrl.u32 %v1102, 23
    %v1104 = vsub.s32 %v1103, 127
    %v1105 = vand.u32 2147483647, %v990
    %v1106 = vand.u32 %v1105, 8388607
    %v1107 = vor.u32 %v1106, 8388608
    %v1108 = vsub.s32 0, %v1107
    %v1109 = vadd.s32 %v1104, 1
    %vm1110 = vcmp.gt.s32.totalorder %v1109, 0
    %v1111 = vsel %vm1110, %v1109, 0
    %v1112 = vshrl.u32 %v1111, 5
    %v1113 = vand.u32 %v1111, 31
    %v1114 = vsub.s32 32, %v1113
    %v1115 = vshrl.u32 683565275, %v1114
    %v1116 = vshll.u32 683565275, %v1113
    %v1117 = vshrl.u32 2475754826, %v1114
    %v1118 = vor.u32 %v1116, %v1117
    %v1119 = vshll.u32 2475754826, %v1113
    %v1120 = vshrl.u32 2131351028, %v1114
    %v1121 = vor.u32 %v1119, %v1120
    %v1122 = vshll.u32 2131351028, %v1113
    %v1123 = vshrl.u32 2102212464, %v1114
    %v1124 = vor.u32 %v1122, %v1123
    %v1125 = vshll.u32 2102212464, %v1113
    %v1126 = vshrl.u32 920167782, %v1114
    %v1127 = vor.u32 %v1125, %v1126
    %v1128 = vshll.u32 920167782, %v1113
    %v1129 = vshrl.u32 1326507024, %v1114
    %v1130 = vor.u32 %v1128, %v1129
    %vm1131 = vcmp.lt.s32.totalorder %v1112, 1
    %vm1132 = vcmp.lt.s32.totalorder %v1112, 2
    %vm1133 = vcmp.lt.s32.totalorder %v1112, 3
    %vm1134 = vcmp.lt.s32.totalorder %v1112, 4
    %v1135 = vsel %vm1131, %v1115, %v1118
    %v1136 = vsel %vm1134, %v1124, 2102212464
    %v1137 = vsel %vm1133, %v1121, %v1136
    %v1138 = vsel %vm1132, %v1135, %v1137
    %v1139 = vsel %vm1131, %v1118, %v1121
    %v1140 = vsel %vm1134, %v1127, 920167782
    %v1141 = vsel %vm1133, %v1124, %v1140
    %v1142 = vsel %vm1132, %v1139, %v1141
    %v1143 = vsel %vm1131, %v1121, %v1124
    %v1144 = vsel %vm1134, %v1130, 1326507024
    %v1145 = vsel %vm1133, %v1127, %v1144
    %v1146 = vsel %vm1132, %v1143, %v1145
    %v1147 = vshll.u32 %v1107, 8
    %v1148 = vmul.u32.u64.compose %v1147, %v1146
    %v1149 = vextract.low.u32 %v1148
    %v1150 = vextract.high.u32 %v1148
    %v1151 = vmul.u32.u64.compose %v1147, %v1142
    %v1152 = vextract.low.u32 %v1151
    %v1153 = vextract.high.u32 %v1151
    %v1154 = vmul.u32 %v1147, %v1138
    %v1155 = vadd.s32 %v1150, %v1152
    %vm1156 = vc.u32 %v1150, %v1152
    %v1157 = vadd.s32 %v1153, 1
    %v1158 = vsel %vm1156, %v1157, %v1153
    %v1159 = vadd.s32 %v1154, %v1158
    %v1160 = vadd.s32 %v1159, 536870912
    %v1161 = vshrl.u32 %v1160, 30
    %v1162 = vshll.u32 %v1161, 30
    %v1163 = vsub.s32 %v1159, %v1162
    %vm1164 = vcmp.lt.s32.totalorder %v1163, 0
    %v1165 = vsub.s32 0, %v1163
    %v1166 = vsel %vm1164, %v1165, %v1163
    %v1167 = vclz %v1166
    %v1168 = vsub.s32 %v1167, 2
    %vm1169 = vcmp.gt.s32.totalorder 0, %v1168
    %v1170 = vsel %vm1169, 0, %v1168
    %v1171 = vsub.s32 32, %v1170
    %v1172 = vshll.u32 %v1163, %v1170
    %v1173 = vshrl.u32 %v1155, %v1171
    %v1174 = vor.u32 %v1172, %v1173
    %v1175 = vsub.s32 4294967266, %v1170
    %v1176 = vadd.s32 %v1175, 127
    %v1177 = vshll.u32 %v1176, 23
    %v1178 = vor.u32 4788187, %v1177
    %v1179 = vand.u32 2147483647, %v1178
    %v1181 = vcvt.s32.f32 %v1174
    %v1182 = vmul.f32 %v1181, %v1179
    %v1183 = vxor.u32 %v1182, 2147483648
    %v1184 = vsel %vm1101, %v1183, %v1182
    %v1185 = vsub.s32 4, %v1161
    %v1186 = vsel %vm1101, %v1185, %v1161
    %v1187 = vsel %vm1100, %v990, %v1184
    %v1188 = vsel %vm1100, 0, %v1186
    %v1189 = vcosq.f32.pop %v1187
    %v1190 = vsinq.f32.pop %v1187
    %vm1191 = vweird.f32 %v990
    %v1192 = vand.u32 %v1188, 3
    %vm1193 = vcmp.lt.s32.totalorder %v1192, 2
    %vm1194 = vcmp.eq.s32.totalorder %v1192, 0
    %v1195 = vxor.u32 %v1190, 2147483648
    %v1196 = vsel %vm1194, %v1189, %v1195
    %vm1197 = vcmp.eq.s32.totalorder %v1192, 2
    %v1198 = vxor.u32 %v1189, 2147483648
    %v1199 = vsel %vm1197, %v1198, %v1190
    %v1200 = vsel %vm1193, %v1196, %v1199
    %v1201 = vsel %vm1191, nan, %v1200
    %v1202 = vrcp.pop %v1201
    %v1203 = vmul.f32 %v1098, %v1202
    %v1204 = vmul.f32 %v532, %v1203
    %v1205 = vmul.f32 %v1204, 0.4
    %v1206 = vmax.f32 %v1205, -1.57
    %v1207 = vmin.f32 %v1206, 1.57
    %v1208 = vmul.f32 %v1207, 0.03
    %v1209 = vadd.f32 %v1208, %v747
    %v1210 = vand.u32 2147483647, %v1209
    %vm1211 = vcmp.le.f32.partialorder %v1210, 0.7853982
    %vm1212 = vcmp.lt.s32.totalorder %v1209, 0
    %v1213 = vand.u32 %v1209, 2139095040
    %v1214 = vshrl.u32 %v1213, 23
    %v1215 = vsub.s32 %v1214, 127
    %v1216 = vand.u32 2147483647, %v1209
    %v1217 = vand.u32 %v1216, 8388607
    %v1218 = vor.u32 %v1217, 8388608
    %v1219 = vsub.s32 0, %v1218
    %v1220 = vadd.s32 %v1215, 1
    %vm1221 = vcmp.gt.s32.totalorder %v1220, 0
    %v1222 = vsel %vm1221, %v1220, 0
    %v1223 = vshrl.u32 %v1222, 5
    %v1224 = vand.u32 %v1222, 31
    %v1225 = vsub.s32 32, %v1224
    %v1226 = vshrl.u32 683565275, %v1225
    %v1227 = vshll.u32 683565275, %v1224
    %v1228 = vshrl.u32 2475754826, %v1225
    %v1229 = vor.u32 %v1227, %v1228
    %v1230 = vshll.u32 2475754826, %v1224
    %v1231 = vshrl.u32 2131351028, %v1225
    %v1232 = vor.u32 %v1230, %v1231
    %v1233 = vshll.u32 2131351028, %v1224
    %v1234 = vshrl.u32 2102212464, %v1225
    %v1235 = vor.u32 %v1233, %v1234
    %v1236 = vshll.u32 2102212464, %v1224
    %v1237 = vshrl.u32 920167782, %v1225
    %v1238 = vor.u32 %v1236, %v1237
    %v1239 = vshll.u32 920167782, %v1224
    %v1240 = vshrl.u32 1326507024, %v1225
    %v1241 = vor.u32 %v1239, %v1240
    %vm1242 = vcmp.lt.s32.totalorder %v1223, 1
    %vm1243 = vcmp.lt.s32.totalorder %v1223, 2
    %vm1244 = vcmp.lt.s32.totalorder %v1223, 3
    %vm1245 = vcmp.lt.s32.totalorder %v1223, 4
    %v1246 = vsel %vm1242, %v1226, %v1229
    %v1247 = vsel %vm1245, %v1235, 2102212464
    %v1248 = vsel %vm1244, %v1232, %v1247
    %v1249 = vsel %vm1243, %v1246, %v1248
    %v1250 = vsel %vm1242, %v1229, %v1232
    %v1251 = vsel %vm1245, %v1238, 920167782
    %v1252 = vsel %vm1244, %v1235, %v1251
    %v1253 = vsel %vm1243, %v1250, %v1252
    %v1254 = vsel %vm1242, %v1232, %v1235
    %v1255 = vsel %vm1245, %v1241, 1326507024
    %v1256 = vsel %vm1244, %v1238, %v1255
    %v1257 = vsel %vm1243, %v1254, %v1256
    %v1258 = vshll.u32 %v1218, 8
    %v1259 = vmul.u32.u64.compose %v1258, %v1257
    %v1260 = vextract.low.u32 %v1259
    %v1261 = vextract.high.u32 %v1259
    %v1262 = vmul.u32.u64.compose %v1258, %v1253
    %v1263 = vextract.low.u32 %v1262
    %v1264 = vextract.high.u32 %v1262
    %v1265 = vmul.u32 %v1258, %v1249
    %v1266 = vadd.s32 %v1261, %v1263
    %vm1267 = vc.u32 %v1261, %v1263
    %v1268 = vadd.s32 %v1264, 1
    %v1269 = vsel %vm1267, %v1268, %v1264
    %v1270 = vadd.s32 %v1265, %v1269
    %v1271 = vadd.s32 %v1270, 536870912
    %v1272 = vshrl.u32 %v1271, 30
    %v1273 = vshll.u32 %v1272, 30
    %v1274 = vsub.s32 %v1270, %v1273
    %vm1275 = vcmp.lt.s32.totalorder %v1274, 0
    %v1276 = vsub.s32 0, %v1274
    %v1277 = vsel %vm1275, %v1276, %v1274
    %v1278 = vclz %v1277
    %v1279 = vsub.s32 %v1278, 2
    %vm1280 = vcmp.gt.s32.totalorder 0, %v1279
    %v1281 = vsel %vm1280, 0, %v1279
    %v1282 = vsub.s32 32, %v1281
    %v1283 = vshll.u32 %v1274, %v1281
    %v1284 = vshrl.u32 %v1266, %v1282
    %v1285 = vor.u32 %v1283, %v1284
    %v1286 = vsub.s32 4294967266, %v1281
    %v1287 = vadd.s32 %v1286, 127
    %v1288 = vshll.u32 %v1287, 23
    %v1289 = vor.u32 4788187, %v1288
    %v1290 = vand.u32 2147483647, %v1289
    %v1292 = vcvt.s32.f32 %v1285
    %v1293 = vmul.f32 %v1292, %v1290
    %v1294 = vxor.u32 %v1293, 2147483648
    %v1295 = vsel %vm1212, %v1294, %v1293
    %v1296 = vsub.s32 4, %v1272
    %v1297 = vsel %vm1212, %v1296, %v1272
    %v1298 = vsel %vm1211, %v1209, %v1295
    %v1299 = vsel %vm1211, 0, %v1297
    %v1300 = vcosq.f32.pop %v1298
    %v1301 = vsinq.f32.pop %v1298
    %vm1302 = vweird.f32 %v1209
    %v1303 = vand.u32 %v1299, 3
    %vm1304 = vcmp.lt.s32.totalorder %v1303, 2
    %vm1305 = vcmp.eq.s32.totalorder %v1303, 0
    %v1306 = vxor.u32 %v1301, 2147483648
    %v1307 = vsel %vm1305, %v1300, %v1306
    %vm1308 = vcmp.eq.s32.totalorder %v1303, 2
    %v1309 = vxor.u32 %v1300, 2147483648
    %v1310 = vsel %vm1308, %v1309, %v1301
    %v1311 = vsel %vm1304, %v1307, %v1310
    %v1312 = vsel %vm1302, nan, %v1311
    %v1313 = vmul.f32 %v994, %v1312
    %v1314 = vmul.f32 %v1313, 0.03
    %v1315 = vadd.f32 %v1314, %v853
    %v1316 = vand.u32 2147483647, %v1209
    %vm1317 = vcmp.le.f32.partialorder %v1316, 0.7853982
    %vm1318 = vcmp.lt.s32.totalorder %v1209, 0
    %v1319 = vand.u32 %v1209, 2139095040
    %v1320 = vshrl.u32 %v1319, 23
    %v1321 = vsub.s32 %v1320, 127
    %v1322 = vand.u32 2147483647, %v1209
    %v1323 = vand.u32 %v1322, 8388607
    %v1324 = vor.u32 %v1323, 8388608
    %v1325 = vsub.s32 0, %v1324
    %v1326 = vadd.s32 %v1321, 1
    %vm1327 = vcmp.gt.s32.totalorder %v1326, 0
    %v1328 = vsel %vm1327, %v1326, 0
    %v1329 = vshrl.u32 %v1328, 5
    %v1330 = vand.u32 %v1328, 31
    %v1331 = vsub.s32 32, %v1330
    %v1332 = vshrl.u32 683565275, %v1331
    %v1333 = vshll.u32 683565275, %v1330
    %v1334 = vshrl.u32 2475754826, %v1331
    %v1335 = vor.u32 %v1333, %v1334
    %v1336 = vshll.u32 2475754826, %v1330
    %v1337 = vshrl.u32 2131351028, %v1331
    %v1338 = vor.u32 %v1336, %v1337
    %v1339 = vshll.u32 2131351028, %v1330
    %v1340 = vshrl.u32 2102212464, %v1331
    %v1341 = vor.u32 %v1339, %v1340
    %v1342 = vshll.u32 2102212464, %v1330
    %v1343 = vshrl.u32 920167782, %v1331
    %v1344 = vor.u32 %v1342, %v1343
    %v1345 = vshll.u32 920167782, %v1330
    %v1346 = vshrl.u32 1326507024, %v1331
    %v1347 = vor.u32 %v1345, %v1346
    %vm1348 = vcmp.lt.s32.totalorder %v1329, 1
    %vm1349 = vcmp.lt.s32.totalorder %v1329, 2
    %vm1350 = vcmp.lt.s32.totalorder %v1329, 3
    %vm1351 = vcmp.lt.s32.totalorder %v1329, 4
    %v1352 = vsel %vm1348, %v1332, %v1335
    %v1353 = vsel %vm1351, %v1341, 2102212464
    %v1354 = vsel %vm1350, %v1338, %v1353
    %v1355 = vsel %vm1349, %v1352, %v1354
    %v1356 = vsel %vm1348, %v1335, %v1338
    %v1357 = vsel %vm1351, %v1344, 920167782
    %v1358 = vsel %vm1350, %v1341, %v1357
    %v1359 = vsel %vm1349, %v1356, %v1358
    %v1360 = vsel %vm1348, %v1338, %v1341
    %v1361 = vsel %vm1351, %v1347, 1326507024
    %v1362 = vsel %vm1350, %v1344, %v1361
    %v1363 = vsel %vm1349, %v1360, %v1362
    %v1364 = vshll.u32 %v1324, 8
    %v1365 = vmul.u32.u64.compose %v1364, %v1363
    %v1366 = vextract.low.u32 %v1365
    %v1367 = vextract.high.u32 %v1365
    %v1368 = vmul.u32.u64.compose %v1364, %v1359
    %v1369 = vextract.low.u32 %v1368
    %v1370 = vextract.high.u32 %v1368
    %v1371 = vmul.u32 %v1364, %v1355
    %v1372 = vadd.s32 %v1367, %v1369
    %vm1373 = vc.u32 %v1367, %v1369
    %v1374 = vadd.s32 %v1370, 1
    %v1375 = vsel %vm1373, %v1374, %v1370
    %v1376 = vadd.s32 %v1371, %v1375
    %v1377 = vadd.s32 %v1376, 536870912
    %v1378 = vshrl.u32 %v1377, 30
    %v1379 = vshll.u32 %v1378, 30
    %v1380 = vsub.s32 %v1376, %v1379
    %vm1381 = vcmp.lt.s32.totalorder %v1380, 0
    %v1382 = vsub.s32 0, %v1380
    %v1383 = vsel %vm1381, %v1382, %v1380
    %v1384 = vclz %v1383
    %v1385 = vsub.s32 %v1384, 2
    %vm1386 = vcmp.gt.s32.totalorder 0, %v1385
    %v1387 = vsel %vm1386, 0, %v1385
    %v1388 = vsub.s32 32, %v1387
    %v1389 = vshll.u32 %v1380, %v1387
    %v1390 = vshrl.u32 %v1372, %v1388
    %v1391 = vor.u32 %v1389, %v1390
    %v1392 = vsub.s32 4294967266, %v1387
    %v1393 = vadd.s32 %v1392, 127
    %v1394 = vshll.u32 %v1393, 23
    %v1395 = vor.u32 4788187, %v1394
    %v1396 = vand.u32 2147483647, %v1395
    %v1398 = vcvt.s32.f32 %v1391
    %v1399 = vmul.f32 %v1398, %v1396
    %v1400 = vxor.u32 %v1399, 2147483648
    %v1401 = vsel %vm1318, %v1400, %v1399
    %v1402 = vsub.s32 4, %v1378
    %v1403 = vsel %vm1318, %v1402, %v1378
    %v1404 = vsel %vm1317, %v1209, %v1401
    %v1405 = vsel %vm1317, 0, %v1403
    %v1406 = vcosq.f32.pop %v1404
    %v1407 = vsinq.f32.pop %v1404
    %vm1408 = vweird.f32 %v1209
    %v1409 = vadd.s32 %v1405, 3
    %v1410 = vand.u32 %v1409, 3
    %vm1411 = vcmp.lt.s32.totalorder %v1410, 2
    %vm1412 = vcmp.eq.s32.totalorder %v1410, 0
    %v1413 = vxor.u32 %v1407, 2147483648
    %v1414 = vsel %vm1412, %v1406, %v1413
    %vm1415 = vcmp.eq.s32.totalorder %v1410, 2
    %v1416 = vxor.u32 %v1406, 2147483648
    %v1417 = vsel %vm1415, %v1416, %v1407
    %v1418 = vsel %vm1411, %v1414, %v1417
    %v1419 = vsel %vm1408, nan, %v1418
    %v1420 = vmul.f32 %v994, %v1419
    %v1421 = vmul.f32 %v1420, 0.03
    %v1422 = vadd.f32 %v1421, %v960
    %s1423 = scalar_lea.vmem [#allocation7], 12
    %1424 = vst [vmem:[%s1423] sm:$0x1] %v1315
    %s1425 = scalar_lea.vmem [#allocation7], 13
    %1426 = vst [vmem:[%s1425] sm:$0x1] %v1422
    %s1427 = scalar_lea.vmem [#allocation7], 14
    %1428 = vst [vmem:[%s1427] sm:$0x1] %v1209
    %s1429 = scalar_lea.vmem [#allocation7], 15
    %1430 = vst [vmem:[%s1429] sm:$0x1] %v994
    %s1431 = scalar_lea.vmem [#allocation7], 16
    %1432 = vst [vmem:[%s1431] sm:$0x1] %v986
    %s1433 = scalar_lea.vmem [#allocation7], 17
    %1434 = vst [vmem:[%s1433] sm:$0x1] %v990
    %s1435 = scalar_lea.vmem [#allocation2], 3
    %v1436 = vld [vmem:[%s1435] sm:$0x1]
    %s1437 = scalar_lea.vmem [#allocation2], 11
    %v1438 = vld [vmem:[%s1437] sm:$0x1]
    %v1439 = vmul.f32 %v1436, 4.0
    %v1440 = vmax.f32 %v1439, -4.0
    %v1441 = vmin.f32 %v1440, 4.0
    %v1442 = vmul.f32 %v1438, 0.5
    %v1443 = vmax.f32 %v1442, -0.5
    %v1444 = vmin.f32 %v1443, 0.5
    %v1445 = vmul.f32 %v1441, 0.03
    %v1446 = vadd.f32 %v986, %v1445
    %v1447 = vmax.f32 %v1446, -5.0
    %v1448 = vmin.f32 %v1447, 5.0
    %v1449 = vmul.f32 %v1444, 0.03
    %v1450 = vadd.f32 %v990, %v1449
    %v1451 = vmax.f32 %v1450, -0.5
    %v1452 = vmin.f32 %v1451, 0.5
    %v1453 = vmul.f32 %v1448, 0.03
    %v1454 = vadd.f32 %v994, %v1453
    %v1455 = vmax.f32 %v1454, 0.0
    %v1456 = vmin.f32 %v1455, 10.0
    %v1457 = vand.u32 2147483647, %v1452
    %vm1458 = vcmp.le.f32.partialorder %v1457, 0.7853982
    %vm1459 = vcmp.lt.s32.totalorder %v1452, 0
    %v1460 = vand.u32 %v1452, 2139095040
    %v1461 = vshrl.u32 %v1460, 23
    %v1462 = vsub.s32 %v1461, 127
    %v1463 = vand.u32 2147483647, %v1452
    %v1464 = vand.u32 %v1463, 8388607
    %v1465 = vor.u32 %v1464, 8388608
    %v1466 = vsub.s32 0, %v1465
    %v1467 = vadd.s32 %v1462, 1
    %vm1468 = vcmp.gt.s32.totalorder %v1467, 0
    %v1469 = vsel %vm1468, %v1467, 0
    %v1470 = vshrl.u32 %v1469, 5
    %v1471 = vand.u32 %v1469, 31
    %v1472 = vsub.s32 32, %v1471
    %v1473 = vshrl.u32 683565275, %v1472
    %v1474 = vshll.u32 683565275, %v1471
    %v1475 = vshrl.u32 2475754826, %v1472
    %v1476 = vor.u32 %v1474, %v1475
    %v1477 = vshll.u32 2475754826, %v1471
    %v1478 = vshrl.u32 2131351028, %v1472
    %v1479 = vor.u32 %v1477, %v1478
    %v1480 = vshll.u32 2131351028, %v1471
    %v1481 = vshrl.u32 2102212464, %v1472
    %v1482 = vor.u32 %v1480, %v1481
    %v1483 = vshll.u32 2102212464, %v1471
    %v1484 = vshrl.u32 920167782, %v1472
    %v1485 = vor.u32 %v1483, %v1484
    %v1486 = vshll.u32 920167782, %v1471
    %v1487 = vshrl.u32 1326507024, %v1472
    %v1488 = vor.u32 %v1486, %v1487
    %vm1489 = vcmp.lt.s32.totalorder %v1470, 1
    %vm1490 = vcmp.lt.s32.totalorder %v1470, 2
    %vm1491 = vcmp.lt.s32.totalorder %v1470, 3
    %vm1492 = vcmp.lt.s32.totalorder %v1470, 4
    %v1493 = vsel %vm1489, %v1473, %v1476
    %v1494 = vsel %vm1492, %v1482, 2102212464
    %v1495 = vsel %vm1491, %v1479, %v1494
    %v1496 = vsel %vm1490, %v1493, %v1495
    %v1497 = vsel %vm1489, %v1476, %v1479
    %v1498 = vsel %vm1492, %v1485, 920167782
    %v1499 = vsel %vm1491, %v1482, %v1498
    %v1500 = vsel %vm1490, %v1497, %v1499
    %v1501 = vsel %vm1489, %v1479, %v1482
    %v1502 = vsel %vm1492, %v1488, 1326507024
    %v1503 = vsel %vm1491, %v1485, %v1502
    %v1504 = vsel %vm1490, %v1501, %v1503
    %v1505 = vshll.u32 %v1465, 8
    %v1506 = vmul.u32.u64.compose %v1505, %v1504
    %v1507 = vextract.low.u32 %v1506
    %v1508 = vextract.high.u32 %v1506
    %v1509 = vmul.u32.u64.compose %v1505, %v1500
    %v1510 = vextract.low.u32 %v1509
    %v1511 = vextract.high.u32 %v1509
    %v1512 = vmul.u32 %v1505, %v1496
    %v1513 = vadd.s32 %v1508, %v1510
    %vm1514 = vc.u32 %v1508, %v1510
    %v1515 = vadd.s32 %v1511, 1
    %v1516 = vsel %vm1514, %v1515, %v1511
    %v1517 = vadd.s32 %v1512, %v1516
    %v1518 = vadd.s32 %v1517, 536870912
    %v1519 = vshrl.u32 %v1518, 30
    %v1520 = vshll.u32 %v1519, 30
    %v1521 = vsub.s32 %v1517, %v1520
    %vm1522 = vcmp.lt.s32.totalorder %v1521, 0
    %v1523 = vsub.s32 0, %v1521
    %v1524 = vsel %vm1522, %v1523, %v1521
    %v1525 = vclz %v1524
    %v1526 = vsub.s32 %v1525, 2
    %vm1527 = vcmp.gt.s32.totalorder 0, %v1526
    %v1528 = vsel %vm1527, 0, %v1526
    %v1529 = vsub.s32 32, %v1528
    %v1530 = vshll.u32 %v1521, %v1528
    %v1531 = vshrl.u32 %v1513, %v1529
    %v1532 = vor.u32 %v1530, %v1531
    %v1533 = vsub.s32 4294967266, %v1528
    %v1534 = vadd.s32 %v1533, 127
    %v1535 = vshll.u32 %v1534, 23
    %v1536 = vor.u32 4788187, %v1535
    %v1537 = vand.u32 2147483647, %v1536
    %v1539 = vcvt.s32.f32 %v1532
    %v1540 = vmul.f32 %v1539, %v1537
    %v1541 = vxor.u32 %v1540, 2147483648
    %v1542 = vsel %vm1459, %v1541, %v1540
    %v1543 = vsub.s32 4, %v1519
    %v1544 = vsel %vm1459, %v1543, %v1519
    %v1545 = vsel %vm1458, %v1452, %v1542
    %v1546 = vsel %vm1458, 0, %v1544
    %v1547 = vcosq.f32.pop %v1545
    %v1548 = vsinq.f32.pop %v1545
    %vm1549 = vweird.f32 %v1452
    %v1550 = vadd.s32 %v1546, 3
    %v1551 = vand.u32 %v1550, 3
    %vm1552 = vcmp.lt.s32.totalorder %v1551, 2
    %vm1553 = vcmp.eq.s32.totalorder %v1551, 0
    %v1554 = vxor.u32 %v1548, 2147483648
    %v1555 = vsel %vm1553, %v1547, %v1554
    %vm1556 = vcmp.eq.s32.totalorder %v1551, 2
    %v1557 = vxor.u32 %v1547, 2147483648
    %v1558 = vsel %vm1556, %v1557, %v1548
    %v1559 = vsel %vm1552, %v1555, %v1558
    %v1560 = vsel %vm1549, nan, %v1559
    %v1561 = vand.u32 2147483647, %v1452
    %vm1562 = vcmp.le.f32.partialorder %v1561, 0.7853982
    %vm1563 = vcmp.lt.s32.totalorder %v1452, 0
    %v1564 = vand.u32 %v1452, 2139095040
    %v1565 = vshrl.u32 %v1564, 23
    %v1566 = vsub.s32 %v1565, 127
    %v1567 = vand.u32 2147483647, %v1452
    %v1568 = vand.u32 %v1567, 8388607
    %v1569 = vor.u32 %v1568, 8388608
    %v1570 = vsub.s32 0, %v1569
    %v1571 = vadd.s32 %v1566, 1
    %vm1572 = vcmp.gt.s32.totalorder %v1571, 0
    %v1573 = vsel %vm1572, %v1571, 0
    %v1574 = vshrl.u32 %v1573, 5
    %v1575 = vand.u32 %v1573, 31
    %v1576 = vsub.s32 32, %v1575
    %v1577 = vshrl.u32 683565275, %v1576
    %v1578 = vshll.u32 683565275, %v1575
    %v1579 = vshrl.u32 2475754826, %v1576
    %v1580 = vor.u32 %v1578, %v1579
    %v1581 = vshll.u32 2475754826, %v1575
    %v1582 = vshrl.u32 2131351028, %v1576
    %v1583 = vor.u32 %v1581, %v1582
    %v1584 = vshll.u32 2131351028, %v1575
    %v1585 = vshrl.u32 2102212464, %v1576
    %v1586 = vor.u32 %v1584, %v1585
    %v1587 = vshll.u32 2102212464, %v1575
    %v1588 = vshrl.u32 920167782, %v1576
    %v1589 = vor.u32 %v1587, %v1588
    %v1590 = vshll.u32 920167782, %v1575
    %v1591 = vshrl.u32 1326507024, %v1576
    %v1592 = vor.u32 %v1590, %v1591
    %vm1593 = vcmp.lt.s32.totalorder %v1574, 1
    %vm1594 = vcmp.lt.s32.totalorder %v1574, 2
    %vm1595 = vcmp.lt.s32.totalorder %v1574, 3
    %vm1596 = vcmp.lt.s32.totalorder %v1574, 4
    %v1597 = vsel %vm1593, %v1577, %v1580
    %v1598 = vsel %vm1596, %v1586, 2102212464
    %v1599 = vsel %vm1595, %v1583, %v1598
    %v1600 = vsel %vm1594, %v1597, %v1599
    %v1601 = vsel %vm1593, %v1580, %v1583
    %v1602 = vsel %vm1596, %v1589, 920167782
    %v1603 = vsel %vm1595, %v1586, %v1602
    %v1604 = vsel %vm1594, %v1601, %v1603
    %v1605 = vsel %vm1593, %v1583, %v1586
    %v1606 = vsel %vm1596, %v1592, 1326507024
    %v1607 = vsel %vm1595, %v1589, %v1606
    %v1608 = vsel %vm1594, %v1605, %v1607
    %v1609 = vshll.u32 %v1569, 8
    %v1610 = vmul.u32.u64.compose %v1609, %v1608
    %v1611 = vextract.low.u32 %v1610
    %v1612 = vextract.high.u32 %v1610
    %v1613 = vmul.u32.u64.compose %v1609, %v1604
    %v1614 = vextract.low.u32 %v1613
    %v1615 = vextract.high.u32 %v1613
    %v1616 = vmul.u32 %v1609, %v1600
    %v1617 = vadd.s32 %v1612, %v1614
    %vm1618 = vc.u32 %v1612, %v1614
    %v1619 = vadd.s32 %v1615, 1
    %v1620 = vsel %vm1618, %v1619, %v1615
    %v1621 = vadd.s32 %v1616, %v1620
    %v1622 = vadd.s32 %v1621, 536870912
    %v1623 = vshrl.u32 %v1622, 30
    %v1624 = vshll.u32 %v1623, 30
    %v1625 = vsub.s32 %v1621, %v1624
    %vm1626 = vcmp.lt.s32.totalorder %v1625, 0
    %v1627 = vsub.s32 0, %v1625
    %v1628 = vsel %vm1626, %v1627, %v1625
    %v1629 = vclz %v1628
    %v1630 = vsub.s32 %v1629, 2
    %vm1631 = vcmp.gt.s32.totalorder 0, %v1630
    %v1632 = vsel %vm1631, 0, %v1630
    %v1633 = vsub.s32 32, %v1632
    %v1634 = vshll.u32 %v1625, %v1632
    %v1635 = vshrl.u32 %v1617, %v1633
    %v1636 = vor.u32 %v1634, %v1635
    %v1637 = vsub.s32 4294967266, %v1632
    %v1638 = vadd.s32 %v1637, 127
    %v1639 = vshll.u32 %v1638, 23
    %v1640 = vor.u32 4788187, %v1639
    %v1641 = vand.u32 2147483647, %v1640
    %v1643 = vcvt.s32.f32 %v1636
    %v1644 = vmul.f32 %v1643, %v1641
    %v1645 = vxor.u32 %v1644, 2147483648
    %v1646 = vsel %vm1563, %v1645, %v1644
    %v1647 = vsub.s32 4, %v1623
    %v1648 = vsel %vm1563, %v1647, %v1623
    %v1649 = vsel %vm1562, %v1452, %v1646
    %v1650 = vsel %vm1562, 0, %v1648
    %v1651 = vcosq.f32.pop %v1649
    %v1652 = vsinq.f32.pop %v1649
    %vm1653 = vweird.f32 %v1452
    %v1654 = vand.u32 %v1650, 3
    %vm1655 = vcmp.lt.s32.totalorder %v1654, 2
    %vm1656 = vcmp.eq.s32.totalorder %v1654, 0
    %v1657 = vxor.u32 %v1652, 2147483648
    %v1658 = vsel %vm1656, %v1651, %v1657
    %vm1659 = vcmp.eq.s32.totalorder %v1654, 2
    %v1660 = vxor.u32 %v1651, 2147483648
    %v1661 = vsel %vm1659, %v1660, %v1652
    %v1662 = vsel %vm1655, %v1658, %v1661
    %v1663 = vsel %vm1653, nan, %v1662
    %v1664 = vrcp.pop %v1663
    %v1665 = vmul.f32 %v1560, %v1664
    %v1666 = vmul.f32 %v994, %v1665
    %v1667 = vmul.f32 %v1666, 0.4
    %v1668 = vmax.f32 %v1667, -1.57
    %v1669 = vmin.f32 %v1668, 1.57
    %v1670 = vmul.f32 %v1669, 0.03
    %v1671 = vadd.f32 %v1670, %v1209
    %v1672 = vand.u32 2147483647, %v1671
    %vm1673 = vcmp.le.f32.partialorder %v1672, 0.7853982
    %vm1674 = vcmp.lt.s32.totalorder %v1671, 0
    %v1675 = vand.u32 %v1671, 2139095040
    %v1676 = vshrl.u32 %v1675, 23
    %v1677 = vsub.s32 %v1676, 127
    %v1678 = vand.u32 2147483647, %v1671
    %v1679 = vand.u32 %v1678, 8388607
    %v1680 = vor.u32 %v1679, 8388608
    %v1681 = vsub.s32 0, %v1680
    %v1682 = vadd.s32 %v1677, 1
    %vm1683 = vcmp.gt.s32.totalorder %v1682, 0
    %v1684 = vsel %vm1683, %v1682, 0
    %v1685 = vshrl.u32 %v1684, 5
    %v1686 = vand.u32 %v1684, 31
    %v1687 = vsub.s32 32, %v1686
    %v1688 = vshrl.u32 683565275, %v1687
    %v1689 = vshll.u32 683565275, %v1686
    %v1690 = vshrl.u32 2475754826, %v1687
    %v1691 = vor.u32 %v1689, %v1690
    %v1692 = vshll.u32 2475754826, %v1686
    %v1693 = vshrl.u32 2131351028, %v1687
    %v1694 = vor.u32 %v1692, %v1693
    %v1695 = vshll.u32 2131351028, %v1686
    %v1696 = vshrl.u32 2102212464, %v1687
    %v1697 = vor.u32 %v1695, %v1696
    %v1698 = vshll.u32 2102212464, %v1686
    %v1699 = vshrl.u32 920167782, %v1687
    %v1700 = vor.u32 %v1698, %v1699
    %v1701 = vshll.u32 920167782, %v1686
    %v1702 = vshrl.u32 1326507024, %v1687
    %v1703 = vor.u32 %v1701, %v1702
    %vm1704 = vcmp.lt.s32.totalorder %v1685, 1
    %vm1705 = vcmp.lt.s32.totalorder %v1685, 2
    %vm1706 = vcmp.lt.s32.totalorder %v1685, 3
    %vm1707 = vcmp.lt.s32.totalorder %v1685, 4
    %v1708 = vsel %vm1704, %v1688, %v1691
    %v1709 = vsel %vm1707, %v1697, 2102212464
    %v1710 = vsel %vm1706, %v1694, %v1709
    %v1711 = vsel %vm1705, %v1708, %v1710
    %v1712 = vsel %vm1704, %v1691, %v1694
    %v1713 = vsel %vm1707, %v1700, 920167782
    %v1714 = vsel %vm1706, %v1697, %v1713
    %v1715 = vsel %vm1705, %v1712, %v1714
    %v1716 = vsel %vm1704, %v1694, %v1697
    %v1717 = vsel %vm1707, %v1703, 1326507024
    %v1718 = vsel %vm1706, %v1700, %v1717
    %v1719 = vsel %vm1705, %v1716, %v1718
    %v1720 = vshll.u32 %v1680, 8
    %v1721 = vmul.u32.u64.compose %v1720, %v1719
    %v1722 = vextract.low.u32 %v1721
    %v1723 = vextract.high.u32 %v1721
    %v1724 = vmul.u32.u64.compose %v1720, %v1715
    %v1725 = vextract.low.u32 %v1724
    %v1726 = vextract.high.u32 %v1724
    %v1727 = vmul.u32 %v1720, %v1711
    %v1728 = vadd.s32 %v1723, %v1725
    %vm1729 = vc.u32 %v1723, %v1725
    %v1730 = vadd.s32 %v1726, 1
    %v1731 = vsel %vm1729, %v1730, %v1726
    %v1732 = vadd.s32 %v1727, %v1731
    %v1733 = vadd.s32 %v1732, 536870912
    %v1734 = vshrl.u32 %v1733, 30
    %v1735 = vshll.u32 %v1734, 30
    %v1736 = vsub.s32 %v1732, %v1735
    %vm1737 = vcmp.lt.s32.totalorder %v1736, 0
    %v1738 = vsub.s32 0, %v1736
    %v1739 = vsel %vm1737, %v1738, %v1736
    %v1740 = vclz %v1739
    %v1741 = vsub.s32 %v1740, 2
    %vm1742 = vcmp.gt.s32.totalorder 0, %v1741
    %v1743 = vsel %vm1742, 0, %v1741
    %v1744 = vsub.s32 32, %v1743
    %v1745 = vshll.u32 %v1736, %v1743
    %v1746 = vshrl.u32 %v1728, %v1744
    %v1747 = vor.u32 %v1745, %v1746
    %v1748 = vsub.s32 4294967266, %v1743
    %v1749 = vadd.s32 %v1748, 127
    %v1750 = vshll.u32 %v1749, 23
    %v1751 = vor.u32 4788187, %v1750
    %v1752 = vand.u32 2147483647, %v1751
    %v1754 = vcvt.s32.f32 %v1747
    %v1755 = vmul.f32 %v1754, %v1752
    %v1756 = vxor.u32 %v1755, 2147483648
    %v1757 = vsel %vm1674, %v1756, %v1755
    %v1758 = vsub.s32 4, %v1734
    %v1759 = vsel %vm1674, %v1758, %v1734
    %v1760 = vsel %vm1673, %v1671, %v1757
    %v1761 = vsel %vm1673, 0, %v1759
    %v1762 = vcosq.f32.pop %v1760
    %v1763 = vsinq.f32.pop %v1760
    %vm1764 = vweird.f32 %v1671
    %v1765 = vand.u32 %v1761, 3
    %vm1766 = vcmp.lt.s32.totalorder %v1765, 2
    %vm1767 = vcmp.eq.s32.totalorder %v1765, 0
    %v1768 = vxor.u32 %v1763, 2147483648
    %v1769 = vsel %vm1767, %v1762, %v1768
    %vm1770 = vcmp.eq.s32.totalorder %v1765, 2
    %v1771 = vxor.u32 %v1762, 2147483648
    %v1772 = vsel %vm1770, %v1771, %v1763
    %v1773 = vsel %vm1766, %v1769, %v1772
    %v1774 = vsel %vm1764, nan, %v1773
    %v1775 = vmul.f32 %v1456, %v1774
    %v1776 = vmul.f32 %v1775, 0.03
    %v1777 = vadd.f32 %v1776, %v1315
    %v1778 = vand.u32 2147483647, %v1671
    %vm1779 = vcmp.le.f32.partialorder %v1778, 0.7853982
    %vm1780 = vcmp.lt.s32.totalorder %v1671, 0
    %v1781 = vand.u32 %v1671, 2139095040
    %v1782 = vshrl.u32 %v1781, 23
    %v1783 = vsub.s32 %v1782, 127
    %v1784 = vand.u32 2147483647, %v1671
    %v1785 = vand.u32 %v1784, 8388607
    %v1786 = vor.u32 %v1785, 8388608
    %v1787 = vsub.s32 0, %v1786
    %v1788 = vadd.s32 %v1783, 1
    %vm1789 = vcmp.gt.s32.totalorder %v1788, 0
    %v1790 = vsel %vm1789, %v1788, 0
    %v1791 = vshrl.u32 %v1790, 5
    %v1792 = vand.u32 %v1790, 31
    %v1793 = vsub.s32 32, %v1792
    %v1794 = vshrl.u32 683565275, %v1793
    %v1795 = vshll.u32 683565275, %v1792
    %v1796 = vshrl.u32 2475754826, %v1793
    %v1797 = vor.u32 %v1795, %v1796
    %v1798 = vshll.u32 2475754826, %v1792
    %v1799 = vshrl.u32 2131351028, %v1793
    %v1800 = vor.u32 %v1798, %v1799
    %v1801 = vshll.u32 2131351028, %v1792
    %v1802 = vshrl.u32 2102212464, %v1793
    %v1803 = vor.u32 %v1801, %v1802
    %v1804 = vshll.u32 2102212464, %v1792
    %v1805 = vshrl.u32 920167782, %v1793
    %v1806 = vor.u32 %v1804, %v1805
    %v1807 = vshll.u32 920167782, %v1792
    %v1808 = vshrl.u32 1326507024, %v1793
    %v1809 = vor.u32 %v1807, %v1808
    %vm1810 = vcmp.lt.s32.totalorder %v1791, 1
    %vm1811 = vcmp.lt.s32.totalorder %v1791, 2
    %vm1812 = vcmp.lt.s32.totalorder %v1791, 3
    %vm1813 = vcmp.lt.s32.totalorder %v1791, 4
    %v1814 = vsel %vm1810, %v1794, %v1797
    %v1815 = vsel %vm1813, %v1803, 2102212464
    %v1816 = vsel %vm1812, %v1800, %v1815
    %v1817 = vsel %vm1811, %v1814, %v1816
    %v1818 = vsel %vm1810, %v1797, %v1800
    %v1819 = vsel %vm1813, %v1806, 920167782
    %v1820 = vsel %vm1812, %v1803, %v1819
    %v1821 = vsel %vm1811, %v1818, %v1820
    %v1822 = vsel %vm1810, %v1800, %v1803
    %v1823 = vsel %vm1813, %v1809, 1326507024
    %v1824 = vsel %vm1812, %v1806, %v1823
    %v1825 = vsel %vm1811, %v1822, %v1824
    %v1826 = vshll.u32 %v1786, 8
    %v1827 = vmul.u32.u64.compose %v1826, %v1825
    %v1828 = vextract.low.u32 %v1827
    %v1829 = vextract.high.u32 %v1827
    %v1830 = vmul.u32.u64.compose %v1826, %v1821
    %v1831 = vextract.low.u32 %v1830
    %v1832 = vextract.high.u32 %v1830
    %v1833 = vmul.u32 %v1826, %v1817
    %v1834 = vadd.s32 %v1829, %v1831
    %vm1835 = vc.u32 %v1829, %v1831
    %v1836 = vadd.s32 %v1832, 1
    %v1837 = vsel %vm1835, %v1836, %v1832
    %v1838 = vadd.s32 %v1833, %v1837
    %v1839 = vadd.s32 %v1838, 536870912
    %v1840 = vshrl.u32 %v1839, 30
    %v1841 = vshll.u32 %v1840, 30
    %v1842 = vsub.s32 %v1838, %v1841
    %vm1843 = vcmp.lt.s32.totalorder %v1842, 0
    %v1844 = vsub.s32 0, %v1842
    %v1845 = vsel %vm1843, %v1844, %v1842
    %v1846 = vclz %v1845
    %v1847 = vsub.s32 %v1846, 2
    %vm1848 = vcmp.gt.s32.totalorder 0, %v1847
    %v1849 = vsel %vm1848, 0, %v1847
    %v1850 = vsub.s32 32, %v1849
    %v1851 = vshll.u32 %v1842, %v1849
    %v1852 = vshrl.u32 %v1834, %v1850
    %v1853 = vor.u32 %v1851, %v1852
    %v1854 = vsub.s32 4294967266, %v1849
    %v1855 = vadd.s32 %v1854, 127
    %v1856 = vshll.u32 %v1855, 23
    %v1857 = vor.u32 4788187, %v1856
    %v1858 = vand.u32 2147483647, %v1857
    %v1860 = vcvt.s32.f32 %v1853
    %v1861 = vmul.f32 %v1860, %v1858
    %v1862 = vxor.u32 %v1861, 2147483648
    %v1863 = vsel %vm1780, %v1862, %v1861
    %v1864 = vsub.s32 4, %v1840
    %v1865 = vsel %vm1780, %v1864, %v1840
    %v1866 = vsel %vm1779, %v1671, %v1863
    %v1867 = vsel %vm1779, 0, %v1865
    %v1868 = vcosq.f32.pop %v1866
    %v1869 = vsinq.f32.pop %v1866
    %vm1870 = vweird.f32 %v1671
    %v1871 = vadd.s32 %v1867, 3
    %v1872 = vand.u32 %v1871, 3
    %vm1873 = vcmp.lt.s32.totalorder %v1872, 2
    %vm1874 = vcmp.eq.s32.totalorder %v1872, 0
    %v1875 = vxor.u32 %v1869, 2147483648
    %v1876 = vsel %vm1874, %v1868, %v1875
    %vm1877 = vcmp.eq.s32.totalorder %v1872, 2
    %v1878 = vxor.u32 %v1868, 2147483648
    %v1879 = vsel %vm1877, %v1878, %v1869
    %v1880 = vsel %vm1873, %v1876, %v1879
    %v1881 = vsel %vm1870, nan, %v1880
    %v1882 = vmul.f32 %v1456, %v1881
    %v1883 = vmul.f32 %v1882, 0.03
    %v1884 = vadd.f32 %v1883, %v1422
    %s1885 = scalar_lea.vmem [#allocation7], 18
    %1886 = vst [vmem:[%s1885] sm:$0x1] %v1777
    %s1887 = scalar_lea.vmem [#allocation7], 19
    %1888 = vst [vmem:[%s1887] sm:$0x1] %v1884
    %s1889 = scalar_lea.vmem [#allocation7], 20
    %1890 = vst [vmem:[%s1889] sm:$0x1] %v1671
    %s1891 = scalar_lea.vmem [#allocation7], 21
    %1892 = vst [vmem:[%s1891] sm:$0x1] %v1456
    %s1893 = scalar_lea.vmem [#allocation7], 22
    %1894 = vst [vmem:[%s1893] sm:$0x1] %v1448
    %s1895 = scalar_lea.vmem [#allocation7], 23
    %1896 = vst [vmem:[%s1895] sm:$0x1] %v1452
    %s1897 = scalar_lea.vmem [#allocation2], 4
    %v1898 = vld [vmem:[%s1897] sm:$0x1]
    %s1899 = scalar_lea.vmem [#allocation2], 12
    %v1900 = vld [vmem:[%s1899] sm:$0x1]
    %v1901 = vmul.f32 %v1898, 4.0
    %v1902 = vmax.f32 %v1901, -4.0
    %v1903 = vmin.f32 %v1902, 4.0
    %v1904 = vmul.f32 %v1900, 0.5
    %v1905 = vmax.f32 %v1904, -0.5
    %v1906 = vmin.f32 %v1905, 0.5
    %v1907 = vmul.f32 %v1903, 0.03
    %v1908 = vadd.f32 %v1448, %v1907
    %v1909 = vmax.f32 %v1908, -5.0
    %v1910 = vmin.f32 %v1909, 5.0
    %v1911 = vmul.f32 %v1906, 0.03
    %v1912 = vadd.f32 %v1452, %v1911
    %v1913 = vmax.f32 %v1912, -0.5
    %v1914 = vmin.f32 %v1913, 0.5
    %v1915 = vmul.f32 %v1910, 0.03
    %v1916 = vadd.f32 %v1456, %v1915
    %v1917 = vmax.f32 %v1916, 0.0
    %v1918 = vmin.f32 %v1917, 10.0
    %v1919 = vand.u32 2147483647, %v1914
    %vm1920 = vcmp.le.f32.partialorder %v1919, 0.7853982
    %vm1921 = vcmp.lt.s32.totalorder %v1914, 0
    %v1922 = vand.u32 %v1914, 2139095040
    %v1923 = vshrl.u32 %v1922, 23
    %v1924 = vsub.s32 %v1923, 127
    %v1925 = vand.u32 2147483647, %v1914
    %v1926 = vand.u32 %v1925, 8388607
    %v1927 = vor.u32 %v1926, 8388608
    %v1928 = vsub.s32 0, %v1927
    %v1929 = vadd.s32 %v1924, 1
    %vm1930 = vcmp.gt.s32.totalorder %v1929, 0
    %v1931 = vsel %vm1930, %v1929, 0
    %v1932 = vshrl.u32 %v1931, 5
    %v1933 = vand.u32 %v1931, 31
    %v1934 = vsub.s32 32, %v1933
    %v1935 = vshrl.u32 683565275, %v1934
    %v1936 = vshll.u32 683565275, %v1933
    %v1937 = vshrl.u32 2475754826, %v1934
    %v1938 = vor.u32 %v1936, %v1937
    %v1939 = vshll.u32 2475754826, %v1933
    %v1940 = vshrl.u32 2131351028, %v1934
    %v1941 = vor.u32 %v1939, %v1940
    %v1942 = vshll.u32 2131351028, %v1933
    %v1943 = vshrl.u32 2102212464, %v1934
    %v1944 = vor.u32 %v1942, %v1943
    %v1945 = vshll.u32 2102212464, %v1933
    %v1946 = vshrl.u32 920167782, %v1934
    %v1947 = vor.u32 %v1945, %v1946
    %v1948 = vshll.u32 920167782, %v1933
    %v1949 = vshrl.u32 1326507024, %v1934
    %v1950 = vor.u32 %v1948, %v1949
    %vm1951 = vcmp.lt.s32.totalorder %v1932, 1
    %vm1952 = vcmp.lt.s32.totalorder %v1932, 2
    %vm1953 = vcmp.lt.s32.totalorder %v1932, 3
    %vm1954 = vcmp.lt.s32.totalorder %v1932, 4
    %v1955 = vsel %vm1951, %v1935, %v1938
    %v1956 = vsel %vm1954, %v1944, 2102212464
    %v1957 = vsel %vm1953, %v1941, %v1956
    %v1958 = vsel %vm1952, %v1955, %v1957
    %v1959 = vsel %vm1951, %v1938, %v1941
    %v1960 = vsel %vm1954, %v1947, 920167782
    %v1961 = vsel %vm1953, %v1944, %v1960
    %v1962 = vsel %vm1952, %v1959, %v1961
    %v1963 = vsel %vm1951, %v1941, %v1944
    %v1964 = vsel %vm1954, %v1950, 1326507024
    %v1965 = vsel %vm1953, %v1947, %v1964
    %v1966 = vsel %vm1952, %v1963, %v1965
    %v1967 = vshll.u32 %v1927, 8
    %v1968 = vmul.u32.u64.compose %v1967, %v1966
    %v1969 = vextract.low.u32 %v1968
    %v1970 = vextract.high.u32 %v1968
    %v1971 = vmul.u32.u64.compose %v1967, %v1962
    %v1972 = vextract.low.u32 %v1971
    %v1973 = vextract.high.u32 %v1971
    %v1974 = vmul.u32 %v1967, %v1958
    %v1975 = vadd.s32 %v1970, %v1972
    %vm1976 = vc.u32 %v1970, %v1972
    %v1977 = vadd.s32 %v1973, 1
    %v1978 = vsel %vm1976, %v1977, %v1973
    %v1979 = vadd.s32 %v1974, %v1978
    %v1980 = vadd.s32 %v1979, 536870912
    %v1981 = vshrl.u32 %v1980, 30
    %v1982 = vshll.u32 %v1981, 30
    %v1983 = vsub.s32 %v1979, %v1982
    %vm1984 = vcmp.lt.s32.totalorder %v1983, 0
    %v1985 = vsub.s32 0, %v1983
    %v1986 = vsel %vm1984, %v1985, %v1983
    %v1987 = vclz %v1986
    %v1988 = vsub.s32 %v1987, 2
    %vm1989 = vcmp.gt.s32.totalorder 0, %v1988
    %v1990 = vsel %vm1989, 0, %v1988
    %v1991 = vsub.s32 32, %v1990
    %v1992 = vshll.u32 %v1983, %v1990
    %v1993 = vshrl.u32 %v1975, %v1991
    %v1994 = vor.u32 %v1992, %v1993
    %v1995 = vsub.s32 4294967266, %v1990
    %v1996 = vadd.s32 %v1995, 127
    %v1997 = vshll.u32 %v1996, 23
    %v1998 = vor.u32 4788187, %v1997
    %v1999 = vand.u32 2147483647, %v1998
    %v2001 = vcvt.s32.f32 %v1994
    %v2002 = vmul.f32 %v2001, %v1999
    %v2003 = vxor.u32 %v2002, 2147483648
    %v2004 = vsel %vm1921, %v2003, %v2002
    %v2005 = vsub.s32 4, %v1981
    %v2006 = vsel %vm1921, %v2005, %v1981
    %v2007 = vsel %vm1920, %v1914, %v2004
    %v2008 = vsel %vm1920, 0, %v2006
    %v2009 = vcosq.f32.pop %v2007
    %v2010 = vsinq.f32.pop %v2007
    %vm2011 = vweird.f32 %v1914
    %v2012 = vadd.s32 %v2008, 3
    %v2013 = vand.u32 %v2012, 3
    %vm2014 = vcmp.lt.s32.totalorder %v2013, 2
    %vm2015 = vcmp.eq.s32.totalorder %v2013, 0
    %v2016 = vxor.u32 %v2010, 2147483648
    %v2017 = vsel %vm2015, %v2009, %v2016
    %vm2018 = vcmp.eq.s32.totalorder %v2013, 2
    %v2019 = vxor.u32 %v2009, 2147483648
    %v2020 = vsel %vm2018, %v2019, %v2010
    %v2021 = vsel %vm2014, %v2017, %v2020
    %v2022 = vsel %vm2011, nan, %v2021
    %v2023 = vand.u32 2147483647, %v1914
    %vm2024 = vcmp.le.f32.partialorder %v2023, 0.7853982
    %vm2025 = vcmp.lt.s32.totalorder %v1914, 0
    %v2026 = vand.u32 %v1914, 2139095040
    %v2027 = vshrl.u32 %v2026, 23
    %v2028 = vsub.s32 %v2027, 127
    %v2029 = vand.u32 2147483647, %v1914
    %v2030 = vand.u32 %v2029, 8388607
    %v2031 = vor.u32 %v2030, 8388608
    %v2032 = vsub.s32 0, %v2031
    %v2033 = vadd.s32 %v2028, 1
    %vm2034 = vcmp.gt.s32.totalorder %v2033, 0
    %v2035 = vsel %vm2034, %v2033, 0
    %v2036 = vshrl.u32 %v2035, 5
    %v2037 = vand.u32 %v2035, 31
    %v2038 = vsub.s32 32, %v2037
    %v2039 = vshrl.u32 683565275, %v2038
    %v2040 = vshll.u32 683565275, %v2037
    %v2041 = vshrl.u32 2475754826, %v2038
    %v2042 = vor.u32 %v2040, %v2041
    %v2043 = vshll.u32 2475754826, %v2037
    %v2044 = vshrl.u32 2131351028, %v2038
    %v2045 = vor.u32 %v2043, %v2044
    %v2046 = vshll.u32 2131351028, %v2037
    %v2047 = vshrl.u32 2102212464, %v2038
    %v2048 = vor.u32 %v2046, %v2047
    %v2049 = vshll.u32 2102212464, %v2037
    %v2050 = vshrl.u32 920167782, %v2038
    %v2051 = vor.u32 %v2049, %v2050
    %v2052 = vshll.u32 920167782, %v2037
    %v2053 = vshrl.u32 1326507024, %v2038
    %v2054 = vor.u32 %v2052, %v2053
    %vm2055 = vcmp.lt.s32.totalorder %v2036, 1
    %vm2056 = vcmp.lt.s32.totalorder %v2036, 2
    %vm2057 = vcmp.lt.s32.totalorder %v2036, 3
    %vm2058 = vcmp.lt.s32.totalorder %v2036, 4
    %v2059 = vsel %vm2055, %v2039, %v2042
    %v2060 = vsel %vm2058, %v2048, 2102212464
    %v2061 = vsel %vm2057, %v2045, %v2060
    %v2062 = vsel %vm2056, %v2059, %v2061
    %v2063 = vsel %vm2055, %v2042, %v2045
    %v2064 = vsel %vm2058, %v2051, 920167782
    %v2065 = vsel %vm2057, %v2048, %v2064
    %v2066 = vsel %vm2056, %v2063, %v2065
    %v2067 = vsel %vm2055, %v2045, %v2048
    %v2068 = vsel %vm2058, %v2054, 1326507024
    %v2069 = vsel %vm2057, %v2051, %v2068
    %v2070 = vsel %vm2056, %v2067, %v2069
    %v2071 = vshll.u32 %v2031, 8
    %v2072 = vmul.u32.u64.compose %v2071, %v2070
    %v2073 = vextract.low.u32 %v2072
    %v2074 = vextract.high.u32 %v2072
    %v2075 = vmul.u32.u64.compose %v2071, %v2066
    %v2076 = vextract.low.u32 %v2075
    %v2077 = vextract.high.u32 %v2075
    %v2078 = vmul.u32 %v2071, %v2062
    %v2079 = vadd.s32 %v2074, %v2076
    %vm2080 = vc.u32 %v2074, %v2076
    %v2081 = vadd.s32 %v2077, 1
    %v2082 = vsel %vm2080, %v2081, %v2077
    %v2083 = vadd.s32 %v2078, %v2082
    %v2084 = vadd.s32 %v2083, 536870912
    %v2085 = vshrl.u32 %v2084, 30
    %v2086 = vshll.u32 %v2085, 30
    %v2087 = vsub.s32 %v2083, %v2086
    %vm2088 = vcmp.lt.s32.totalorder %v2087, 0
    %v2089 = vsub.s32 0, %v2087
    %v2090 = vsel %vm2088, %v2089, %v2087
    %v2091 = vclz %v2090
    %v2092 = vsub.s32 %v2091, 2
    %vm2093 = vcmp.gt.s32.totalorder 0, %v2092
    %v2094 = vsel %vm2093, 0, %v2092
    %v2095 = vsub.s32 32, %v2094
    %v2096 = vshll.u32 %v2087, %v2094
    %v2097 = vshrl.u32 %v2079, %v2095
    %v2098 = vor.u32 %v2096, %v2097
    %v2099 = vsub.s32 4294967266, %v2094
    %v2100 = vadd.s32 %v2099, 127
    %v2101 = vshll.u32 %v2100, 23
    %v2102 = vor.u32 4788187, %v2101
    %v2103 = vand.u32 2147483647, %v2102
    %v2105 = vcvt.s32.f32 %v2098
    %v2106 = vmul.f32 %v2105, %v2103
    %v2107 = vxor.u32 %v2106, 2147483648
    %v2108 = vsel %vm2025, %v2107, %v2106
    %v2109 = vsub.s32 4, %v2085
    %v2110 = vsel %vm2025, %v2109, %v2085
    %v2111 = vsel %vm2024, %v1914, %v2108
    %v2112 = vsel %vm2024, 0, %v2110
    %v2113 = vcosq.f32.pop %v2111
    %v2114 = vsinq.f32.pop %v2111
    %vm2115 = vweird.f32 %v1914
    %v2116 = vand.u32 %v2112, 3
    %vm2117 = vcmp.lt.s32.totalorder %v2116, 2
    %vm2118 = vcmp.eq.s32.totalorder %v2116, 0
    %v2119 = vxor.u32 %v2114, 2147483648
    %v2120 = vsel %vm2118, %v2113, %v2119
    %vm2121 = vcmp.eq.s32.totalorder %v2116, 2
    %v2122 = vxor.u32 %v2113, 2147483648
    %v2123 = vsel %vm2121, %v2122, %v2114
    %v2124 = vsel %vm2117, %v2120, %v2123
    %v2125 = vsel %vm2115, nan, %v2124
    %v2126 = vrcp.pop %v2125
    %v2127 = vmul.f32 %v2022, %v2126
    %v2128 = vmul.f32 %v1456, %v2127
    %v2129 = vmul.f32 %v2128, 0.4
    %v2130 = vmax.f32 %v2129, -1.57
    %v2131 = vmin.f32 %v2130, 1.57
    %v2132 = vmul.f32 %v2131, 0.03
    %v2133 = vadd.f32 %v2132, %v1671
    %v2134 = vand.u32 2147483647, %v2133
    %vm2135 = vcmp.le.f32.partialorder %v2134, 0.7853982
    %vm2136 = vcmp.lt.s32.totalorder %v2133, 0
    %v2137 = vand.u32 %v2133, 2139095040
    %v2138 = vshrl.u32 %v2137, 23
    %v2139 = vsub.s32 %v2138, 127
    %v2140 = vand.u32 2147483647, %v2133
    %v2141 = vand.u32 %v2140, 8388607
    %v2142 = vor.u32 %v2141, 8388608
    %v2143 = vsub.s32 0, %v2142
    %v2144 = vadd.s32 %v2139, 1
    %vm2145 = vcmp.gt.s32.totalorder %v2144, 0
    %v2146 = vsel %vm2145, %v2144, 0
    %v2147 = vshrl.u32 %v2146, 5
    %v2148 = vand.u32 %v2146, 31
    %v2149 = vsub.s32 32, %v2148
    %v2150 = vshrl.u32 683565275, %v2149
    %v2151 = vshll.u32 683565275, %v2148
    %v2152 = vshrl.u32 2475754826, %v2149
    %v2153 = vor.u32 %v2151, %v2152
    %v2154 = vshll.u32 2475754826, %v2148
    %v2155 = vshrl.u32 2131351028, %v2149
    %v2156 = vor.u32 %v2154, %v2155
    %v2157 = vshll.u32 2131351028, %v2148
    %v2158 = vshrl.u32 2102212464, %v2149
    %v2159 = vor.u32 %v2157, %v2158
    %v2160 = vshll.u32 2102212464, %v2148
    %v2161 = vshrl.u32 920167782, %v2149
    %v2162 = vor.u32 %v2160, %v2161
    %v2163 = vshll.u32 920167782, %v2148
    %v2164 = vshrl.u32 1326507024, %v2149
    %v2165 = vor.u32 %v2163, %v2164
    %vm2166 = vcmp.lt.s32.totalorder %v2147, 1
    %vm2167 = vcmp.lt.s32.totalorder %v2147, 2
    %vm2168 = vcmp.lt.s32.totalorder %v2147, 3
    %vm2169 = vcmp.lt.s32.totalorder %v2147, 4
    %v2170 = vsel %vm2166, %v2150, %v2153
    %v2171 = vsel %vm2169, %v2159, 2102212464
    %v2172 = vsel %vm2168, %v2156, %v2171
    %v2173 = vsel %vm2167, %v2170, %v2172
    %v2174 = vsel %vm2166, %v2153, %v2156
    %v2175 = vsel %vm2169, %v2162, 920167782
    %v2176 = vsel %vm2168, %v2159, %v2175
    %v2177 = vsel %vm2167, %v2174, %v2176
    %v2178 = vsel %vm2166, %v2156, %v2159
    %v2179 = vsel %vm2169, %v2165, 1326507024
    %v2180 = vsel %vm2168, %v2162, %v2179
    %v2181 = vsel %vm2167, %v2178, %v2180
    %v2182 = vshll.u32 %v2142, 8
    %v2183 = vmul.u32.u64.compose %v2182, %v2181
    %v2184 = vextract.low.u32 %v2183
    %v2185 = vextract.high.u32 %v2183
    %v2186 = vmul.u32.u64.compose %v2182, %v2177
    %v2187 = vextract.low.u32 %v2186
    %v2188 = vextract.high.u32 %v2186
    %v2189 = vmul.u32 %v2182, %v2173
    %v2190 = vadd.s32 %v2185, %v2187
    %vm2191 = vc.u32 %v2185, %v2187
    %v2192 = vadd.s32 %v2188, 1
    %v2193 = vsel %vm2191, %v2192, %v2188
    %v2194 = vadd.s32 %v2189, %v2193
    %v2195 = vadd.s32 %v2194, 536870912
    %v2196 = vshrl.u32 %v2195, 30
    %v2197 = vshll.u32 %v2196, 30
    %v2198 = vsub.s32 %v2194, %v2197
    %vm2199 = vcmp.lt.s32.totalorder %v2198, 0
    %v2200 = vsub.s32 0, %v2198
    %v2201 = vsel %vm2199, %v2200, %v2198
    %v2202 = vclz %v2201
    %v2203 = vsub.s32 %v2202, 2
    %vm2204 = vcmp.gt.s32.totalorder 0, %v2203
    %v2205 = vsel %vm2204, 0, %v2203
    %v2206 = vsub.s32 32, %v2205
    %v2207 = vshll.u32 %v2198, %v2205
    %v2208 = vshrl.u32 %v2190, %v2206
    %v2209 = vor.u32 %v2207, %v2208
    %v2210 = vsub.s32 4294967266, %v2205
    %v2211 = vadd.s32 %v2210, 127
    %v2212 = vshll.u32 %v2211, 23
    %v2213 = vor.u32 4788187, %v2212
    %v2214 = vand.u32 2147483647, %v2213
    %v2216 = vcvt.s32.f32 %v2209
    %v2217 = vmul.f32 %v2216, %v2214
    %v2218 = vxor.u32 %v2217, 2147483648
    %v2219 = vsel %vm2136, %v2218, %v2217
    %v2220 = vsub.s32 4, %v2196
    %v2221 = vsel %vm2136, %v2220, %v2196
    %v2222 = vsel %vm2135, %v2133, %v2219
    %v2223 = vsel %vm2135, 0, %v2221
    %v2224 = vcosq.f32.pop %v2222
    %v2225 = vsinq.f32.pop %v2222
    %vm2226 = vweird.f32 %v2133
    %v2227 = vand.u32 %v2223, 3
    %vm2228 = vcmp.lt.s32.totalorder %v2227, 2
    %vm2229 = vcmp.eq.s32.totalorder %v2227, 0
    %v2230 = vxor.u32 %v2225, 2147483648
    %v2231 = vsel %vm2229, %v2224, %v2230
    %vm2232 = vcmp.eq.s32.totalorder %v2227, 2
    %v2233 = vxor.u32 %v2224, 2147483648
    %v2234 = vsel %vm2232, %v2233, %v2225
    %v2235 = vsel %vm2228, %v2231, %v2234
    %v2236 = vsel %vm2226, nan, %v2235
    %v2237 = vmul.f32 %v1918, %v2236
    %v2238 = vmul.f32 %v2237, 0.03
    %v2239 = vadd.f32 %v2238, %v1777
    %v2240 = vand.u32 2147483647, %v2133
    %vm2241 = vcmp.le.f32.partialorder %v2240, 0.7853982
    %vm2242 = vcmp.lt.s32.totalorder %v2133, 0
    %v2243 = vand.u32 %v2133, 2139095040
    %v2244 = vshrl.u32 %v2243, 23
    %v2245 = vsub.s32 %v2244, 127
    %v2246 = vand.u32 2147483647, %v2133
    %v2247 = vand.u32 %v2246, 8388607
    %v2248 = vor.u32 %v2247, 8388608
    %v2249 = vsub.s32 0, %v2248
    %v2250 = vadd.s32 %v2245, 1
    %vm2251 = vcmp.gt.s32.totalorder %v2250, 0
    %v2252 = vsel %vm2251, %v2250, 0
    %v2253 = vshrl.u32 %v2252, 5
    %v2254 = vand.u32 %v2252, 31
    %v2255 = vsub.s32 32, %v2254
    %v2256 = vshrl.u32 683565275, %v2255
    %v2257 = vshll.u32 683565275, %v2254
    %v2258 = vshrl.u32 2475754826, %v2255
    %v2259 = vor.u32 %v2257, %v2258
    %v2260 = vshll.u32 2475754826, %v2254
    %v2261 = vshrl.u32 2131351028, %v2255
    %v2262 = vor.u32 %v2260, %v2261
    %v2263 = vshll.u32 2131351028, %v2254
    %v2264 = vshrl.u32 2102212464, %v2255
    %v2265 = vor.u32 %v2263, %v2264
    %v2266 = vshll.u32 2102212464, %v2254
    %v2267 = vshrl.u32 920167782, %v2255
    %v2268 = vor.u32 %v2266, %v2267
    %v2269 = vshll.u32 920167782, %v2254
    %v2270 = vshrl.u32 1326507024, %v2255
    %v2271 = vor.u32 %v2269, %v2270
    %vm2272 = vcmp.lt.s32.totalorder %v2253, 1
    %vm2273 = vcmp.lt.s32.totalorder %v2253, 2
    %vm2274 = vcmp.lt.s32.totalorder %v2253, 3
    %vm2275 = vcmp.lt.s32.totalorder %v2253, 4
    %v2276 = vsel %vm2272, %v2256, %v2259
    %v2277 = vsel %vm2275, %v2265, 2102212464
    %v2278 = vsel %vm2274, %v2262, %v2277
    %v2279 = vsel %vm2273, %v2276, %v2278
    %v2280 = vsel %vm2272, %v2259, %v2262
    %v2281 = vsel %vm2275, %v2268, 920167782
    %v2282 = vsel %vm2274, %v2265, %v2281
    %v2283 = vsel %vm2273, %v2280, %v2282
    %v2284 = vsel %vm2272, %v2262, %v2265
    %v2285 = vsel %vm2275, %v2271, 1326507024
    %v2286 = vsel %vm2274, %v2268, %v2285
    %v2287 = vsel %vm2273, %v2284, %v2286
    %v2288 = vshll.u32 %v2248, 8
    %v2289 = vmul.u32.u64.compose %v2288, %v2287
    %v2290 = vextract.low.u32 %v2289
    %v2291 = vextract.high.u32 %v2289
    %v2292 = vmul.u32.u64.compose %v2288, %v2283
    %v2293 = vextract.low.u32 %v2292
    %v2294 = vextract.high.u32 %v2292
    %v2295 = vmul.u32 %v2288, %v2279
    %v2296 = vadd.s32 %v2291, %v2293
    %vm2297 = vc.u32 %v2291, %v2293
    %v2298 = vadd.s32 %v2294, 1
    %v2299 = vsel %vm2297, %v2298, %v2294
    %v2300 = vadd.s32 %v2295, %v2299
    %v2301 = vadd.s32 %v2300, 536870912
    %v2302 = vshrl.u32 %v2301, 30
    %v2303 = vshll.u32 %v2302, 30
    %v2304 = vsub.s32 %v2300, %v2303
    %vm2305 = vcmp.lt.s32.totalorder %v2304, 0
    %v2306 = vsub.s32 0, %v2304
    %v2307 = vsel %vm2305, %v2306, %v2304
    %v2308 = vclz %v2307
    %v2309 = vsub.s32 %v2308, 2
    %vm2310 = vcmp.gt.s32.totalorder 0, %v2309
    %v2311 = vsel %vm2310, 0, %v2309
    %v2312 = vsub.s32 32, %v2311
    %v2313 = vshll.u32 %v2304, %v2311
    %v2314 = vshrl.u32 %v2296, %v2312
    %v2315 = vor.u32 %v2313, %v2314
    %v2316 = vsub.s32 4294967266, %v2311
    %v2317 = vadd.s32 %v2316, 127
    %v2318 = vshll.u32 %v2317, 23
    %v2319 = vor.u32 4788187, %v2318
    %v2320 = vand.u32 2147483647, %v2319
    %v2322 = vcvt.s32.f32 %v2315
    %v2323 = vmul.f32 %v2322, %v2320
    %v2324 = vxor.u32 %v2323, 2147483648
    %v2325 = vsel %vm2242, %v2324, %v2323
    %v2326 = vsub.s32 4, %v2302
    %v2327 = vsel %vm2242, %v2326, %v2302
    %v2328 = vsel %vm2241, %v2133, %v2325
    %v2329 = vsel %vm2241, 0, %v2327
    %v2330 = vcosq.f32.pop %v2328
    %v2331 = vsinq.f32.pop %v2328
    %vm2332 = vweird.f32 %v2133
    %v2333 = vadd.s32 %v2329, 3
    %v2334 = vand.u32 %v2333, 3
    %vm2335 = vcmp.lt.s32.totalorder %v2334, 2
    %vm2336 = vcmp.eq.s32.totalorder %v2334, 0
    %v2337 = vxor.u32 %v2331, 2147483648
    %v2338 = vsel %vm2336, %v2330, %v2337
    %vm2339 = vcmp.eq.s32.totalorder %v2334, 2
    %v2340 = vxor.u32 %v2330, 2147483648
    %v2341 = vsel %vm2339, %v2340, %v2331
    %v2342 = vsel %vm2335, %v2338, %v2341
    %v2343 = vsel %vm2332, nan, %v2342
    %v2344 = vmul.f32 %v1918, %v2343
    %v2345 = vmul.f32 %v2344, 0.03
    %v2346 = vadd.f32 %v2345, %v1884
    %s2347 = scalar_lea.vmem [#allocation7], 24
    %2348 = vst [vmem:[%s2347] sm:$0x1] %v2239
    %s2349 = scalar_lea.vmem [#allocation7], 25
    %2350 = vst [vmem:[%s2349] sm:$0x1] %v2346
    %s2351 = scalar_lea.vmem [#allocation7], 26
    %2352 = vst [vmem:[%s2351] sm:$0x1] %v2133
    %s2353 = scalar_lea.vmem [#allocation7], 27
    %2354 = vst [vmem:[%s2353] sm:$0x1] %v1918
    %s2355 = scalar_lea.vmem [#allocation7], 28
    %2356 = vst [vmem:[%s2355] sm:$0x1] %v1910
    %s2357 = scalar_lea.vmem [#allocation7], 29
    %2358 = vst [vmem:[%s2357] sm:$0x1] %v1914
    %s2359 = scalar_lea.vmem [#allocation2], 5
    %v2360 = vld [vmem:[%s2359] sm:$0x1]
    %s2361 = scalar_lea.vmem [#allocation2], 13
    %v2362 = vld [vmem:[%s2361] sm:$0x1]
    %v2363 = vmul.f32 %v2360, 4.0
    %v2364 = vmax.f32 %v2363, -4.0
    %v2365 = vmin.f32 %v2364, 4.0
    %v2366 = vmul.f32 %v2362, 0.5
    %v2367 = vmax.f32 %v2366, -0.5
    %v2368 = vmin.f32 %v2367, 0.5
    %v2369 = vmul.f32 %v2365, 0.03
    %v2370 = vadd.f32 %v1910, %v2369
    %v2371 = vmax.f32 %v2370, -5.0
    %v2372 = vmin.f32 %v2371, 5.0
    %v2373 = vmul.f32 %v2368, 0.03
    %v2374 = vadd.f32 %v1914, %v2373
    %v2375 = vmax.f32 %v2374, -0.5
    %v2376 = vmin.f32 %v2375, 0.5
    %v2377 = vmul.f32 %v2372, 0.03
    %v2378 = vadd.f32 %v1918, %v2377
    %v2379 = vmax.f32 %v2378, 0.0
    %v2380 = vmin.f32 %v2379, 10.0
    %v2381 = vand.u32 2147483647, %v2376
    %vm2382 = vcmp.le.f32.partialorder %v2381, 0.7853982
    %vm2383 = vcmp.lt.s32.totalorder %v2376, 0
    %v2384 = vand.u32 %v2376, 2139095040
    %v2385 = vshrl.u32 %v2384, 23
    %v2386 = vsub.s32 %v2385, 127
    %v2387 = vand.u32 2147483647, %v2376
    %v2388 = vand.u32 %v2387, 8388607
    %v2389 = vor.u32 %v2388, 8388608
    %v2390 = vsub.s32 0, %v2389
    %v2391 = vadd.s32 %v2386, 1
    %vm2392 = vcmp.gt.s32.totalorder %v2391, 0
    %v2393 = vsel %vm2392, %v2391, 0
    %v2394 = vshrl.u32 %v2393, 5
    %v2395 = vand.u32 %v2393, 31
    %v2396 = vsub.s32 32, %v2395
    %v2397 = vshrl.u32 683565275, %v2396
    %v2398 = vshll.u32 683565275, %v2395
    %v2399 = vshrl.u32 2475754826, %v2396
    %v2400 = vor.u32 %v2398, %v2399
    %v2401 = vshll.u32 2475754826, %v2395
    %v2402 = vshrl.u32 2131351028, %v2396
    %v2403 = vor.u32 %v2401, %v2402
    %v2404 = vshll.u32 2131351028, %v2395
    %v2405 = vshrl.u32 2102212464, %v2396
    %v2406 = vor.u32 %v2404, %v2405
    %v2407 = vshll.u32 2102212464, %v2395
    %v2408 = vshrl.u32 920167782, %v2396
    %v2409 = vor.u32 %v2407, %v2408
    %v2410 = vshll.u32 920167782, %v2395
    %v2411 = vshrl.u32 1326507024, %v2396
    %v2412 = vor.u32 %v2410, %v2411
    %vm2413 = vcmp.lt.s32.totalorder %v2394, 1
    %vm2414 = vcmp.lt.s32.totalorder %v2394, 2
    %vm2415 = vcmp.lt.s32.totalorder %v2394, 3
    %vm2416 = vcmp.lt.s32.totalorder %v2394, 4
    %v2417 = vsel %vm2413, %v2397, %v2400
    %v2418 = vsel %vm2416, %v2406, 2102212464
    %v2419 = vsel %vm2415, %v2403, %v2418
    %v2420 = vsel %vm2414, %v2417, %v2419
    %v2421 = vsel %vm2413, %v2400, %v2403
    %v2422 = vsel %vm2416, %v2409, 920167782
    %v2423 = vsel %vm2415, %v2406, %v2422
    %v2424 = vsel %vm2414, %v2421, %v2423
    %v2425 = vsel %vm2413, %v2403, %v2406
    %v2426 = vsel %vm2416, %v2412, 1326507024
    %v2427 = vsel %vm2415, %v2409, %v2426
    %v2428 = vsel %vm2414, %v2425, %v2427
    %v2429 = vshll.u32 %v2389, 8
    %v2430 = vmul.u32.u64.compose %v2429, %v2428
    %v2431 = vextract.low.u32 %v2430
    %v2432 = vextract.high.u32 %v2430
    %v2433 = vmul.u32.u64.compose %v2429, %v2424
    %v2434 = vextract.low.u32 %v2433
    %v2435 = vextract.high.u32 %v2433
    %v2436 = vmul.u32 %v2429, %v2420
    %v2437 = vadd.s32 %v2432, %v2434
    %vm2438 = vc.u32 %v2432, %v2434
    %v2439 = vadd.s32 %v2435, 1
    %v2440 = vsel %vm2438, %v2439, %v2435
    %v2441 = vadd.s32 %v2436, %v2440
    %v2442 = vadd.s32 %v2441, 536870912
    %v2443 = vshrl.u32 %v2442, 30
    %v2444 = vshll.u32 %v2443, 30
    %v2445 = vsub.s32 %v2441, %v2444
    %vm2446 = vcmp.lt.s32.totalorder %v2445, 0
    %v2447 = vsub.s32 0, %v2445
    %v2448 = vsel %vm2446, %v2447, %v2445
    %v2449 = vclz %v2448
    %v2450 = vsub.s32 %v2449, 2
    %vm2451 = vcmp.gt.s32.totalorder 0, %v2450
    %v2452 = vsel %vm2451, 0, %v2450
    %v2453 = vsub.s32 32, %v2452
    %v2454 = vshll.u32 %v2445, %v2452
    %v2455 = vshrl.u32 %v2437, %v2453
    %v2456 = vor.u32 %v2454, %v2455
    %v2457 = vsub.s32 4294967266, %v2452
    %v2458 = vadd.s32 %v2457, 127
    %v2459 = vshll.u32 %v2458, 23
    %v2460 = vor.u32 4788187, %v2459
    %v2461 = vand.u32 2147483647, %v2460
    %v2463 = vcvt.s32.f32 %v2456
    %v2464 = vmul.f32 %v2463, %v2461
    %v2465 = vxor.u32 %v2464, 2147483648
    %v2466 = vsel %vm2383, %v2465, %v2464
    %v2467 = vsub.s32 4, %v2443
    %v2468 = vsel %vm2383, %v2467, %v2443
    %v2469 = vsel %vm2382, %v2376, %v2466
    %v2470 = vsel %vm2382, 0, %v2468
    %v2471 = vcosq.f32.pop %v2469
    %v2472 = vsinq.f32.pop %v2469
    %vm2473 = vweird.f32 %v2376
    %v2474 = vadd.s32 %v2470, 3
    %v2475 = vand.u32 %v2474, 3
    %vm2476 = vcmp.lt.s32.totalorder %v2475, 2
    %vm2477 = vcmp.eq.s32.totalorder %v2475, 0
    %v2478 = vxor.u32 %v2472, 2147483648
    %v2479 = vsel %vm2477, %v2471, %v2478
    %vm2480 = vcmp.eq.s32.totalorder %v2475, 2
    %v2481 = vxor.u32 %v2471, 2147483648
    %v2482 = vsel %vm2480, %v2481, %v2472
    %v2483 = vsel %vm2476, %v2479, %v2482
    %v2484 = vsel %vm2473, nan, %v2483
    %v2485 = vand.u32 2147483647, %v2376
    %vm2486 = vcmp.le.f32.partialorder %v2485, 0.7853982
    %vm2487 = vcmp.lt.s32.totalorder %v2376, 0
    %v2488 = vand.u32 %v2376, 2139095040
    %v2489 = vshrl.u32 %v2488, 23
    %v2490 = vsub.s32 %v2489, 127
    %v2491 = vand.u32 2147483647, %v2376
    %v2492 = vand.u32 %v2491, 8388607
    %v2493 = vor.u32 %v2492, 8388608
    %v2494 = vsub.s32 0, %v2493
    %v2495 = vadd.s32 %v2490, 1
    %vm2496 = vcmp.gt.s32.totalorder %v2495, 0
    %v2497 = vsel %vm2496, %v2495, 0
    %v2498 = vshrl.u32 %v2497, 5
    %v2499 = vand.u32 %v2497, 31
    %v2500 = vsub.s32 32, %v2499
    %v2501 = vshrl.u32 683565275, %v2500
    %v2502 = vshll.u32 683565275, %v2499
    %v2503 = vshrl.u32 2475754826, %v2500
    %v2504 = vor.u32 %v2502, %v2503
    %v2505 = vshll.u32 2475754826, %v2499
    %v2506 = vshrl.u32 2131351028, %v2500
    %v2507 = vor.u32 %v2505, %v2506
    %v2508 = vshll.u32 2131351028, %v2499
    %v2509 = vshrl.u32 2102212464, %v2500
    %v2510 = vor.u32 %v2508, %v2509
    %v2511 = vshll.u32 2102212464, %v2499
    %v2512 = vshrl.u32 920167782, %v2500
    %v2513 = vor.u32 %v2511, %v2512
    %v2514 = vshll.u32 920167782, %v2499
    %v2515 = vshrl.u32 1326507024, %v2500
    %v2516 = vor.u32 %v2514, %v2515
    %vm2517 = vcmp.lt.s32.totalorder %v2498, 1
    %vm2518 = vcmp.lt.s32.totalorder %v2498, 2
    %vm2519 = vcmp.lt.s32.totalorder %v2498, 3
    %vm2520 = vcmp.lt.s32.totalorder %v2498, 4
    %v2521 = vsel %vm2517, %v2501, %v2504
    %v2522 = vsel %vm2520, %v2510, 2102212464
    %v2523 = vsel %vm2519, %v2507, %v2522
    %v2524 = vsel %vm2518, %v2521, %v2523
    %v2525 = vsel %vm2517, %v2504, %v2507
    %v2526 = vsel %vm2520, %v2513, 920167782
    %v2527 = vsel %vm2519, %v2510, %v2526
    %v2528 = vsel %vm2518, %v2525, %v2527
    %v2529 = vsel %vm2517, %v2507, %v2510
    %v2530 = vsel %vm2520, %v2516, 1326507024
    %v2531 = vsel %vm2519, %v2513, %v2530
    %v2532 = vsel %vm2518, %v2529, %v2531
    %v2533 = vshll.u32 %v2493, 8
    %v2534 = vmul.u32.u64.compose %v2533, %v2532
    %v2535 = vextract.low.u32 %v2534
    %v2536 = vextract.high.u32 %v2534
    %v2537 = vmul.u32.u64.compose %v2533, %v2528
    %v2538 = vextract.low.u32 %v2537
    %v2539 = vextract.high.u32 %v2537
    %v2540 = vmul.u32 %v2533, %v2524
    %v2541 = vadd.s32 %v2536, %v2538
    %vm2542 = vc.u32 %v2536, %v2538
    %v2543 = vadd.s32 %v2539, 1
    %v2544 = vsel %vm2542, %v2543, %v2539
    %v2545 = vadd.s32 %v2540, %v2544
    %v2546 = vadd.s32 %v2545, 536870912
    %v2547 = vshrl.u32 %v2546, 30
    %v2548 = vshll.u32 %v2547, 30
    %v2549 = vsub.s32 %v2545, %v2548
    %vm2550 = vcmp.lt.s32.totalorder %v2549, 0
    %v2551 = vsub.s32 0, %v2549
    %v2552 = vsel %vm2550, %v2551, %v2549
    %v2553 = vclz %v2552
    %v2554 = vsub.s32 %v2553, 2
    %vm2555 = vcmp.gt.s32.totalorder 0, %v2554
    %v2556 = vsel %vm2555, 0, %v2554
    %v2557 = vsub.s32 32, %v2556
    %v2558 = vshll.u32 %v2549, %v2556
    %v2559 = vshrl.u32 %v2541, %v2557
    %v2560 = vor.u32 %v2558, %v2559
    %v2561 = vsub.s32 4294967266, %v2556
    %v2562 = vadd.s32 %v2561, 127
    %v2563 = vshll.u32 %v2562, 23
    %v2564 = vor.u32 4788187, %v2563
    %v2565 = vand.u32 2147483647, %v2564
    %v2567 = vcvt.s32.f32 %v2560
    %v2568 = vmul.f32 %v2567, %v2565
    %v2569 = vxor.u32 %v2568, 2147483648
    %v2570 = vsel %vm2487, %v2569, %v2568
    %v2571 = vsub.s32 4, %v2547
    %v2572 = vsel %vm2487, %v2571, %v2547
    %v2573 = vsel %vm2486, %v2376, %v2570
    %v2574 = vsel %vm2486, 0, %v2572
    %v2575 = vcosq.f32.pop %v2573
    %v2576 = vsinq.f32.pop %v2573
    %vm2577 = vweird.f32 %v2376
    %v2578 = vand.u32 %v2574, 3
    %vm2579 = vcmp.lt.s32.totalorder %v2578, 2
    %vm2580 = vcmp.eq.s32.totalorder %v2578, 0
    %v2581 = vxor.u32 %v2576, 2147483648
    %v2582 = vsel %vm2580, %v2575, %v2581
    %vm2583 = vcmp.eq.s32.totalorder %v2578, 2
    %v2584 = vxor.u32 %v2575, 2147483648
    %v2585 = vsel %vm2583, %v2584, %v2576
    %v2586 = vsel %vm2579, %v2582, %v2585
    %v2587 = vsel %vm2577, nan, %v2586
    %v2588 = vrcp.pop %v2587
    %v2589 = vmul.f32 %v2484, %v2588
    %v2590 = vmul.f32 %v1918, %v2589
    %v2591 = vmul.f32 %v2590, 0.4
    %v2592 = vmax.f32 %v2591, -1.57
    %v2593 = vmin.f32 %v2592, 1.57
    %v2594 = vmul.f32 %v2593, 0.03
    %v2595 = vadd.f32 %v2594, %v2133
    %v2596 = vand.u32 2147483647, %v2595
    %vm2597 = vcmp.le.f32.partialorder %v2596, 0.7853982
    %vm2598 = vcmp.lt.s32.totalorder %v2595, 0
    %v2599 = vand.u32 %v2595, 2139095040
    %v2600 = vshrl.u32 %v2599, 23
    %v2601 = vsub.s32 %v2600, 127
    %v2602 = vand.u32 2147483647, %v2595
    %v2603 = vand.u32 %v2602, 8388607
    %v2604 = vor.u32 %v2603, 8388608
    %v2605 = vsub.s32 0, %v2604
    %v2606 = vadd.s32 %v2601, 1
    %vm2607 = vcmp.gt.s32.totalorder %v2606, 0
    %v2608 = vsel %vm2607, %v2606, 0
    %v2609 = vshrl.u32 %v2608, 5
    %v2610 = vand.u32 %v2608, 31
    %v2611 = vsub.s32 32, %v2610
    %v2612 = vshrl.u32 683565275, %v2611
    %v2613 = vshll.u32 683565275, %v2610
    %v2614 = vshrl.u32 2475754826, %v2611
    %v2615 = vor.u32 %v2613, %v2614
    %v2616 = vshll.u32 2475754826, %v2610
    %v2617 = vshrl.u32 2131351028, %v2611
    %v2618 = vor.u32 %v2616, %v2617
    %v2619 = vshll.u32 2131351028, %v2610
    %v2620 = vshrl.u32 2102212464, %v2611
    %v2621 = vor.u32 %v2619, %v2620
    %v2622 = vshll.u32 2102212464, %v2610
    %v2623 = vshrl.u32 920167782, %v2611
    %v2624 = vor.u32 %v2622, %v2623
    %v2625 = vshll.u32 920167782, %v2610
    %v2626 = vshrl.u32 1326507024, %v2611
    %v2627 = vor.u32 %v2625, %v2626
    %vm2628 = vcmp.lt.s32.totalorder %v2609, 1
    %vm2629 = vcmp.lt.s32.totalorder %v2609, 2
    %vm2630 = vcmp.lt.s32.totalorder %v2609, 3
    %vm2631 = vcmp.lt.s32.totalorder %v2609, 4
    %v2632 = vsel %vm2628, %v2612, %v2615
    %v2633 = vsel %vm2631, %v2621, 2102212464
    %v2634 = vsel %vm2630, %v2618, %v2633
    %v2635 = vsel %vm2629, %v2632, %v2634
    %v2636 = vsel %vm2628, %v2615, %v2618
    %v2637 = vsel %vm2631, %v2624, 920167782
    %v2638 = vsel %vm2630, %v2621, %v2637
    %v2639 = vsel %vm2629, %v2636, %v2638
    %v2640 = vsel %vm2628, %v2618, %v2621
    %v2641 = vsel %vm2631, %v2627, 1326507024
    %v2642 = vsel %vm2630, %v2624, %v2641
    %v2643 = vsel %vm2629, %v2640, %v2642
    %v2644 = vshll.u32 %v2604, 8
    %v2645 = vmul.u32.u64.compose %v2644, %v2643
    %v2646 = vextract.low.u32 %v2645
    %v2647 = vextract.high.u32 %v2645
    %v2648 = vmul.u32.u64.compose %v2644, %v2639
    %v2649 = vextract.low.u32 %v2648
    %v2650 = vextract.high.u32 %v2648
    %v2651 = vmul.u32 %v2644, %v2635
    %v2652 = vadd.s32 %v2647, %v2649
    %vm2653 = vc.u32 %v2647, %v2649
    %v2654 = vadd.s32 %v2650, 1
    %v2655 = vsel %vm2653, %v2654, %v2650
    %v2656 = vadd.s32 %v2651, %v2655
    %v2657 = vadd.s32 %v2656, 536870912
    %v2658 = vshrl.u32 %v2657, 30
    %v2659 = vshll.u32 %v2658, 30
    %v2660 = vsub.s32 %v2656, %v2659
    %vm2661 = vcmp.lt.s32.totalorder %v2660, 0
    %v2662 = vsub.s32 0, %v2660
    %v2663 = vsel %vm2661, %v2662, %v2660
    %v2664 = vclz %v2663
    %v2665 = vsub.s32 %v2664, 2
    %vm2666 = vcmp.gt.s32.totalorder 0, %v2665
    %v2667 = vsel %vm2666, 0, %v2665
    %v2668 = vsub.s32 32, %v2667
    %v2669 = vshll.u32 %v2660, %v2667
    %v2670 = vshrl.u32 %v2652, %v2668
    %v2671 = vor.u32 %v2669, %v2670
    %v2672 = vsub.s32 4294967266, %v2667
    %v2673 = vadd.s32 %v2672, 127
    %v2674 = vshll.u32 %v2673, 23
    %v2675 = vor.u32 4788187, %v2674
    %v2676 = vand.u32 2147483647, %v2675
    %v2678 = vcvt.s32.f32 %v2671
    %v2679 = vmul.f32 %v2678, %v2676
    %v2680 = vxor.u32 %v2679, 2147483648
    %v2681 = vsel %vm2598, %v2680, %v2679
    %v2682 = vsub.s32 4, %v2658
    %v2683 = vsel %vm2598, %v2682, %v2658
    %v2684 = vsel %vm2597, %v2595, %v2681
    %v2685 = vsel %vm2597, 0, %v2683
    %v2686 = vcosq.f32.pop %v2684
    %v2687 = vsinq.f32.pop %v2684
    %vm2688 = vweird.f32 %v2595
    %v2689 = vand.u32 %v2685, 3
    %vm2690 = vcmp.lt.s32.totalorder %v2689, 2
    %vm2691 = vcmp.eq.s32.totalorder %v2689, 0
    %v2692 = vxor.u32 %v2687, 2147483648
    %v2693 = vsel %vm2691, %v2686, %v2692
    %vm2694 = vcmp.eq.s32.totalorder %v2689, 2
    %v2695 = vxor.u32 %v2686, 2147483648
    %v2696 = vsel %vm2694, %v2695, %v2687
    %v2697 = vsel %vm2690, %v2693, %v2696
    %v2698 = vsel %vm2688, nan, %v2697
    %v2699 = vmul.f32 %v2380, %v2698
    %v2700 = vmul.f32 %v2699, 0.03
    %v2701 = vadd.f32 %v2700, %v2239
    %v2702 = vand.u32 2147483647, %v2595
    %vm2703 = vcmp.le.f32.partialorder %v2702, 0.7853982
    %vm2704 = vcmp.lt.s32.totalorder %v2595, 0
    %v2705 = vand.u32 %v2595, 2139095040
    %v2706 = vshrl.u32 %v2705, 23
    %v2707 = vsub.s32 %v2706, 127
    %v2708 = vand.u32 2147483647, %v2595
    %v2709 = vand.u32 %v2708, 8388607
    %v2710 = vor.u32 %v2709, 8388608
    %v2711 = vsub.s32 0, %v2710
    %v2712 = vadd.s32 %v2707, 1
    %vm2713 = vcmp.gt.s32.totalorder %v2712, 0
    %v2714 = vsel %vm2713, %v2712, 0
    %v2715 = vshrl.u32 %v2714, 5
    %v2716 = vand.u32 %v2714, 31
    %v2717 = vsub.s32 32, %v2716
    %v2718 = vshrl.u32 683565275, %v2717
    %v2719 = vshll.u32 683565275, %v2716
    %v2720 = vshrl.u32 2475754826, %v2717
    %v2721 = vor.u32 %v2719, %v2720
    %v2722 = vshll.u32 2475754826, %v2716
    %v2723 = vshrl.u32 2131351028, %v2717
    %v2724 = vor.u32 %v2722, %v2723
    %v2725 = vshll.u32 2131351028, %v2716
    %v2726 = vshrl.u32 2102212464, %v2717
    %v2727 = vor.u32 %v2725, %v2726
    %v2728 = vshll.u32 2102212464, %v2716
    %v2729 = vshrl.u32 920167782, %v2717
    %v2730 = vor.u32 %v2728, %v2729
    %v2731 = vshll.u32 920167782, %v2716
    %v2732 = vshrl.u32 1326507024, %v2717
    %v2733 = vor.u32 %v2731, %v2732
    %vm2734 = vcmp.lt.s32.totalorder %v2715, 1
    %vm2735 = vcmp.lt.s32.totalorder %v2715, 2
    %vm2736 = vcmp.lt.s32.totalorder %v2715, 3
    %vm2737 = vcmp.lt.s32.totalorder %v2715, 4
    %v2738 = vsel %vm2734, %v2718, %v2721
    %v2739 = vsel %vm2737, %v2727, 2102212464
    %v2740 = vsel %vm2736, %v2724, %v2739
    %v2741 = vsel %vm2735, %v2738, %v2740
    %v2742 = vsel %vm2734, %v2721, %v2724
    %v2743 = vsel %vm2737, %v2730, 920167782
    %v2744 = vsel %vm2736, %v2727, %v2743
    %v2745 = vsel %vm2735, %v2742, %v2744
    %v2746 = vsel %vm2734, %v2724, %v2727
    %v2747 = vsel %vm2737, %v2733, 1326507024
    %v2748 = vsel %vm2736, %v2730, %v2747
    %v2749 = vsel %vm2735, %v2746, %v2748
    %v2750 = vshll.u32 %v2710, 8
    %v2751 = vmul.u32.u64.compose %v2750, %v2749
    %v2752 = vextract.low.u32 %v2751
    %v2753 = vextract.high.u32 %v2751
    %v2754 = vmul.u32.u64.compose %v2750, %v2745
    %v2755 = vextract.low.u32 %v2754
    %v2756 = vextract.high.u32 %v2754
    %v2757 = vmul.u32 %v2750, %v2741
    %v2758 = vadd.s32 %v2753, %v2755
    %vm2759 = vc.u32 %v2753, %v2755
    %v2760 = vadd.s32 %v2756, 1
    %v2761 = vsel %vm2759, %v2760, %v2756
    %v2762 = vadd.s32 %v2757, %v2761
    %v2763 = vadd.s32 %v2762, 536870912
    %v2764 = vshrl.u32 %v2763, 30
    %v2765 = vshll.u32 %v2764, 30
    %v2766 = vsub.s32 %v2762, %v2765
    %vm2767 = vcmp.lt.s32.totalorder %v2766, 0
    %v2768 = vsub.s32 0, %v2766
    %v2769 = vsel %vm2767, %v2768, %v2766
    %v2770 = vclz %v2769
    %v2771 = vsub.s32 %v2770, 2
    %vm2772 = vcmp.gt.s32.totalorder 0, %v2771
    %v2773 = vsel %vm2772, 0, %v2771
    %v2774 = vsub.s32 32, %v2773
    %v2775 = vshll.u32 %v2766, %v2773
    %v2776 = vshrl.u32 %v2758, %v2774
    %v2777 = vor.u32 %v2775, %v2776
    %v2778 = vsub.s32 4294967266, %v2773
    %v2779 = vadd.s32 %v2778, 127
    %v2780 = vshll.u32 %v2779, 23
    %v2781 = vor.u32 4788187, %v2780
    %v2782 = vand.u32 2147483647, %v2781
    %v2784 = vcvt.s32.f32 %v2777
    %v2785 = vmul.f32 %v2784, %v2782
    %v2786 = vxor.u32 %v2785, 2147483648
    %v2787 = vsel %vm2704, %v2786, %v2785
    %v2788 = vsub.s32 4, %v2764
    %v2789 = vsel %vm2704, %v2788, %v2764
    %v2790 = vsel %vm2703, %v2595, %v2787
    %v2791 = vsel %vm2703, 0, %v2789
    %v2792 = vcosq.f32.pop %v2790
    %v2793 = vsinq.f32.pop %v2790
    %vm2794 = vweird.f32 %v2595
    %v2795 = vadd.s32 %v2791, 3
    %v2796 = vand.u32 %v2795, 3
    %vm2797 = vcmp.lt.s32.totalorder %v2796, 2
    %vm2798 = vcmp.eq.s32.totalorder %v2796, 0
    %v2799 = vxor.u32 %v2793, 2147483648
    %v2800 = vsel %vm2798, %v2792, %v2799
    %vm2801 = vcmp.eq.s32.totalorder %v2796, 2
    %v2802 = vxor.u32 %v2792, 2147483648
    %v2803 = vsel %vm2801, %v2802, %v2793
    %v2804 = vsel %vm2797, %v2800, %v2803
    %v2805 = vsel %vm2794, nan, %v2804
    %v2806 = vmul.f32 %v2380, %v2805
    %v2807 = vmul.f32 %v2806, 0.03
    %v2808 = vadd.f32 %v2807, %v2346
    %s2809 = scalar_lea.vmem [#allocation7], 30
    %2810 = vst [vmem:[%s2809] sm:$0x1] %v2701
    %s2811 = scalar_lea.vmem [#allocation7], 31
    %2812 = vst [vmem:[%s2811] sm:$0x1] %v2808
    %s2813 = scalar_lea.vmem [#allocation7], 32
    %2814 = vst [vmem:[%s2813] sm:$0x1] %v2595
    %s2815 = scalar_lea.vmem [#allocation7], 33
    %2816 = vst [vmem:[%s2815] sm:$0x1] %v2380
    %s2817 = scalar_lea.vmem [#allocation7], 34
    %2818 = vst [vmem:[%s2817] sm:$0x1] %v2372
    %s2819 = scalar_lea.vmem [#allocation7], 35
    %2820 = vst [vmem:[%s2819] sm:$0x1] %v2376
    %s2821 = scalar_lea.vmem [#allocation2], 6
    %v2822 = vld [vmem:[%s2821] sm:$0x1]
    %s2823 = scalar_lea.vmem [#allocation2], 14
    %v2824 = vld [vmem:[%s2823] sm:$0x1]
    %v2825 = vmul.f32 %v2822, 4.0
    %v2826 = vmax.f32 %v2825, -4.0
    %v2827 = vmin.f32 %v2826, 4.0
    %v2828 = vmul.f32 %v2824, 0.5
    %v2829 = vmax.f32 %v2828, -0.5
    %v2830 = vmin.f32 %v2829, 0.5
    %v2831 = vmul.f32 %v2827, 0.03
    %v2832 = vadd.f32 %v2372, %v2831
    %v2833 = vmax.f32 %v2832, -5.0
    %v2834 = vmin.f32 %v2833, 5.0
    %v2835 = vmul.f32 %v2830, 0.03
    %v2836 = vadd.f32 %v2376, %v2835
    %v2837 = vmax.f32 %v2836, -0.5
    %v2838 = vmin.f32 %v2837, 0.5
    %v2839 = vmul.f32 %v2834, 0.03
    %v2840 = vadd.f32 %v2380, %v2839
    %v2841 = vmax.f32 %v2840, 0.0
    %v2842 = vmin.f32 %v2841, 10.0
    %v2843 = vand.u32 2147483647, %v2838
    %vm2844 = vcmp.le.f32.partialorder %v2843, 0.7853982
    %vm2845 = vcmp.lt.s32.totalorder %v2838, 0
    %v2846 = vand.u32 %v2838, 2139095040
    %v2847 = vshrl.u32 %v2846, 23
    %v2848 = vsub.s32 %v2847, 127
    %v2849 = vand.u32 2147483647, %v2838
    %v2850 = vand.u32 %v2849, 8388607
    %v2851 = vor.u32 %v2850, 8388608
    %v2852 = vsub.s32 0, %v2851
    %v2853 = vadd.s32 %v2848, 1
    %vm2854 = vcmp.gt.s32.totalorder %v2853, 0
    %v2855 = vsel %vm2854, %v2853, 0
    %v2856 = vshrl.u32 %v2855, 5
    %v2857 = vand.u32 %v2855, 31
    %v2858 = vsub.s32 32, %v2857
    %v2859 = vshrl.u32 683565275, %v2858
    %v2860 = vshll.u32 683565275, %v2857
    %v2861 = vshrl.u32 2475754826, %v2858
    %v2862 = vor.u32 %v2860, %v2861
    %v2863 = vshll.u32 2475754826, %v2857
    %v2864 = vshrl.u32 2131351028, %v2858
    %v2865 = vor.u32 %v2863, %v2864
    %v2866 = vshll.u32 2131351028, %v2857
    %v2867 = vshrl.u32 2102212464, %v2858
    %v2868 = vor.u32 %v2866, %v2867
    %v2869 = vshll.u32 2102212464, %v2857
    %v2870 = vshrl.u32 920167782, %v2858
    %v2871 = vor.u32 %v2869, %v2870
    %v2872 = vshll.u32 920167782, %v2857
    %v2873 = vshrl.u32 1326507024, %v2858
    %v2874 = vor.u32 %v2872, %v2873
    %vm2875 = vcmp.lt.s32.totalorder %v2856, 1
    %vm2876 = vcmp.lt.s32.totalorder %v2856, 2
    %vm2877 = vcmp.lt.s32.totalorder %v2856, 3
    %vm2878 = vcmp.lt.s32.totalorder %v2856, 4
    %v2879 = vsel %vm2875, %v2859, %v2862
    %v2880 = vsel %vm2878, %v2868, 2102212464
    %v2881 = vsel %vm2877, %v2865, %v2880
    %v2882 = vsel %vm2876, %v2879, %v2881
    %v2883 = vsel %vm2875, %v2862, %v2865
    %v2884 = vsel %vm2878, %v2871, 920167782
    %v2885 = vsel %vm2877, %v2868, %v2884
    %v2886 = vsel %vm2876, %v2883, %v2885
    %v2887 = vsel %vm2875, %v2865, %v2868
    %v2888 = vsel %vm2878, %v2874, 1326507024
    %v2889 = vsel %vm2877, %v2871, %v2888
    %v2890 = vsel %vm2876, %v2887, %v2889
    %v2891 = vshll.u32 %v2851, 8
    %v2892 = vmul.u32.u64.compose %v2891, %v2890
    %v2893 = vextract.low.u32 %v2892
    %v2894 = vextract.high.u32 %v2892
    %v2895 = vmul.u32.u64.compose %v2891, %v2886
    %v2896 = vextract.low.u32 %v2895
    %v2897 = vextract.high.u32 %v2895
    %v2898 = vmul.u32 %v2891, %v2882
    %v2899 = vadd.s32 %v2894, %v2896
    %vm2900 = vc.u32 %v2894, %v2896
    %v2901 = vadd.s32 %v2897, 1
    %v2902 = vsel %vm2900, %v2901, %v2897
    %v2903 = vadd.s32 %v2898, %v2902
    %v2904 = vadd.s32 %v2903, 536870912
    %v2905 = vshrl.u32 %v2904, 30
    %v2906 = vshll.u32 %v2905, 30
    %v2907 = vsub.s32 %v2903, %v2906
    %vm2908 = vcmp.lt.s32.totalorder %v2907, 0
    %v2909 = vsub.s32 0, %v2907
    %v2910 = vsel %vm2908, %v2909, %v2907
    %v2911 = vclz %v2910
    %v2912 = vsub.s32 %v2911, 2
    %vm2913 = vcmp.gt.s32.totalorder 0, %v2912
    %v2914 = vsel %vm2913, 0, %v2912
    %v2915 = vsub.s32 32, %v2914
    %v2916 = vshll.u32 %v2907, %v2914
    %v2917 = vshrl.u32 %v2899, %v2915
    %v2918 = vor.u32 %v2916, %v2917
    %v2919 = vsub.s32 4294967266, %v2914
    %v2920 = vadd.s32 %v2919, 127
    %v2921 = vshll.u32 %v2920, 23
    %v2922 = vor.u32 4788187, %v2921
    %v2923 = vand.u32 2147483647, %v2922
    %v2925 = vcvt.s32.f32 %v2918
    %v2926 = vmul.f32 %v2925, %v2923
    %v2927 = vxor.u32 %v2926, 2147483648
    %v2928 = vsel %vm2845, %v2927, %v2926
    %v2929 = vsub.s32 4, %v2905
    %v2930 = vsel %vm2845, %v2929, %v2905
    %v2931 = vsel %vm2844, %v2838, %v2928
    %v2932 = vsel %vm2844, 0, %v2930
    %v2933 = vcosq.f32.pop %v2931
    %v2934 = vsinq.f32.pop %v2931
    %vm2935 = vweird.f32 %v2838
    %v2936 = vadd.s32 %v2932, 3
    %v2937 = vand.u32 %v2936, 3
    %vm2938 = vcmp.lt.s32.totalorder %v2937, 2
    %vm2939 = vcmp.eq.s32.totalorder %v2937, 0
    %v2940 = vxor.u32 %v2934, 2147483648
    %v2941 = vsel %vm2939, %v2933, %v2940
    %vm2942 = vcmp.eq.s32.totalorder %v2937, 2
    %v2943 = vxor.u32 %v2933, 2147483648
    %v2944 = vsel %vm2942, %v2943, %v2934
    %v2945 = vsel %vm2938, %v2941, %v2944
    %v2946 = vsel %vm2935, nan, %v2945
    %v2947 = vand.u32 2147483647, %v2838
    %vm2948 = vcmp.le.f32.partialorder %v2947, 0.7853982
    %vm2949 = vcmp.lt.s32.totalorder %v2838, 0
    %v2950 = vand.u32 %v2838, 2139095040
    %v2951 = vshrl.u32 %v2950, 23
    %v2952 = vsub.s32 %v2951, 127
    %v2953 = vand.u32 2147483647, %v2838
    %v2954 = vand.u32 %v2953, 8388607
    %v2955 = vor.u32 %v2954, 8388608
    %v2956 = vsub.s32 0, %v2955
    %v2957 = vadd.s32 %v2952, 1
    %vm2958 = vcmp.gt.s32.totalorder %v2957, 0
    %v2959 = vsel %vm2958, %v2957, 0
    %v2960 = vshrl.u32 %v2959, 5
    %v2961 = vand.u32 %v2959, 31
    %v2962 = vsub.s32 32, %v2961
    %v2963 = vshrl.u32 683565275, %v2962
    %v2964 = vshll.u32 683565275, %v2961
    %v2965 = vshrl.u32 2475754826, %v2962
    %v2966 = vor.u32 %v2964, %v2965
    %v2967 = vshll.u32 2475754826, %v2961
    %v2968 = vshrl.u32 2131351028, %v2962
    %v2969 = vor.u32 %v2967, %v2968
    %v2970 = vshll.u32 2131351028, %v2961
    %v2971 = vshrl.u32 2102212464, %v2962
    %v2972 = vor.u32 %v2970, %v2971
    %v2973 = vshll.u32 2102212464, %v2961
    %v2974 = vshrl.u32 920167782, %v2962
    %v2975 = vor.u32 %v2973, %v2974
    %v2976 = vshll.u32 920167782, %v2961
    %v2977 = vshrl.u32 1326507024, %v2962
    %v2978 = vor.u32 %v2976, %v2977
    %vm2979 = vcmp.lt.s32.totalorder %v2960, 1
    %vm2980 = vcmp.lt.s32.totalorder %v2960, 2
    %vm2981 = vcmp.lt.s32.totalorder %v2960, 3
    %vm2982 = vcmp.lt.s32.totalorder %v2960, 4
    %v2983 = vsel %vm2979, %v2963, %v2966
    %v2984 = vsel %vm2982, %v2972, 2102212464
    %v2985 = vsel %vm2981, %v2969, %v2984
    %v2986 = vsel %vm2980, %v2983, %v2985
    %v2987 = vsel %vm2979, %v2966, %v2969
    %v2988 = vsel %vm2982, %v2975, 920167782
    %v2989 = vsel %vm2981, %v2972, %v2988
    %v2990 = vsel %vm2980, %v2987, %v2989
    %v2991 = vsel %vm2979, %v2969, %v2972
    %v2992 = vsel %vm2982, %v2978, 1326507024
    %v2993 = vsel %vm2981, %v2975, %v2992
    %v2994 = vsel %vm2980, %v2991, %v2993
    %v2995 = vshll.u32 %v2955, 8
    %v2996 = vmul.u32.u64.compose %v2995, %v2994
    %v2997 = vextract.low.u32 %v2996
    %v2998 = vextract.high.u32 %v2996
    %v2999 = vmul.u32.u64.compose %v2995, %v2990
    %v3000 = vextract.low.u32 %v2999
    %v3001 = vextract.high.u32 %v2999
    %v3002 = vmul.u32 %v2995, %v2986
    %v3003 = vadd.s32 %v2998, %v3000
    %vm3004 = vc.u32 %v2998, %v3000
    %v3005 = vadd.s32 %v3001, 1
    %v3006 = vsel %vm3004, %v3005, %v3001
    %v3007 = vadd.s32 %v3002, %v3006
    %v3008 = vadd.s32 %v3007, 536870912
    %v3009 = vshrl.u32 %v3008, 30
    %v3010 = vshll.u32 %v3009, 30
    %v3011 = vsub.s32 %v3007, %v3010
    %vm3012 = vcmp.lt.s32.totalorder %v3011, 0
    %v3013 = vsub.s32 0, %v3011
    %v3014 = vsel %vm3012, %v3013, %v3011
    %v3015 = vclz %v3014
    %v3016 = vsub.s32 %v3015, 2
    %vm3017 = vcmp.gt.s32.totalorder 0, %v3016
    %v3018 = vsel %vm3017, 0, %v3016
    %v3019 = vsub.s32 32, %v3018
    %v3020 = vshll.u32 %v3011, %v3018
    %v3021 = vshrl.u32 %v3003, %v3019
    %v3022 = vor.u32 %v3020, %v3021
    %v3023 = vsub.s32 4294967266, %v3018
    %v3024 = vadd.s32 %v3023, 127
    %v3025 = vshll.u32 %v3024, 23
    %v3026 = vor.u32 4788187, %v3025
    %v3027 = vand.u32 2147483647, %v3026
    %v3029 = vcvt.s32.f32 %v3022
    %v3030 = vmul.f32 %v3029, %v3027
    %v3031 = vxor.u32 %v3030, 2147483648
    %v3032 = vsel %vm2949, %v3031, %v3030
    %v3033 = vsub.s32 4, %v3009
    %v3034 = vsel %vm2949, %v3033, %v3009
    %v3035 = vsel %vm2948, %v2838, %v3032
    %v3036 = vsel %vm2948, 0, %v3034
    %v3037 = vcosq.f32.pop %v3035
    %v3038 = vsinq.f32.pop %v3035
    %vm3039 = vweird.f32 %v2838
    %v3040 = vand.u32 %v3036, 3
    %vm3041 = vcmp.lt.s32.totalorder %v3040, 2
    %vm3042 = vcmp.eq.s32.totalorder %v3040, 0
    %v3043 = vxor.u32 %v3038, 2147483648
    %v3044 = vsel %vm3042, %v3037, %v3043
    %vm3045 = vcmp.eq.s32.totalorder %v3040, 2
    %v3046 = vxor.u32 %v3037, 2147483648
    %v3047 = vsel %vm3045, %v3046, %v3038
    %v3048 = vsel %vm3041, %v3044, %v3047
    %v3049 = vsel %vm3039, nan, %v3048
    %v3050 = vrcp.pop %v3049
    %v3051 = vmul.f32 %v2946, %v3050
    %v3052 = vmul.f32 %v2380, %v3051
    %v3053 = vmul.f32 %v3052, 0.4
    %v3054 = vmax.f32 %v3053, -1.57
    %v3055 = vmin.f32 %v3054, 1.57
    %v3056 = vmul.f32 %v3055, 0.03
    %v3057 = vadd.f32 %v3056, %v2595
    %v3058 = vand.u32 2147483647, %v3057
    %vm3059 = vcmp.le.f32.partialorder %v3058, 0.7853982
    %vm3060 = vcmp.lt.s32.totalorder %v3057, 0
    %v3061 = vand.u32 %v3057, 2139095040
    %v3062 = vshrl.u32 %v3061, 23
    %v3063 = vsub.s32 %v3062, 127
    %v3064 = vand.u32 2147483647, %v3057
    %v3065 = vand.u32 %v3064, 8388607
    %v3066 = vor.u32 %v3065, 8388608
    %v3067 = vsub.s32 0, %v3066
    %v3068 = vadd.s32 %v3063, 1
    %vm3069 = vcmp.gt.s32.totalorder %v3068, 0
    %v3070 = vsel %vm3069, %v3068, 0
    %v3071 = vshrl.u32 %v3070, 5
    %v3072 = vand.u32 %v3070, 31
    %v3073 = vsub.s32 32, %v3072
    %v3074 = vshrl.u32 683565275, %v3073
    %v3075 = vshll.u32 683565275, %v3072
    %v3076 = vshrl.u32 2475754826, %v3073
    %v3077 = vor.u32 %v3075, %v3076
    %v3078 = vshll.u32 2475754826, %v3072
    %v3079 = vshrl.u32 2131351028, %v3073
    %v3080 = vor.u32 %v3078, %v3079
    %v3081 = vshll.u32 2131351028, %v3072
    %v3082 = vshrl.u32 2102212464, %v3073
    %v3083 = vor.u32 %v3081, %v3082
    %v3084 = vshll.u32 2102212464, %v3072
    %v3085 = vshrl.u32 920167782, %v3073
    %v3086 = vor.u32 %v3084, %v3085
    %v3087 = vshll.u32 920167782, %v3072
    %v3088 = vshrl.u32 1326507024, %v3073
    %v3089 = vor.u32 %v3087, %v3088
    %vm3090 = vcmp.lt.s32.totalorder %v3071, 1
    %vm3091 = vcmp.lt.s32.totalorder %v3071, 2
    %vm3092 = vcmp.lt.s32.totalorder %v3071, 3
    %vm3093 = vcmp.lt.s32.totalorder %v3071, 4
    %v3094 = vsel %vm3090, %v3074, %v3077
    %v3095 = vsel %vm3093, %v3083, 2102212464
    %v3096 = vsel %vm3092, %v3080, %v3095
    %v3097 = vsel %vm3091, %v3094, %v3096
    %v3098 = vsel %vm3090, %v3077, %v3080
    %v3099 = vsel %vm3093, %v3086, 920167782
    %v3100 = vsel %vm3092, %v3083, %v3099
    %v3101 = vsel %vm3091, %v3098, %v3100
    %v3102 = vsel %vm3090, %v3080, %v3083
    %v3103 = vsel %vm3093, %v3089, 1326507024
    %v3104 = vsel %vm3092, %v3086, %v3103
    %v3105 = vsel %vm3091, %v3102, %v3104
    %v3106 = vshll.u32 %v3066, 8
    %v3107 = vmul.u32.u64.compose %v3106, %v3105
    %v3108 = vextract.low.u32 %v3107
    %v3109 = vextract.high.u32 %v3107
    %v3110 = vmul.u32.u64.compose %v3106, %v3101
    %v3111 = vextract.low.u32 %v3110
    %v3112 = vextract.high.u32 %v3110
    %v3113 = vmul.u32 %v3106, %v3097
    %v3114 = vadd.s32 %v3109, %v3111
    %vm3115 = vc.u32 %v3109, %v3111
    %v3116 = vadd.s32 %v3112, 1
    %v3117 = vsel %vm3115, %v3116, %v3112
    %v3118 = vadd.s32 %v3113, %v3117
    %v3119 = vadd.s32 %v3118, 536870912
    %v3120 = vshrl.u32 %v3119, 30
    %v3121 = vshll.u32 %v3120, 30
    %v3122 = vsub.s32 %v3118, %v3121
    %vm3123 = vcmp.lt.s32.totalorder %v3122, 0
    %v3124 = vsub.s32 0, %v3122
    %v3125 = vsel %vm3123, %v3124, %v3122
    %v3126 = vclz %v3125
    %v3127 = vsub.s32 %v3126, 2
    %vm3128 = vcmp.gt.s32.totalorder 0, %v3127
    %v3129 = vsel %vm3128, 0, %v3127
    %v3130 = vsub.s32 32, %v3129
    %v3131 = vshll.u32 %v3122, %v3129
    %v3132 = vshrl.u32 %v3114, %v3130
    %v3133 = vor.u32 %v3131, %v3132
    %v3134 = vsub.s32 4294967266, %v3129
    %v3135 = vadd.s32 %v3134, 127
    %v3136 = vshll.u32 %v3135, 23
    %v3137 = vor.u32 4788187, %v3136
    %v3138 = vand.u32 2147483647, %v3137
    %v3140 = vcvt.s32.f32 %v3133
    %v3141 = vmul.f32 %v3140, %v3138
    %v3142 = vxor.u32 %v3141, 2147483648
    %v3143 = vsel %vm3060, %v3142, %v3141
    %v3144 = vsub.s32 4, %v3120
    %v3145 = vsel %vm3060, %v3144, %v3120
    %v3146 = vsel %vm3059, %v3057, %v3143
    %v3147 = vsel %vm3059, 0, %v3145
    %v3148 = vcosq.f32.pop %v3146
    %v3149 = vsinq.f32.pop %v3146
    %vm3150 = vweird.f32 %v3057
    %v3151 = vand.u32 %v3147, 3
    %vm3152 = vcmp.lt.s32.totalorder %v3151, 2
    %vm3153 = vcmp.eq.s32.totalorder %v3151, 0
    %v3154 = vxor.u32 %v3149, 2147483648
    %v3155 = vsel %vm3153, %v3148, %v3154
    %vm3156 = vcmp.eq.s32.totalorder %v3151, 2
    %v3157 = vxor.u32 %v3148, 2147483648
    %v3158 = vsel %vm3156, %v3157, %v3149
    %v3159 = vsel %vm3152, %v3155, %v3158
    %v3160 = vsel %vm3150, nan, %v3159
    %v3161 = vmul.f32 %v2842, %v3160
    %v3162 = vmul.f32 %v3161, 0.03
    %v3163 = vadd.f32 %v3162, %v2701
    %v3164 = vand.u32 2147483647, %v3057
    %vm3165 = vcmp.le.f32.partialorder %v3164, 0.7853982
    %vm3166 = vcmp.lt.s32.totalorder %v3057, 0
    %v3167 = vand.u32 %v3057, 2139095040
    %v3168 = vshrl.u32 %v3167, 23
    %v3169 = vsub.s32 %v3168, 127
    %v3170 = vand.u32 2147483647, %v3057
    %v3171 = vand.u32 %v3170, 8388607
    %v3172 = vor.u32 %v3171, 8388608
    %v3173 = vsub.s32 0, %v3172
    %v3174 = vadd.s32 %v3169, 1
    %vm3175 = vcmp.gt.s32.totalorder %v3174, 0
    %v3176 = vsel %vm3175, %v3174, 0
    %v3177 = vshrl.u32 %v3176, 5
    %v3178 = vand.u32 %v3176, 31
    %v3179 = vsub.s32 32, %v3178
    %v3180 = vshrl.u32 683565275, %v3179
    %v3181 = vshll.u32 683565275, %v3178
    %v3182 = vshrl.u32 2475754826, %v3179
    %v3183 = vor.u32 %v3181, %v3182
    %v3184 = vshll.u32 2475754826, %v3178
    %v3185 = vshrl.u32 2131351028, %v3179
    %v3186 = vor.u32 %v3184, %v3185
    %v3187 = vshll.u32 2131351028, %v3178
    %v3188 = vshrl.u32 2102212464, %v3179
    %v3189 = vor.u32 %v3187, %v3188
    %v3190 = vshll.u32 2102212464, %v3178
    %v3191 = vshrl.u32 920167782, %v3179
    %v3192 = vor.u32 %v3190, %v3191
    %v3193 = vshll.u32 920167782, %v3178
    %v3194 = vshrl.u32 1326507024, %v3179
    %v3195 = vor.u32 %v3193, %v3194
    %vm3196 = vcmp.lt.s32.totalorder %v3177, 1
    %vm3197 = vcmp.lt.s32.totalorder %v3177, 2
    %vm3198 = vcmp.lt.s32.totalorder %v3177, 3
    %vm3199 = vcmp.lt.s32.totalorder %v3177, 4
    %v3200 = vsel %vm3196, %v3180, %v3183
    %v3201 = vsel %vm3199, %v3189, 2102212464
    %v3202 = vsel %vm3198, %v3186, %v3201
    %v3203 = vsel %vm3197, %v3200, %v3202
    %v3204 = vsel %vm3196, %v3183, %v3186
    %v3205 = vsel %vm3199, %v3192, 920167782
    %v3206 = vsel %vm3198, %v3189, %v3205
    %v3207 = vsel %vm3197, %v3204, %v3206
    %v3208 = vsel %vm3196, %v3186, %v3189
    %v3209 = vsel %vm3199, %v3195, 1326507024
    %v3210 = vsel %vm3198, %v3192, %v3209
    %v3211 = vsel %vm3197, %v3208, %v3210
    %v3212 = vshll.u32 %v3172, 8
    %v3213 = vmul.u32.u64.compose %v3212, %v3211
    %v3214 = vextract.low.u32 %v3213
    %v3215 = vextract.high.u32 %v3213
    %v3216 = vmul.u32.u64.compose %v3212, %v3207
    %v3217 = vextract.low.u32 %v3216
    %v3218 = vextract.high.u32 %v3216
    %v3219 = vmul.u32 %v3212, %v3203
    %v3220 = vadd.s32 %v3215, %v3217
    %vm3221 = vc.u32 %v3215, %v3217
    %v3222 = vadd.s32 %v3218, 1
    %v3223 = vsel %vm3221, %v3222, %v3218
    %v3224 = vadd.s32 %v3219, %v3223
    %v3225 = vadd.s32 %v3224, 536870912
    %v3226 = vshrl.u32 %v3225, 30
    %v3227 = vshll.u32 %v3226, 30
    %v3228 = vsub.s32 %v3224, %v3227
    %vm3229 = vcmp.lt.s32.totalorder %v3228, 0
    %v3230 = vsub.s32 0, %v3228
    %v3231 = vsel %vm3229, %v3230, %v3228
    %v3232 = vclz %v3231
    %v3233 = vsub.s32 %v3232, 2
    %vm3234 = vcmp.gt.s32.totalorder 0, %v3233
    %v3235 = vsel %vm3234, 0, %v3233
    %v3236 = vsub.s32 32, %v3235
    %v3237 = vshll.u32 %v3228, %v3235
    %v3238 = vshrl.u32 %v3220, %v3236
    %v3239 = vor.u32 %v3237, %v3238
    %v3240 = vsub.s32 4294967266, %v3235
    %v3241 = vadd.s32 %v3240, 127
    %v3242 = vshll.u32 %v3241, 23
    %v3243 = vor.u32 4788187, %v3242
    %v3244 = vand.u32 2147483647, %v3243
    %v3246 = vcvt.s32.f32 %v3239
    %v3247 = vmul.f32 %v3246, %v3244
    %v3248 = vxor.u32 %v3247, 2147483648
    %v3249 = vsel %vm3166, %v3248, %v3247
    %v3250 = vsub.s32 4, %v3226
    %v3251 = vsel %vm3166, %v3250, %v3226
    %v3252 = vsel %vm3165, %v3057, %v3249
    %v3253 = vsel %vm3165, 0, %v3251
    %v3254 = vcosq.f32.pop %v3252
    %v3255 = vsinq.f32.pop %v3252
    %vm3256 = vweird.f32 %v3057
    %v3257 = vadd.s32 %v3253, 3
    %v3258 = vand.u32 %v3257, 3
    %vm3259 = vcmp.lt.s32.totalorder %v3258, 2
    %vm3260 = vcmp.eq.s32.totalorder %v3258, 0
    %v3261 = vxor.u32 %v3255, 2147483648
    %v3262 = vsel %vm3260, %v3254, %v3261
    %vm3263 = vcmp.eq.s32.totalorder %v3258, 2
    %v3264 = vxor.u32 %v3254, 2147483648
    %v3265 = vsel %vm3263, %v3264, %v3255
    %v3266 = vsel %vm3259, %v3262, %v3265
    %v3267 = vsel %vm3256, nan, %v3266
    %v3268 = vmul.f32 %v2842, %v3267
    %v3269 = vmul.f32 %v3268, 0.03
    %v3270 = vadd.f32 %v3269, %v2808
    %s3271 = scalar_lea.vmem [#allocation7], 36
    %3272 = vst [vmem:[%s3271] sm:$0x1] %v3163
    %s3273 = scalar_lea.vmem [#allocation7], 37
    %3274 = vst [vmem:[%s3273] sm:$0x1] %v3270
    %s3275 = scalar_lea.vmem [#allocation7], 38
    %3276 = vst [vmem:[%s3275] sm:$0x1] %v3057
    %s3277 = scalar_lea.vmem [#allocation7], 39
    %3278 = vst [vmem:[%s3277] sm:$0x1] %v2842
    %s3279 = scalar_lea.vmem [#allocation7], 40
    %3280 = vst [vmem:[%s3279] sm:$0x1] %v2834
    %s3281 = scalar_lea.vmem [#allocation7], 41
    %3282 = vst [vmem:[%s3281] sm:$0x1] %v2838
    %s3283 = scalar_lea.vmem [#allocation2], 7
    %v3284 = vld [vmem:[%s3283] sm:$0x1]
    %s3285 = scalar_lea.vmem [#allocation2], 15
    %v3286 = vld [vmem:[%s3285] sm:$0x1]
    %v3287 = vmul.f32 %v3284, 4.0
    %v3288 = vmax.f32 %v3287, -4.0
    %v3289 = vmin.f32 %v3288, 4.0
    %v3290 = vmul.f32 %v3286, 0.5
    %v3291 = vmax.f32 %v3290, -0.5
    %v3292 = vmin.f32 %v3291, 0.5
    %v3293 = vmul.f32 %v3289, 0.03
    %v3294 = vadd.f32 %v2834, %v3293
    %v3295 = vmax.f32 %v3294, -5.0
    %v3296 = vmin.f32 %v3295, 5.0
    %v3297 = vmul.f32 %v3292, 0.03
    %v3298 = vadd.f32 %v2838, %v3297
    %v3299 = vmax.f32 %v3298, -0.5
    %v3300 = vmin.f32 %v3299, 0.5
    %v3301 = vmul.f32 %v3296, 0.03
    %v3302 = vadd.f32 %v2842, %v3301
    %v3303 = vmax.f32 %v3302, 0.0
    %v3304 = vmin.f32 %v3303, 10.0
    %v3305 = vand.u32 2147483647, %v3300
    %vm3306 = vcmp.le.f32.partialorder %v3305, 0.7853982
    %vm3307 = vcmp.lt.s32.totalorder %v3300, 0
    %v3308 = vand.u32 %v3300, 2139095040
    %v3309 = vshrl.u32 %v3308, 23
    %v3310 = vsub.s32 %v3309, 127
    %v3311 = vand.u32 2147483647, %v3300
    %v3312 = vand.u32 %v3311, 8388607
    %v3313 = vor.u32 %v3312, 8388608
    %v3314 = vsub.s32 0, %v3313
    %v3315 = vadd.s32 %v3310, 1
    %vm3316 = vcmp.gt.s32.totalorder %v3315, 0
    %v3317 = vsel %vm3316, %v3315, 0
    %v3318 = vshrl.u32 %v3317, 5
    %v3319 = vand.u32 %v3317, 31
    %v3320 = vsub.s32 32, %v3319
    %v3321 = vshrl.u32 683565275, %v3320
    %v3322 = vshll.u32 683565275, %v3319
    %v3323 = vshrl.u32 2475754826, %v3320
    %v3324 = vor.u32 %v3322, %v3323
    %v3325 = vshll.u32 2475754826, %v3319
    %v3326 = vshrl.u32 2131351028, %v3320
    %v3327 = vor.u32 %v3325, %v3326
    %v3328 = vshll.u32 2131351028, %v3319
    %v3329 = vshrl.u32 2102212464, %v3320
    %v3330 = vor.u32 %v3328, %v3329
    %v3331 = vshll.u32 2102212464, %v3319
    %v3332 = vshrl.u32 920167782, %v3320
    %v3333 = vor.u32 %v3331, %v3332
    %v3334 = vshll.u32 920167782, %v3319
    %v3335 = vshrl.u32 1326507024, %v3320
    %v3336 = vor.u32 %v3334, %v3335
    %vm3337 = vcmp.lt.s32.totalorder %v3318, 1
    %vm3338 = vcmp.lt.s32.totalorder %v3318, 2
    %vm3339 = vcmp.lt.s32.totalorder %v3318, 3
    %vm3340 = vcmp.lt.s32.totalorder %v3318, 4
    %v3341 = vsel %vm3337, %v3321, %v3324
    %v3342 = vsel %vm3340, %v3330, 2102212464
    %v3343 = vsel %vm3339, %v3327, %v3342
    %v3344 = vsel %vm3338, %v3341, %v3343
    %v3345 = vsel %vm3337, %v3324, %v3327
    %v3346 = vsel %vm3340, %v3333, 920167782
    %v3347 = vsel %vm3339, %v3330, %v3346
    %v3348 = vsel %vm3338, %v3345, %v3347
    %v3349 = vsel %vm3337, %v3327, %v3330
    %v3350 = vsel %vm3340, %v3336, 1326507024
    %v3351 = vsel %vm3339, %v3333, %v3350
    %v3352 = vsel %vm3338, %v3349, %v3351
    %v3353 = vshll.u32 %v3313, 8
    %v3354 = vmul.u32.u64.compose %v3353, %v3352
    %v3355 = vextract.low.u32 %v3354
    %v3356 = vextract.high.u32 %v3354
    %v3357 = vmul.u32.u64.compose %v3353, %v3348
    %v3358 = vextract.low.u32 %v3357
    %v3359 = vextract.high.u32 %v3357
    %v3360 = vmul.u32 %v3353, %v3344
    %v3361 = vadd.s32 %v3356, %v3358
    %vm3362 = vc.u32 %v3356, %v3358
    %v3363 = vadd.s32 %v3359, 1
    %v3364 = vsel %vm3362, %v3363, %v3359
    %v3365 = vadd.s32 %v3360, %v3364
    %v3366 = vadd.s32 %v3365, 536870912
    %v3367 = vshrl.u32 %v3366, 30
    %v3368 = vshll.u32 %v3367, 30
    %v3369 = vsub.s32 %v3365, %v3368
    %vm3370 = vcmp.lt.s32.totalorder %v3369, 0
    %v3371 = vsub.s32 0, %v3369
    %v3372 = vsel %vm3370, %v3371, %v3369
    %v3373 = vclz %v3372
    %v3374 = vsub.s32 %v3373, 2
    %vm3375 = vcmp.gt.s32.totalorder 0, %v3374
    %v3376 = vsel %vm3375, 0, %v3374
    %v3377 = vsub.s32 32, %v3376
    %v3378 = vshll.u32 %v3369, %v3376
    %v3379 = vshrl.u32 %v3361, %v3377
    %v3380 = vor.u32 %v3378, %v3379
    %v3381 = vsub.s32 4294967266, %v3376
    %v3382 = vadd.s32 %v3381, 127
    %v3383 = vshll.u32 %v3382, 23
    %v3384 = vor.u32 4788187, %v3383
    %v3385 = vand.u32 2147483647, %v3384
    %v3387 = vcvt.s32.f32 %v3380
    %v3388 = vmul.f32 %v3387, %v3385
    %v3389 = vxor.u32 %v3388, 2147483648
    %v3390 = vsel %vm3307, %v3389, %v3388
    %v3391 = vsub.s32 4, %v3367
    %v3392 = vsel %vm3307, %v3391, %v3367
    %v3393 = vsel %vm3306, %v3300, %v3390
    %v3394 = vsel %vm3306, 0, %v3392
    %v3395 = vcosq.f32.pop %v3393
    %v3396 = vsinq.f32.pop %v3393
    %vm3397 = vweird.f32 %v3300
    %v3398 = vadd.s32 %v3394, 3
    %v3399 = vand.u32 %v3398, 3
    %vm3400 = vcmp.lt.s32.totalorder %v3399, 2
    %vm3401 = vcmp.eq.s32.totalorder %v3399, 0
    %v3402 = vxor.u32 %v3396, 2147483648
    %v3403 = vsel %vm3401, %v3395, %v3402
    %vm3404 = vcmp.eq.s32.totalorder %v3399, 2
    %v3405 = vxor.u32 %v3395, 2147483648
    %v3406 = vsel %vm3404, %v3405, %v3396
    %v3407 = vsel %vm3400, %v3403, %v3406
    %v3408 = vsel %vm3397, nan, %v3407
    %v3409 = vand.u32 2147483647, %v3300
    %vm3410 = vcmp.le.f32.partialorder %v3409, 0.7853982
    %vm3411 = vcmp.lt.s32.totalorder %v3300, 0
    %v3412 = vand.u32 %v3300, 2139095040
    %v3413 = vshrl.u32 %v3412, 23
    %v3414 = vsub.s32 %v3413, 127
    %v3415 = vand.u32 2147483647, %v3300
    %v3416 = vand.u32 %v3415, 8388607
    %v3417 = vor.u32 %v3416, 8388608
    %v3418 = vsub.s32 0, %v3417
    %v3419 = vadd.s32 %v3414, 1
    %vm3420 = vcmp.gt.s32.totalorder %v3419, 0
    %v3421 = vsel %vm3420, %v3419, 0
    %v3422 = vshrl.u32 %v3421, 5
    %v3423 = vand.u32 %v3421, 31
    %v3424 = vsub.s32 32, %v3423
    %v3425 = vshrl.u32 683565275, %v3424
    %v3426 = vshll.u32 683565275, %v3423
    %v3427 = vshrl.u32 2475754826, %v3424
    %v3428 = vor.u32 %v3426, %v3427
    %v3429 = vshll.u32 2475754826, %v3423
    %v3430 = vshrl.u32 2131351028, %v3424
    %v3431 = vor.u32 %v3429, %v3430
    %v3432 = vshll.u32 2131351028, %v3423
    %v3433 = vshrl.u32 2102212464, %v3424
    %v3434 = vor.u32 %v3432, %v3433
    %v3435 = vshll.u32 2102212464, %v3423
    %v3436 = vshrl.u32 920167782, %v3424
    %v3437 = vor.u32 %v3435, %v3436
    %v3438 = vshll.u32 920167782, %v3423
    %v3439 = vshrl.u32 1326507024, %v3424
    %v3440 = vor.u32 %v3438, %v3439
    %vm3441 = vcmp.lt.s32.totalorder %v3422, 1
    %vm3442 = vcmp.lt.s32.totalorder %v3422, 2
    %vm3443 = vcmp.lt.s32.totalorder %v3422, 3
    %vm3444 = vcmp.lt.s32.totalorder %v3422, 4
    %v3445 = vsel %vm3441, %v3425, %v3428
    %v3446 = vsel %vm3444, %v3434, 2102212464
    %v3447 = vsel %vm3443, %v3431, %v3446
    %v3448 = vsel %vm3442, %v3445, %v3447
    %v3449 = vsel %vm3441, %v3428, %v3431
    %v3450 = vsel %vm3444, %v3437, 920167782
    %v3451 = vsel %vm3443, %v3434, %v3450
    %v3452 = vsel %vm3442, %v3449, %v3451
    %v3453 = vsel %vm3441, %v3431, %v3434
    %v3454 = vsel %vm3444, %v3440, 1326507024
    %v3455 = vsel %vm3443, %v3437, %v3454
    %v3456 = vsel %vm3442, %v3453, %v3455
    %v3457 = vshll.u32 %v3417, 8
    %v3458 = vmul.u32.u64.compose %v3457, %v3456
    %v3459 = vextract.low.u32 %v3458
    %v3460 = vextract.high.u32 %v3458
    %v3461 = vmul.u32.u64.compose %v3457, %v3452
    %v3462 = vextract.low.u32 %v3461
    %v3463 = vextract.high.u32 %v3461
    %v3464 = vmul.u32 %v3457, %v3448
    %v3465 = vadd.s32 %v3460, %v3462
    %vm3466 = vc.u32 %v3460, %v3462
    %v3467 = vadd.s32 %v3463, 1
    %v3468 = vsel %vm3466, %v3467, %v3463
    %v3469 = vadd.s32 %v3464, %v3468
    %v3470 = vadd.s32 %v3469, 536870912
    %v3471 = vshrl.u32 %v3470, 30
    %v3472 = vshll.u32 %v3471, 30
    %v3473 = vsub.s32 %v3469, %v3472
    %vm3474 = vcmp.lt.s32.totalorder %v3473, 0
    %v3475 = vsub.s32 0, %v3473
    %v3476 = vsel %vm3474, %v3475, %v3473
    %v3477 = vclz %v3476
    %v3478 = vsub.s32 %v3477, 2
    %vm3479 = vcmp.gt.s32.totalorder 0, %v3478
    %v3480 = vsel %vm3479, 0, %v3478
    %v3481 = vsub.s32 32, %v3480
    %v3482 = vshll.u32 %v3473, %v3480
    %v3483 = vshrl.u32 %v3465, %v3481
    %v3484 = vor.u32 %v3482, %v3483
    %v3485 = vsub.s32 4294967266, %v3480
    %v3486 = vadd.s32 %v3485, 127
    %v3487 = vshll.u32 %v3486, 23
    %v3488 = vor.u32 4788187, %v3487
    %v3489 = vand.u32 2147483647, %v3488
    %v3491 = vcvt.s32.f32 %v3484
    %v3492 = vmul.f32 %v3491, %v3489
    %v3493 = vxor.u32 %v3492, 2147483648
    %v3494 = vsel %vm3411, %v3493, %v3492
    %v3495 = vsub.s32 4, %v3471
    %v3496 = vsel %vm3411, %v3495, %v3471
    %v3497 = vsel %vm3410, %v3300, %v3494
    %v3498 = vsel %vm3410, 0, %v3496
    %v3499 = vcosq.f32.pop %v3497
    %v3500 = vsinq.f32.pop %v3497
    %vm3501 = vweird.f32 %v3300
    %v3502 = vand.u32 %v3498, 3
    %vm3503 = vcmp.lt.s32.totalorder %v3502, 2
    %vm3504 = vcmp.eq.s32.totalorder %v3502, 0
    %v3505 = vxor.u32 %v3500, 2147483648
    %v3506 = vsel %vm3504, %v3499, %v3505
    %vm3507 = vcmp.eq.s32.totalorder %v3502, 2
    %v3508 = vxor.u32 %v3499, 2147483648
    %v3509 = vsel %vm3507, %v3508, %v3500
    %v3510 = vsel %vm3503, %v3506, %v3509
    %v3511 = vsel %vm3501, nan, %v3510
    %v3512 = vrcp.pop %v3511
    %v3513 = vmul.f32 %v3408, %v3512
    %v3514 = vmul.f32 %v2842, %v3513
    %v3515 = vmul.f32 %v3514, 0.4
    %v3516 = vmax.f32 %v3515, -1.57
    %v3517 = vmin.f32 %v3516, 1.57
    %v3518 = vmul.f32 %v3517, 0.03
    %v3519 = vadd.f32 %v3518, %v3057
    %v3520 = vand.u32 2147483647, %v3519
    %vm3521 = vcmp.le.f32.partialorder %v3520, 0.7853982
    %vm3522 = vcmp.lt.s32.totalorder %v3519, 0
    %v3523 = vand.u32 %v3519, 2139095040
    %v3524 = vshrl.u32 %v3523, 23
    %v3525 = vsub.s32 %v3524, 127
    %v3526 = vand.u32 2147483647, %v3519
    %v3527 = vand.u32 %v3526, 8388607
    %v3528 = vor.u32 %v3527, 8388608
    %v3529 = vsub.s32 0, %v3528
    %v3530 = vadd.s32 %v3525, 1
    %vm3531 = vcmp.gt.s32.totalorder %v3530, 0
    %v3532 = vsel %vm3531, %v3530, 0
    %v3533 = vshrl.u32 %v3532, 5
    %v3534 = vand.u32 %v3532, 31
    %v3535 = vsub.s32 32, %v3534
    %v3536 = vshrl.u32 683565275, %v3535
    %v3537 = vshll.u32 683565275, %v3534
    %v3538 = vshrl.u32 2475754826, %v3535
    %v3539 = vor.u32 %v3537, %v3538
    %v3540 = vshll.u32 2475754826, %v3534
    %v3541 = vshrl.u32 2131351028, %v3535
    %v3542 = vor.u32 %v3540, %v3541
    %v3543 = vshll.u32 2131351028, %v3534
    %v3544 = vshrl.u32 2102212464, %v3535
    %v3545 = vor.u32 %v3543, %v3544
    %v3546 = vshll.u32 2102212464, %v3534
    %v3547 = vshrl.u32 920167782, %v3535
    %v3548 = vor.u32 %v3546, %v3547
    %v3549 = vshll.u32 920167782, %v3534
    %v3550 = vshrl.u32 1326507024, %v3535
    %v3551 = vor.u32 %v3549, %v3550
    %vm3552 = vcmp.lt.s32.totalorder %v3533, 1
    %vm3553 = vcmp.lt.s32.totalorder %v3533, 2
    %vm3554 = vcmp.lt.s32.totalorder %v3533, 3
    %vm3555 = vcmp.lt.s32.totalorder %v3533, 4
    %v3556 = vsel %vm3552, %v3536, %v3539
    %v3557 = vsel %vm3555, %v3545, 2102212464
    %v3558 = vsel %vm3554, %v3542, %v3557
    %v3559 = vsel %vm3553, %v3556, %v3558
    %v3560 = vsel %vm3552, %v3539, %v3542
    %v3561 = vsel %vm3555, %v3548, 920167782
    %v3562 = vsel %vm3554, %v3545, %v3561
    %v3563 = vsel %vm3553, %v3560, %v3562
    %v3564 = vsel %vm3552, %v3542, %v3545
    %v3565 = vsel %vm3555, %v3551, 1326507024
    %v3566 = vsel %vm3554, %v3548, %v3565
    %v3567 = vsel %vm3553, %v3564, %v3566
    %v3568 = vshll.u32 %v3528, 8
    %v3569 = vmul.u32.u64.compose %v3568, %v3567
    %v3570 = vextract.low.u32 %v3569
    %v3571 = vextract.high.u32 %v3569
    %v3572 = vmul.u32.u64.compose %v3568, %v3563
    %v3573 = vextract.low.u32 %v3572
    %v3574 = vextract.high.u32 %v3572
    %v3575 = vmul.u32 %v3568, %v3559
    %v3576 = vadd.s32 %v3571, %v3573
    %vm3577 = vc.u32 %v3571, %v3573
    %v3578 = vadd.s32 %v3574, 1
    %v3579 = vsel %vm3577, %v3578, %v3574
    %v3580 = vadd.s32 %v3575, %v3579
    %v3581 = vadd.s32 %v3580, 536870912
    %v3582 = vshrl.u32 %v3581, 30
    %v3583 = vshll.u32 %v3582, 30
    %v3584 = vsub.s32 %v3580, %v3583
    %vm3585 = vcmp.lt.s32.totalorder %v3584, 0
    %v3586 = vsub.s32 0, %v3584
    %v3587 = vsel %vm3585, %v3586, %v3584
    %v3588 = vclz %v3587
    %v3589 = vsub.s32 %v3588, 2
    %vm3590 = vcmp.gt.s32.totalorder 0, %v3589
    %v3591 = vsel %vm3590, 0, %v3589
    %v3592 = vsub.s32 32, %v3591
    %v3593 = vshll.u32 %v3584, %v3591
    %v3594 = vshrl.u32 %v3576, %v3592
    %v3595 = vor.u32 %v3593, %v3594
    %v3596 = vsub.s32 4294967266, %v3591
    %v3597 = vadd.s32 %v3596, 127
    %v3598 = vshll.u32 %v3597, 23
    %v3599 = vor.u32 4788187, %v3598
    %v3600 = vand.u32 2147483647, %v3599
    %v3602 = vcvt.s32.f32 %v3595
    %v3603 = vmul.f32 %v3602, %v3600
    %v3604 = vxor.u32 %v3603, 2147483648
    %v3605 = vsel %vm3522, %v3604, %v3603
    %v3606 = vsub.s32 4, %v3582
    %v3607 = vsel %vm3522, %v3606, %v3582
    %v3608 = vsel %vm3521, %v3519, %v3605
    %v3609 = vsel %vm3521, 0, %v3607
    %v3610 = vcosq.f32.pop %v3608
    %v3611 = vsinq.f32.pop %v3608
    %vm3612 = vweird.f32 %v3519
    %v3613 = vand.u32 %v3609, 3
    %vm3614 = vcmp.lt.s32.totalorder %v3613, 2
    %vm3615 = vcmp.eq.s32.totalorder %v3613, 0
    %v3616 = vxor.u32 %v3611, 2147483648
    %v3617 = vsel %vm3615, %v3610, %v3616
    %vm3618 = vcmp.eq.s32.totalorder %v3613, 2
    %v3619 = vxor.u32 %v3610, 2147483648
    %v3620 = vsel %vm3618, %v3619, %v3611
    %v3621 = vsel %vm3614, %v3617, %v3620
    %v3622 = vsel %vm3612, nan, %v3621
    %v3623 = vmul.f32 %v3304, %v3622
    %v3624 = vmul.f32 %v3623, 0.03
    %v3625 = vadd.f32 %v3624, %v3163
    %v3626 = vand.u32 2147483647, %v3519
    %vm3627 = vcmp.le.f32.partialorder %v3626, 0.7853982
    %vm3628 = vcmp.lt.s32.totalorder %v3519, 0
    %v3629 = vand.u32 %v3519, 2139095040
    %v3630 = vshrl.u32 %v3629, 23
    %v3631 = vsub.s32 %v3630, 127
    %v3632 = vand.u32 2147483647, %v3519
    %v3633 = vand.u32 %v3632, 8388607
    %v3634 = vor.u32 %v3633, 8388608
    %v3635 = vsub.s32 0, %v3634
    %v3636 = vadd.s32 %v3631, 1
    %vm3637 = vcmp.gt.s32.totalorder %v3636, 0
    %v3638 = vsel %vm3637, %v3636, 0
    %v3639 = vshrl.u32 %v3638, 5
    %v3640 = vand.u32 %v3638, 31
    %v3641 = vsub.s32 32, %v3640
    %v3642 = vshrl.u32 683565275, %v3641
    %v3643 = vshll.u32 683565275, %v3640
    %v3644 = vshrl.u32 2475754826, %v3641
    %v3645 = vor.u32 %v3643, %v3644
    %v3646 = vshll.u32 2475754826, %v3640
    %v3647 = vshrl.u32 2131351028, %v3641
    %v3648 = vor.u32 %v3646, %v3647
    %v3649 = vshll.u32 2131351028, %v3640
    %v3650 = vshrl.u32 2102212464, %v3641
    %v3651 = vor.u32 %v3649, %v3650
    %v3652 = vshll.u32 2102212464, %v3640
    %v3653 = vshrl.u32 920167782, %v3641
    %v3654 = vor.u32 %v3652, %v3653
    %v3655 = vshll.u32 920167782, %v3640
    %v3656 = vshrl.u32 1326507024, %v3641
    %v3657 = vor.u32 %v3655, %v3656
    %vm3658 = vcmp.lt.s32.totalorder %v3639, 1
    %vm3659 = vcmp.lt.s32.totalorder %v3639, 2
    %vm3660 = vcmp.lt.s32.totalorder %v3639, 3
    %vm3661 = vcmp.lt.s32.totalorder %v3639, 4
    %v3662 = vsel %vm3658, %v3642, %v3645
    %v3663 = vsel %vm3661, %v3651, 2102212464
    %v3664 = vsel %vm3660, %v3648, %v3663
    %v3665 = vsel %vm3659, %v3662, %v3664
    %v3666 = vsel %vm3658, %v3645, %v3648
    %v3667 = vsel %vm3661, %v3654, 920167782
    %v3668 = vsel %vm3660, %v3651, %v3667
    %v3669 = vsel %vm3659, %v3666, %v3668
    %v3670 = vsel %vm3658, %v3648, %v3651
    %v3671 = vsel %vm3661, %v3657, 1326507024
    %v3672 = vsel %vm3660, %v3654, %v3671
    %v3673 = vsel %vm3659, %v3670, %v3672
    %v3674 = vshll.u32 %v3634, 8
    %v3675 = vmul.u32.u64.compose %v3674, %v3673
    %v3676 = vextract.low.u32 %v3675
    %v3677 = vextract.high.u32 %v3675
    %v3678 = vmul.u32.u64.compose %v3674, %v3669
    %v3679 = vextract.low.u32 %v3678
    %v3680 = vextract.high.u32 %v3678
    %v3681 = vmul.u32 %v3674, %v3665
    %v3682 = vadd.s32 %v3677, %v3679
    %vm3683 = vc.u32 %v3677, %v3679
    %v3684 = vadd.s32 %v3680, 1
    %v3685 = vsel %vm3683, %v3684, %v3680
    %v3686 = vadd.s32 %v3681, %v3685
    %v3687 = vadd.s32 %v3686, 536870912
    %v3688 = vshrl.u32 %v3687, 30
    %v3689 = vshll.u32 %v3688, 30
    %v3690 = vsub.s32 %v3686, %v3689
    %vm3691 = vcmp.lt.s32.totalorder %v3690, 0
    %v3692 = vsub.s32 0, %v3690
    %v3693 = vsel %vm3691, %v3692, %v3690
    %v3694 = vclz %v3693
    %v3695 = vsub.s32 %v3694, 2
    %vm3696 = vcmp.gt.s32.totalorder 0, %v3695
    %v3697 = vsel %vm3696, 0, %v3695
    %v3698 = vsub.s32 32, %v3697
    %v3699 = vshll.u32 %v3690, %v3697
    %v3700 = vshrl.u32 %v3682, %v3698
    %v3701 = vor.u32 %v3699, %v3700
    %v3702 = vsub.s32 4294967266, %v3697
    %v3703 = vadd.s32 %v3702, 127
    %v3704 = vshll.u32 %v3703, 23
    %v3705 = vor.u32 4788187, %v3704
    %v3706 = vand.u32 2147483647, %v3705
    %v3708 = vcvt.s32.f32 %v3701
    %v3709 = vmul.f32 %v3708, %v3706
    %v3710 = vxor.u32 %v3709, 2147483648
    %v3711 = vsel %vm3628, %v3710, %v3709
    %v3712 = vsub.s32 4, %v3688
    %v3713 = vsel %vm3628, %v3712, %v3688
    %v3714 = vsel %vm3627, %v3519, %v3711
    %v3715 = vsel %vm3627, 0, %v3713
    %v3716 = vcosq.f32.pop %v3714
    %v3717 = vsinq.f32.pop %v3714
    %vm3718 = vweird.f32 %v3519
    %v3719 = vadd.s32 %v3715, 3
    %v3720 = vand.u32 %v3719, 3
    %vm3721 = vcmp.lt.s32.totalorder %v3720, 2
    %vm3722 = vcmp.eq.s32.totalorder %v3720, 0
    %v3723 = vxor.u32 %v3717, 2147483648
    %v3724 = vsel %vm3722, %v3716, %v3723
    %vm3725 = vcmp.eq.s32.totalorder %v3720, 2
    %v3726 = vxor.u32 %v3716, 2147483648
    %v3727 = vsel %vm3725, %v3726, %v3717
    %v3728 = vsel %vm3721, %v3724, %v3727
    %v3729 = vsel %vm3718, nan, %v3728
    %v3730 = vmul.f32 %v3304, %v3729
    %v3731 = vmul.f32 %v3730, 0.03
    %v3732 = vadd.f32 %v3731, %v3270
    %s3733 = scalar_lea.vmem [#allocation7], 42
    %3734 = vst [vmem:[%s3733] sm:$0x1] %v3625
    %s3735 = scalar_lea.vmem [#allocation7], 43
    %3736 = vst [vmem:[%s3735] sm:$0x1] %v3732
    %s3737 = scalar_lea.vmem [#allocation7], 44
    %3738 = vst [vmem:[%s3737] sm:$0x1] %v3519
    %s3739 = scalar_lea.vmem [#allocation7], 45
    %3740 = vst [vmem:[%s3739] sm:$0x1] %v3304
    %s3741 = scalar_lea.vmem [#allocation7], 46
    %3742 = vst [vmem:[%s3741] sm:$0x1] %v3296
    %s3743 = scalar_lea.vmem [#allocation7], 47
    %3744 = vst [vmem:[%s3743] sm:$0x1] %v3300
    // Predicated region
    $region18: #{tpu_custom_call.1} parent=1 // pred_check
      _
    $region19: #{tpu_custom_call.1} parent=1 // pred_check_branch
      %3746 = sbr.rel (0) target = $region21
    $region20: #{tpu_custom_call.1} parent=1 // pred_region
      %s3748 = ssub.s32 768, 768
      %3749 = vsyncadd [#allocation4], %s3748
      %s3750 = sshll.u32 [#allocation7], 4
      %s3751 = int_to_ptr.vmem [resolvable:$true] %s3750
      %3756 = dma.vmem_to_hbm [thread:$0]  %s3751, 768, %s2, [#allocation4], 16, 16, 1
    $region21: #{tpu_custom_call.1} parent=1 // pred_fallthru
      _
    // Predicated region
    $region22: #{tpu_custom_call.1} parent=1 // pred_check
      _
    $region23: #{tpu_custom_call.1} parent=1 // pred_check_branch
      %3758 = sbr.rel (0) target = $region25
    $region24: #{tpu_custom_call.1} parent=1 // pred_region
      %3759 = dma.done [#allocation4], 768
    $region25: #{tpu_custom_call.1} parent=1 // pred_fallthru
      _
    %3760 = vsyncpa [#allocation3], 1
    %3761 = vsyncpa [#allocation6], 1
    %3762 = vsyncpa [#allocation4], 1

</llo_original>
